<compile_context>
chip_gen: v7x
topology: tpu7x:2x2x1
jax: 0.10.0
libtpu: 0.0.40
codegen_flags: <defaults>
</compile_context>

<pallas_src>
import functools

import jax
import jax.numpy as jnp
from jax import lax
from jax.experimental import pallas as pl
from jax.experimental.pallas import tpu as pltpu


# ---------------------------------------------------------------------------
# Fused Pallas kernel
# ---------------------------------------------------------------------------

def _bottleneck_kernel(*refs, H, W, Wo, TH, s, RH, expand, add_flag):
    """One grid step = one (batch n, output-row strip t).

    refs (in order): x_ref (H*W, Cin) image block,
                     [w_exp (Cin,hid), s_exp (1,hid), b_exp (1,hid)]   (if expand)
                     w_dw (9,hid), s_dw (1,hid), b_dw (1,hid),
                     w_proj (hid,Cout), s_proj (1,Cout), b_proj (1,Cout),
                     o_ref (TH*Wo, Cout),
                     e_ref VMEM (RH, W+2, hid), d_ref VMEM (TH*Wo, hid)
    """
    idx = 0
    x_ref = refs[idx]; idx += 1
    if expand:
        w_exp_ref, s_exp_ref, b_exp_ref = refs[idx:idx + 3]; idx += 3
    w_dw_ref, s_dw_ref, b_dw_ref = refs[idx:idx + 3]; idx += 3
    w_proj_ref, s_proj_ref, b_proj_ref = refs[idx:idx + 3]; idx += 3
    o_ref = refs[idx]; idx += 1
    e_ref, d_ref = refs[idx], refs[idx + 1]

    hidden = e_ref.shape[-1]
    t = pl.program_id(1)
    RHc = RH - 2                       # input rows that are always in-range for this strip

    # Resident weights / folded-BN params (constant index_maps -> fetched once).
    if expand:
        w_exp = w_exp_ref[...]
        sc_e, sh_e = s_exp_ref[...], b_exp_ref[...]
    w_dw = w_dw_ref[...]               # (9, hidden)
    sc_d, sh_d = s_dw_ref[...], b_dw_ref[...]
    w_pj = w_proj_ref[...]
    sc_p, sh_p = s_proj_ref[...], b_proj_ref[...]

    def expand_fn(v2d):                # (rows, Cin) -> (rows, hidden), fused BN + ReLU6
        if expand:
            y = jnp.dot(v2d, w_exp, preferred_element_type=jnp.float32)
            return jnp.clip(y * sc_e + sh_e, 0.0, 6.0)
        return v2d.astype(jnp.float32)

    # ---- stage 1: expand 1x1 into a zero-padded VMEM strip (halo handled in-kernel) ----
    e_ref[...] = jnp.zeros_like(e_ref)         # zero halo: W border + possible H edges

    row0 = t * (TH * s)                        # first always-valid input row of the strip
    start = row0 * W
    if (TH * s * W) % 8 == 0:
        start = pl.multiple_of(start, 8)
    yexp = expand_fn(x_ref[pl.ds(start, RHc * W), :])          # (RHc*W, hidden)
    for j in range(RHc):
        e_ref[j + 1, pl.ds(1, W), :] = yexp[j * W:(j + 1) * W, :]

    @pl.when(t > 0)                            # top halo row (stays zero for first strip)
    def _():
        e_ref[0, pl.ds(1, W), :] = expand_fn(x_ref[pl.ds((row0 - 1) * W, W), :])

    rbot = row0 + (TH - 1) * s + 1             # bottom halo row (stays zero past the image)
    @pl.when(rbot < H)
    def _():
        e_ref[RH - 1, pl.ds(1, W), :] = expand_fn(x_ref[pl.ds(rbot * W, W), :])

    # ---- stage 2: depthwise 3x3 + BN + ReLU6 (stride computed directly) ----
    for o in range(TH):                        # static unroll over output rows of the strip
        acc = jnp.zeros((Wo, hidden), jnp.float32)
        for ky in range(3):
            for kx in range(3):
                if s == 1:
                    v = e_ref[o + ky, pl.ds(kx, Wo), :]
                else:
                    v = e_ref[o * s + ky, pl.ds(kx, Wo, s), :]
                acc = acc + v * w_dw[3 * ky + kx:3 * ky + kx + 1, :]
        d_ref[pl.ds(o * Wo, Wo), :] = jnp.clip(acc * sc_d + sh_d, 0.0, 6.0)

    # ---- stage 3: project 1x1 + BN (+ residual) ----
    y = jnp.dot(d_ref[...], w_pj, preferred_element_type=jnp.float32)
    y = y * sc_p + sh_p
    if add_flag:                               # add_flag implies stride==1 and Cin==Cout
        rstart = t * (TH * W)
        if (TH * W) % 8 == 0:
            rstart = pl.multiple_of(rstart, 8)
        y = y + x_ref[pl.ds(rstart, TH * W), :].astype(jnp.float32)
    o_ref[...] = y.astype(o_ref.dtype)


# ---------------------------------------------------------------------------
# Wrapper
# ---------------------------------------------------------------------------

def _pick_tile_h(Ho, Wo):
    """Output rows per strip: divides Ho and keeps the output block sublane-aligned."""
    for th in (8, 16, 4, 2, 1):
        if th <= Ho and Ho % th == 0 and (th * Wo) % 8 == 0:
            return th
    return Ho


def bottleneck_forward(x_nchw, params, *, strides, expand_ratio):
    N, Cin, H, W = x_nchw.shape
    hidden = params["hidden"]
    Cout = params["out_ch"]
    s = strides
    expand = expand_ratio != 1
    add_flag = (Cin == Cout) and s == 1

    Ho = (H - 1) // s + 1
    Wo = (W - 1) // s + 1
    TH = _pick_tile_h(Ho, Wo)
    T = Ho // TH
    RH = (TH - 1) * s + 3                      # strip input rows incl. 1-row halo each side

    assert (H * W) % 8 == 0, "H*W must be a multiple of 8 for the input block"
    assert (TH * Wo) % 8 == 0, "output strip must be sublane aligned"

    # NCHW -> NHWC at the module boundary (inside a network one would stay NHWC end-to-end),
    # flattened so the 1x1 convs are plain matmuls over channels.
    x2d = jnp.transpose(x_nchw, (0, 2, 3, 1)).reshape(N * H * W, Cin)

    in_specs = [pl.BlockSpec((H * W, Cin), lambda n, t: (n, 0))]
    args = [x2d]
    if expand:
        in_specs += [
            pl.BlockSpec((Cin, hidden), lambda n, t: (0, 0)),
            pl.BlockSpec((1, hidden), lambda n, t: (0, 0)),
            pl.BlockSpec((1, hidden), lambda n, t: (0, 0)),
        ]
        args += [params["w_exp"],
                 params["s_exp"].reshape(1, hidden),
                 params["b_exp"].reshape(1, hidden)]
    in_specs += [
        pl.BlockSpec((9, hidden), lambda n, t: (0, 0)),
        pl.BlockSpec((1, hidden), lambda n, t: (0, 0)),
        pl.BlockSpec((1, hidden), lambda n, t: (0, 0)),
        pl.BlockSpec((hidden, Cout), lambda n, t: (0, 0)),
        pl.BlockSpec((1, Cout), lambda n, t: (0, 0)),
        pl.BlockSpec((1, Cout), lambda n, t: (0, 0)),
    ]
    args += [params["w_dw"],
             params["s_dw"].reshape(1, hidden),
             params["b_dw"].reshape(1, hidden),
             params["w_proj"],
             params["s_proj"].reshape(1, Cout),
             params["b_proj"].reshape(1, Cout)]

    out_spec = pl.BlockSpec((TH * Wo, Cout), lambda n, t: (n * T + t, 0))

    kern = functools.partial(
        _bottleneck_kernel, H=H, W=W, Wo=Wo, TH=TH, s=s, RH=RH,
        expand=expand, add_flag=add_flag)

    flops = (2 * N * H * W * Cin * hidden * (1 if expand else 0)
             + 2 * 9 * N * Ho * Wo * hidden
             + 2 * N * Ho * Wo * hidden * Cout)
    bytes_accessed = 4 * (N * H * W * Cin + N * Ho * Wo * Cout
                          + Cin * hidden + 9 * hidden + hidden * Cout
                          + 4 * hidden + 2 * Cout)

    out2d = pl.pallas_call(
        kern,
        out_shape=jax.ShapeDtypeStruct((N * Ho * Wo, Cout), x_nchw.dtype),
        grid=(N, T),
        in_specs=in_specs,
        out_specs=out_spec,
        scratch_shapes=[
            pltpu.VMEM((RH, W + 2, hidden), jnp.float32),   # expanded strip w/ zero halo
            pltpu.VMEM((TH * Wo, hidden), jnp.float32),     # depthwise result of the strip
        ],
        compiler_params=pltpu.CompilerParams(
            dimension_semantics=("parallel", "parallel"),
            vmem_limit_bytes=32 * 1024 * 1024),
        cost_estimate=pl.CostEstimate(
            flops=flops, transcendentals=0, bytes_accessed=bytes_accessed),
    )(*args)

    out = out2d.reshape(N, Ho, Wo, Cout)
    return jnp.transpose(out, (0, 3, 1, 2))    # back to NCHW (PyTorch convention)


# ---------------------------------------------------------------------------
# Deterministic parameter construction (PyTorch shapes, folded BN)
# ---------------------------------------------------------------------------

def init_params(in_ch, out_ch, expand_ratio):
    hidden = int(in_ch * expand_ratio)
    eps = 1e-5

    def det(shape, seed):
        n = 1
        for d in shape:
            n *= d
        v = jnp.arange(n, dtype=jnp.float32)
        return (jnp.sin(v * 0.37 + seed) * 0.2).reshape(shape)

    def bn(c, seed):
        i = jnp.arange(c, dtype=jnp.float32)
        gamma = 1.0 + 0.05 * jnp.cos(i + seed)
        beta = 0.02 * jnp.sin(i * 1.3 + seed)
        mean = 0.03 * jnp.sin(i * 0.7 + seed)
        var = 1.0 + 0.1 * jnp.cos(i * 0.5 + seed) ** 2
        scale = gamma / jnp.sqrt(var + eps)
        shift = beta - mean * scale
        return scale, shift

    p = {"in_ch": in_ch, "out_ch": out_ch, "hidden": hidden}

    # PyTorch OIHW-layout weights
    p["w_exp_oihw"] = det((hidden, in_ch, 1, 1), 0.0)
    p["w_dw_oihw"] = det((hidden, 1, 3, 3), 1.0)
    p["w_proj_oihw"] = det((out_ch, hidden, 1, 1), 2.0)

    p["s_exp"], p["b_exp"] = bn(hidden, 0.0)
    p["s_dw"], p["b_dw"] = bn(hidden, 1.0)
    p["s_proj"], p["b_proj"] = bn(out_ch, 2.0)

    # kernel-layout weights (channels-last)
    p["w_exp"] = p["w_exp_oihw"].reshape(hidden, in_ch).T     # (Cin, hidden)
    p["w_dw"] = p["w_dw_oihw"].reshape(hidden, 9).T           # (9, hidden), row = 3*ky+kx
    p["w_proj"] = p["w_proj_oihw"].reshape(out_ch, hidden).T  # (hidden, Cout)
    return p


# ---------------------------------------------------------------------------
# Pure-JAX reference (NCHW, matches PyTorch eval-mode semantics)
# ---------------------------------------------------------------------------

def _conv_bn_ref(x, w_oihw, scale, shift, stride, groups, pad, relu6):
    y = lax.conv_general_dilated(
        x, w_oihw, (stride, stride), [(pad, pad), (pad, pad)],
        dimension_numbers=("NCHW", "OIHW", "NCHW"),
        feature_group_count=groups)
    y = y * scale[None, :, None, None] + shift[None, :, None, None]
    if relu6:
        y = jnp.clip(y, 0.0, 6.0)
    return y


def bottleneck_ref(x, params, *, strides, expand_ratio):
    in_ch = params["in_ch"]
    out_ch = params["out_ch"]
    hidden = params["hidden"]
    add_flag = (in_ch == out_ch) and strides == 1
    h = x
    if expand_ratio != 1:
        h = _conv_bn_ref(h, params["w_exp_oihw"], params["s_exp"], params["b_exp"],
                         1, 1, 0, True)
    h = _conv_bn_ref(h, params["w_dw_oihw"], params["s_dw"], params["b_dw"],
                     strides, hidden, 1, True)
    h = _conv_bn_ref(h, params["w_proj_oihw"], params["s_proj"], params["b_proj"],
                     1, 1, 0, False)
    return x + h if add_flag else h


# ---------------------------------------------------------------------------

if __name__ == "__main__":
    in_ch, out_ch, strides, expand_ratio = 4, 4, 1, 6
    N, H, W = 2, 16, 16

    params = init_params(in_ch, out_ch, expand_ratio)
    x = jax.random.normal(jax.random.PRNGKey(0), (N, in_ch, H, W), dtype=jnp.float32)

    out = bottleneck_forward(x, params, strides=strides, expand_ratio=expand_ratio)
    out = jax.block_until_ready(out)

    ref = bottleneck_ref(x, params, strides=strides, expand_ratio=expand_ratio)
    assert out.shape == ref.shape, (out.shape, ref.shape)
    err = float(jnp.max(jnp.abs(out - ref)))
    assert err < 2e-4, f"max abs error {err}"

    print("KERNEL_OK")
</pallas_src>

<mosaic_0001>
module attributes {stable_mosaic.version = 11 : i64} {
  func.func @_bottleneck_kernel(%arg0: i32, %arg1: i32, %arg2: memref<256x4xf32, #tpu.memory_space<vmem>>, %arg3: memref<4x24xf32, #tpu.memory_space<vmem>>, %arg4: memref<1x24xf32, #tpu.memory_space<vmem>>, %arg5: memref<1x24xf32, #tpu.memory_space<vmem>>, %arg6: memref<9x24xf32, #tpu.memory_space<vmem>>, %arg7: memref<1x24xf32, #tpu.memory_space<vmem>>, %arg8: memref<1x24xf32, #tpu.memory_space<vmem>>, %arg9: memref<24x4xf32, #tpu.memory_space<vmem>>, %arg10: memref<1x4xf32, #tpu.memory_space<vmem>>, %arg11: memref<1x4xf32, #tpu.memory_space<vmem>>, %arg12: memref<128x4xf32, #tpu.memory_space<vmem>>, %arg13: memref<10x18x24xf32, #tpu.memory_space<vmem>>, %arg14: memref<128x24xf32, #tpu.memory_space<vmem>>) attributes {dimension_semantics = [#tpu.dimension_semantics<parallel>, #tpu.dimension_semantics<parallel>], iteration_bounds = array<i64: 2, 2>, scalar_prefetch = 0 : i64, scratch_operands = 2 : i64, tpu.core_type = #tpu.core_type<tc>, window_params = [{transform_indices = @transform_0, window_bounds = array<i64: 256, 4>}, {pipeline_mode = #tpu.pipeline_mode<synchronous>, transform_indices = @transform_1, window_bounds = array<i64: 4, 24>}, {pipeline_mode = #tpu.pipeline_mode<synchronous>, transform_indices = @transform_2, window_bounds = array<i64: 1, 24>}, {pipeline_mode = #tpu.pipeline_mode<synchronous>, transform_indices = @transform_3, window_bounds = array<i64: 1, 24>}, {pipeline_mode = #tpu.pipeline_mode<synchronous>, transform_indices = @transform_4, window_bounds = array<i64: 9, 24>}, {pipeline_mode = #tpu.pipeline_mode<synchronous>, transform_indices = @transform_5, window_bounds = array<i64: 1, 24>}, {pipeline_mode = #tpu.pipeline_mode<synchronous>, transform_indices = @transform_6, window_bounds = array<i64: 1, 24>}, {pipeline_mode = #tpu.pipeline_mode<synchronous>, transform_indices = @transform_7, window_bounds = array<i64: 24, 4>}, {pipeline_mode = #tpu.pipeline_mode<synchronous>, transform_indices = @transform_8, window_bounds = array<i64: 1, 4>}, {pipeline_mode = #tpu.pipeline_mode<synchronous>, transform_indices = @transform_9, window_bounds = array<i64: 1, 4>}, {transform_indices = @transform_10, window_bounds = array<i64: 128, 4>}]} {
    %c0 = arith.constant 0 : index
    %c0_0 = arith.constant 0 : index
    %0 = vector.load %arg3[%c0, %c0_0] : memref<4x24xf32, #tpu.memory_space<vmem>>, vector<4x24xf32>
    %c0_1 = arith.constant 0 : index
    %c0_2 = arith.constant 0 : index
    %1 = vector.load %arg4[%c0_1, %c0_2] : memref<1x24xf32, #tpu.memory_space<vmem>>, vector<1x24xf32>
    %c0_3 = arith.constant 0 : index
    %c0_4 = arith.constant 0 : index
    %2 = vector.load %arg5[%c0_3, %c0_4] : memref<1x24xf32, #tpu.memory_space<vmem>>, vector<1x24xf32>
    %c0_5 = arith.constant 0 : index
    %c0_6 = arith.constant 0 : index
    %3 = vector.load %arg6[%c0_5, %c0_6] : memref<9x24xf32, #tpu.memory_space<vmem>>, vector<9x24xf32>
    %c0_7 = arith.constant 0 : index
    %c0_8 = arith.constant 0 : index
    %4 = vector.load %arg7[%c0_7, %c0_8] : memref<1x24xf32, #tpu.memory_space<vmem>>, vector<1x24xf32>
    %c0_9 = arith.constant 0 : index
    %c0_10 = arith.constant 0 : index
    %5 = vector.load %arg8[%c0_9, %c0_10] : memref<1x24xf32, #tpu.memory_space<vmem>>, vector<1x24xf32>
    %c0_11 = arith.constant 0 : index
    %c0_12 = arith.constant 0 : index
    %6 = vector.load %arg9[%c0_11, %c0_12] : memref<24x4xf32, #tpu.memory_space<vmem>>, vector<24x4xf32>
    %c0_13 = arith.constant 0 : index
    %c0_14 = arith.constant 0 : index
    %7 = vector.load %arg10[%c0_13, %c0_14] : memref<1x4xf32, #tpu.memory_space<vmem>>, vector<1x4xf32>
    %c0_15 = arith.constant 0 : index
    %c0_16 = arith.constant 0 : index
    %8 = vector.load %arg11[%c0_15, %c0_16] : memref<1x4xf32, #tpu.memory_space<vmem>>, vector<1x4xf32>
    %cst = arith.constant 0.000000e+00 : f32
    %9 = vector.broadcast %cst : f32 to vector<10x18x24xf32>
    %c0_17 = arith.constant 0 : index
    %c0_18 = arith.constant 0 : index
    %c0_19 = arith.constant 0 : index
    %10 = vector.load %arg13[%c0_17, %c0_18, %c0_19] : memref<10x18x24xf32, #tpu.memory_space<vmem>>, vector<10x18x24xf32>
    tpu.vector_store %arg13[%c0_17, %c0_18, %c0_19], %9 {strides = array<i32>} : memref<10x18x24xf32, #tpu.memory_space<vmem>>, vector<10x18x24xf32>,
    %c8_i32 = arith.constant 8 : i32
    %11 = arith.muli %arg1, %c8_i32 : i32
    %c16_i32 = arith.constant 16 : i32
    %12 = arith.muli %11, %c16_i32 : i32
    %13 = tpu.assume_multiple %12, 8 : i32
    %14 = arith.index_cast %13 : i32 to index
    %c0_20 = arith.constant 0 : index
    %15 = vector.load %arg2[%14, %c0_20] : memref<256x4xf32, #tpu.memory_space<vmem>>, vector<128x4xf32>
    %cst_21 = arith.constant dense<0.000000e+00> : vector<128x24xf32>
    %16 = tpu.matmul %15, %0, %cst_21 {dimension_numbers = #tpu.dot_dimension_numbers<[1], [0], [0], [1], [0, 0, 1, 1], [], []>} : vector<128x4xf32>, vector<4x24xf32>, vector<128x24xf32> -> vector<128x24xf32>
    %17 = vector.broadcast %1 : vector<1x24xf32> to vector<128x24xf32>
    %18 = arith.mulf %16, %17 : vector<128x24xf32>
    %19 = vector.broadcast %2 : vector<1x24xf32> to vector<128x24xf32>
    %20 = arith.addf %18, %19 : vector<128x24xf32>
    %cst_22 = arith.constant 0.000000e+00 : f32
    %cst_23 = arith.constant 6.000000e+00 : f32
    %21 = vector.broadcast %cst_22 : f32 to vector<128x24xf32>
    %22 = arith.maximumf %21, %20 : vector<128x24xf32>
    %23 = vector.broadcast %cst_23 : f32 to vector<128x24xf32>
    %24 = arith.minimumf %23, %22 : vector<128x24xf32>
    %25 = vector.extract_strided_slice %24 {offsets = [0, 0], sizes = [16, 24], strides = [1, 1]} : vector<128x24xf32> to vector<16x24xf32>
    %c1 = arith.constant 1 : index
    %c1_24 = arith.constant 1 : index
    %c0_25 = arith.constant 0 : index
    %26 = vector.load %arg13[%c1, %c1_24, %c0_25] : memref<10x18x24xf32, #tpu.memory_space<vmem>>, vector<1x16x24xf32>
    %27 = vector.shape_cast %26 : vector<1x16x24xf32> to vector<16x24xf32>
    %28 = vector.shape_cast %25 : vector<16x24xf32> to vector<1x16x24xf32>
    tpu.vector_store %arg13[%c1, %c1_24, %c0_25], %28 {strides = array<i32>} : memref<10x18x24xf32, #tpu.memory_space<vmem>>, vector<1x16x24xf32>,
    %29 = vector.extract_strided_slice %24 {offsets = [16, 0], sizes = [16, 24], strides = [1, 1]} : vector<128x24xf32> to vector<16x24xf32>
    %c2 = arith.constant 2 : index
    %c1_26 = arith.constant 1 : index
    %c0_27 = arith.constant 0 : index
    %30 = vector.load %arg13[%c2, %c1_26, %c0_27] : memref<10x18x24xf32, #tpu.memory_space<vmem>>, vector<1x16x24xf32>
    %31 = vector.shape_cast %30 : vector<1x16x24xf32> to vector<16x24xf32>
    %32 = vector.shape_cast %29 : vector<16x24xf32> to vector<1x16x24xf32>
    tpu.vector_store %arg13[%c2, %c1_26, %c0_27], %32 {strides = array<i32>} : memref<10x18x24xf32, #tpu.memory_space<vmem>>, vector<1x16x24xf32>,
    %33 = vector.extract_strided_slice %24 {offsets = [32, 0], sizes = [16, 24], strides = [1, 1]} : vector<128x24xf32> to vector<16x24xf32>
    %c3 = arith.constant 3 : index
    %c1_28 = arith.constant 1 : index
    %c0_29 = arith.constant 0 : index
    %34 = vector.load %arg13[%c3, %c1_28, %c0_29] : memref<10x18x24xf32, #tpu.memory_space<vmem>>, vector<1x16x24xf32>
    %35 = vector.shape_cast %34 : vector<1x16x24xf32> to vector<16x24xf32>
    %36 = vector.shape_cast %33 : vector<16x24xf32> to vector<1x16x24xf32>
    tpu.vector_store %arg13[%c3, %c1_28, %c0_29], %36 {strides = array<i32>} : memref<10x18x24xf32, #tpu.memory_space<vmem>>, vector<1x16x24xf32>,
    %37 = vector.extract_strided_slice %24 {offsets = [48, 0], sizes = [16, 24], strides = [1, 1]} : vector<128x24xf32> to vector<16x24xf32>
    %c4 = arith.constant 4 : index
    %c1_30 = arith.constant 1 : index
    %c0_31 = arith.constant 0 : index
    %38 = vector.load %arg13[%c4, %c1_30, %c0_31] : memref<10x18x24xf32, #tpu.memory_space<vmem>>, vector<1x16x24xf32>
    %39 = vector.shape_cast %38 : vector<1x16x24xf32> to vector<16x24xf32>
    %40 = vector.shape_cast %37 : vector<16x24xf32> to vector<1x16x24xf32>
    tpu.vector_store %arg13[%c4, %c1_30, %c0_31], %40 {strides = array<i32>} : memref<10x18x24xf32, #tpu.memory_space<vmem>>, vector<1x16x24xf32>,
    %41 = vector.extract_strided_slice %24 {offsets = [64, 0], sizes = [16, 24], strides = [1, 1]} : vector<128x24xf32> to vector<16x24xf32>
    %c5 = arith.constant 5 : index
    %c1_32 = arith.constant 1 : index
    %c0_33 = arith.constant 0 : index
    %42 = vector.load %arg13[%c5, %c1_32, %c0_33] : memref<10x18x24xf32, #tpu.memory_space<vmem>>, vector<1x16x24xf32>
    %43 = vector.shape_cast %42 : vector<1x16x24xf32> to vector<16x24xf32>
    %44 = vector.shape_cast %41 : vector<16x24xf32> to vector<1x16x24xf32>
    tpu.vector_store %arg13[%c5, %c1_32, %c0_33], %44 {strides = array<i32>} : memref<10x18x24xf32, #tpu.memory_space<vmem>>, vector<1x16x24xf32>,
    %45 = vector.extract_strided_slice %24 {offsets = [80, 0], sizes = [16, 24], strides = [1, 1]} : vector<128x24xf32> to vector<16x24xf32>
    %c6 = arith.constant 6 : index
    %c1_34 = arith.constant 1 : index
    %c0_35 = arith.constant 0 : index
    %46 = vector.load %arg13[%c6, %c1_34, %c0_35] : memref<10x18x24xf32, #tpu.memory_space<vmem>>, vector<1x16x24xf32>
    %47 = vector.shape_cast %46 : vector<1x16x24xf32> to vector<16x24xf32>
    %48 = vector.shape_cast %45 : vector<16x24xf32> to vector<1x16x24xf32>
    tpu.vector_store %arg13[%c6, %c1_34, %c0_35], %48 {strides = array<i32>} : memref<10x18x24xf32, #tpu.memory_space<vmem>>, vector<1x16x24xf32>,
    %49 = vector.extract_strided_slice %24 {offsets = [96, 0], sizes = [16, 24], strides = [1, 1]} : vector<128x24xf32> to vector<16x24xf32>
    %c7 = arith.constant 7 : index
    %c1_36 = arith.constant 1 : index
    %c0_37 = arith.constant 0 : index
    %50 = vector.load %arg13[%c7, %c1_36, %c0_37] : memref<10x18x24xf32, #tpu.memory_space<vmem>>, vector<1x16x24xf32>
    %51 = vector.shape_cast %50 : vector<1x16x24xf32> to vector<16x24xf32>
    %52 = vector.shape_cast %49 : vector<16x24xf32> to vector<1x16x24xf32>
    tpu.vector_store %arg13[%c7, %c1_36, %c0_37], %52 {strides = array<i32>} : memref<10x18x24xf32, #tpu.memory_space<vmem>>, vector<1x16x24xf32>,
    %53 = vector.extract_strided_slice %24 {offsets = [112, 0], sizes = [16, 24], strides = [1, 1]} : vector<128x24xf32> to vector<16x24xf32>
    %c8 = arith.constant 8 : index
    %c1_38 = arith.constant 1 : index
    %c0_39 = arith.constant 0 : index
    %54 = vector.load %arg13[%c8, %c1_38, %c0_39] : memref<10x18x24xf32, #tpu.memory_space<vmem>>, vector<1x16x24xf32>
    %55 = vector.shape_cast %54 : vector<1x16x24xf32> to vector<16x24xf32>
    %56 = vector.shape_cast %53 : vector<16x24xf32> to vector<1x16x24xf32>
    tpu.vector_store %arg13[%c8, %c1_38, %c0_39], %56 {strides = array<i32>} : memref<10x18x24xf32, #tpu.memory_space<vmem>>, vector<1x16x24xf32>,
    %c0_i32 = arith.constant 0 : i32
    %57 = arith.cmpi sgt, %arg1, %c0_i32 : i32
    %58 = arith.extui %57 : i1 to i32
    %c0_i32_40 = arith.constant 0 : i32
    %59 = arith.cmpi ne, %58, %c0_i32_40 : i32
    scf.if %59 {
      %c1_i32_297 = arith.constant 1 : i32
      %589 = arith.subi %11, %c1_i32_297 : i32
      %c16_i32_298 = arith.constant 16 : i32
      %590 = arith.muli %589, %c16_i32_298 : i32
      %591 = arith.index_cast %590 : i32 to index
      %c0_299 = arith.constant 0 : index
      %592 = vector.load %arg2[%591, %c0_299] : memref<256x4xf32, #tpu.memory_space<vmem>>, vector<16x4xf32>
      %cst_300 = arith.constant dense<0.000000e+00> : vector<16x24xf32>
      %593 = tpu.matmul %592, %0, %cst_300 {dimension_numbers = #tpu.dot_dimension_numbers<[1], [0], [0], [1], [0, 0, 1, 1], [], []>} : vector<16x4xf32>, vector<4x24xf32>, vector<16x24xf32> -> vector<16x24xf32>
      %594 = vector.broadcast %1 : vector<1x24xf32> to vector<16x24xf32>
      %595 = arith.mulf %593, %594 : vector<16x24xf32>
      %596 = vector.broadcast %2 : vector<1x24xf32> to vector<16x24xf32>
      %597 = arith.addf %595, %596 : vector<16x24xf32>
      %cst_301 = arith.constant 0.000000e+00 : f32
      %cst_302 = arith.constant 6.000000e+00 : f32
      %598 = vector.broadcast %cst_301 : f32 to vector<16x24xf32>
      %599 = arith.maximumf %598, %597 : vector<16x24xf32>
      %600 = vector.broadcast %cst_302 : f32 to vector<16x24xf32>
      %601 = arith.minimumf %600, %599 : vector<16x24xf32>
      %c0_303 = arith.constant 0 : index
      %c1_304 = arith.constant 1 : index
      %c0_305 = arith.constant 0 : index
      %602 = vector.load %arg13[%c0_303, %c1_304, %c0_305] : memref<10x18x24xf32, #tpu.memory_space<vmem>>, vector<1x16x24xf32>
      %603 = vector.shape_cast %602 : vector<1x16x24xf32> to vector<16x24xf32>
      %604 = vector.shape_cast %601 : vector<16x24xf32> to vector<1x16x24xf32>
      tpu.vector_store %arg13[%c0_303, %c1_304, %c0_305], %604 {strides = array<i32>} : memref<10x18x24xf32, #tpu.memory_space<vmem>>, vector<1x16x24xf32>,
    } else {
    }
    %c7_i32 = arith.constant 7 : i32
    %60 = arith.addi %11, %c7_i32 : i32
    %c1_i32 = arith.constant 1 : i32
    %61 = arith.addi %60, %c1_i32 : i32
    %c16_i32_41 = arith.constant 16 : i32
    %62 = arith.cmpi slt, %61, %c16_i32_41 : i32
    %63 = arith.extui %62 : i1 to i32
    %c0_i32_42 = arith.constant 0 : i32
    %64 = arith.cmpi ne, %63, %c0_i32_42 : i32
    scf.if %64 {
      %c16_i32_297 = arith.constant 16 : i32
      %589 = arith.muli %61, %c16_i32_297 : i32
      %590 = arith.index_cast %589 : i32 to index
      %c0_298 = arith.constant 0 : index
      %591 = vector.load %arg2[%590, %c0_298] : memref<256x4xf32, #tpu.memory_space<vmem>>, vector<16x4xf32>
      %cst_299 = arith.constant dense<0.000000e+00> : vector<16x24xf32>
      %592 = tpu.matmul %591, %0, %cst_299 {dimension_numbers = #tpu.dot_dimension_numbers<[1], [0], [0], [1], [0, 0, 1, 1], [], []>} : vector<16x4xf32>, vector<4x24xf32>, vector<16x24xf32> -> vector<16x24xf32>
      %593 = vector.broadcast %1 : vector<1x24xf32> to vector<16x24xf32>
      %594 = arith.mulf %592, %593 : vector<16x24xf32>
      %595 = vector.broadcast %2 : vector<1x24xf32> to vector<16x24xf32>
      %596 = arith.addf %594, %595 : vector<16x24xf32>
      %cst_300 = arith.constant 0.000000e+00 : f32
      %cst_301 = arith.constant 6.000000e+00 : f32
      %597 = vector.broadcast %cst_300 : f32 to vector<16x24xf32>
      %598 = arith.maximumf %597, %596 : vector<16x24xf32>
      %599 = vector.broadcast %cst_301 : f32 to vector<16x24xf32>
      %600 = arith.minimumf %599, %598 : vector<16x24xf32>
      %c9_302 = arith.constant 9 : index
      %c1_303 = arith.constant 1 : index
      %c0_304 = arith.constant 0 : index
      %601 = vector.load %arg13[%c9_302, %c1_303, %c0_304] : memref<10x18x24xf32, #tpu.memory_space<vmem>>, vector<1x16x24xf32>
      %602 = vector.shape_cast %601 : vector<1x16x24xf32> to vector<16x24xf32>
      %603 = vector.shape_cast %600 : vector<16x24xf32> to vector<1x16x24xf32>
      tpu.vector_store %arg13[%c9_302, %c1_303, %c0_304], %603 {strides = array<i32>} : memref<10x18x24xf32, #tpu.memory_space<vmem>>, vector<1x16x24xf32>,
    } else {
    }
    %cst_43 = arith.constant 0.000000e+00 : f32
    %65 = vector.broadcast %cst_43 : f32 to vector<16x24xf32>
    %c0_44 = arith.constant 0 : index
    %c0_45 = arith.constant 0 : index
    %c0_46 = arith.constant 0 : index
    %66 = vector.load %arg13[%c0_44, %c0_45, %c0_46] : memref<10x18x24xf32, #tpu.memory_space<vmem>>, vector<1x16x24xf32>
    %67 = vector.shape_cast %66 : vector<1x16x24xf32> to vector<16x24xf32>
    %68 = vector.extract_strided_slice %3 {offsets = [0, 0], sizes = [1, 24], strides = [1, 1]} : vector<9x24xf32> to vector<1x24xf32>
    %69 = vector.broadcast %68 : vector<1x24xf32> to vector<16x24xf32>
    %70 = arith.mulf %67, %69 : vector<16x24xf32>
    %71 = arith.addf %65, %70 : vector<16x24xf32>
    %c0_47 = arith.constant 0 : index
    %c1_48 = arith.constant 1 : index
    %c0_49 = arith.constant 0 : index
    %72 = vector.load %arg13[%c0_47, %c1_48, %c0_49] : memref<10x18x24xf32, #tpu.memory_space<vmem>>, vector<1x16x24xf32>
    %73 = vector.shape_cast %72 : vector<1x16x24xf32> to vector<16x24xf32>
    %74 = vector.extract_strided_slice %3 {offsets = [1, 0], sizes = [1, 24], strides = [1, 1]} : vector<9x24xf32> to vector<1x24xf32>
    %75 = vector.broadcast %74 : vector<1x24xf32> to vector<16x24xf32>
    %76 = arith.mulf %73, %75 : vector<16x24xf32>
    %77 = arith.addf %71, %76 : vector<16x24xf32>
    %c0_50 = arith.constant 0 : index
    %c2_51 = arith.constant 2 : index
    %c0_52 = arith.constant 0 : index
    %78 = vector.load %arg13[%c0_50, %c2_51, %c0_52] : memref<10x18x24xf32, #tpu.memory_space<vmem>>, vector<1x16x24xf32>
    %79 = vector.shape_cast %78 : vector<1x16x24xf32> to vector<16x24xf32>
    %80 = vector.extract_strided_slice %3 {offsets = [2, 0], sizes = [1, 24], strides = [1, 1]} : vector<9x24xf32> to vector<1x24xf32>
    %81 = vector.broadcast %80 : vector<1x24xf32> to vector<16x24xf32>
    %82 = arith.mulf %79, %81 : vector<16x24xf32>
    %83 = arith.addf %77, %82 : vector<16x24xf32>
    %c1_53 = arith.constant 1 : index
    %c0_54 = arith.constant 0 : index
    %c0_55 = arith.constant 0 : index
    %84 = vector.load %arg13[%c1_53, %c0_54, %c0_55] : memref<10x18x24xf32, #tpu.memory_space<vmem>>, vector<1x16x24xf32>
    %85 = vector.shape_cast %84 : vector<1x16x24xf32> to vector<16x24xf32>
    %86 = vector.extract_strided_slice %3 {offsets = [3, 0], sizes = [1, 24], strides = [1, 1]} : vector<9x24xf32> to vector<1x24xf32>
    %87 = vector.broadcast %86 : vector<1x24xf32> to vector<16x24xf32>
    %88 = arith.mulf %85, %87 : vector<16x24xf32>
    %89 = arith.addf %83, %88 : vector<16x24xf32>
    %c1_56 = arith.constant 1 : index
    %c1_57 = arith.constant 1 : index
    %c0_58 = arith.constant 0 : index
    %90 = vector.load %arg13[%c1_56, %c1_57, %c0_58] : memref<10x18x24xf32, #tpu.memory_space<vmem>>, vector<1x16x24xf32>
    %91 = vector.shape_cast %90 : vector<1x16x24xf32> to vector<16x24xf32>
    %92 = vector.extract_strided_slice %3 {offsets = [4, 0], sizes = [1, 24], strides = [1, 1]} : vector<9x24xf32> to vector<1x24xf32>
    %93 = vector.broadcast %92 : vector<1x24xf32> to vector<16x24xf32>
    %94 = arith.mulf %91, %93 : vector<16x24xf32>
    %95 = arith.addf %89, %94 : vector<16x24xf32>
    %c1_59 = arith.constant 1 : index
    %c2_60 = arith.constant 2 : index
    %c0_61 = arith.constant 0 : index
    %96 = vector.load %arg13[%c1_59, %c2_60, %c0_61] : memref<10x18x24xf32, #tpu.memory_space<vmem>>, vector<1x16x24xf32>
    %97 = vector.shape_cast %96 : vector<1x16x24xf32> to vector<16x24xf32>
    %98 = vector.extract_strided_slice %3 {offsets = [5, 0], sizes = [1, 24], strides = [1, 1]} : vector<9x24xf32> to vector<1x24xf32>
    %99 = vector.broadcast %98 : vector<1x24xf32> to vector<16x24xf32>
    %100 = arith.mulf %97, %99 : vector<16x24xf32>
    %101 = arith.addf %95, %100 : vector<16x24xf32>
    %c2_62 = arith.constant 2 : index
    %c0_63 = arith.constant 0 : index
    %c0_64 = arith.constant 0 : index
    %102 = vector.load %arg13[%c2_62, %c0_63, %c0_64] : memref<10x18x24xf32, #tpu.memory_space<vmem>>, vector<1x16x24xf32>
    %103 = vector.shape_cast %102 : vector<1x16x24xf32> to vector<16x24xf32>
    %104 = vector.extract_strided_slice %3 {offsets = [6, 0], sizes = [1, 24], strides = [1, 1]} : vector<9x24xf32> to vector<1x24xf32>
    %105 = vector.broadcast %104 : vector<1x24xf32> to vector<16x24xf32>
    %106 = arith.mulf %103, %105 : vector<16x24xf32>
    %107 = arith.addf %101, %106 : vector<16x24xf32>
    %c2_65 = arith.constant 2 : index
    %c1_66 = arith.constant 1 : index
    %c0_67 = arith.constant 0 : index
    %108 = vector.load %arg13[%c2_65, %c1_66, %c0_67] : memref<10x18x24xf32, #tpu.memory_space<vmem>>, vector<1x16x24xf32>
    %109 = vector.shape_cast %108 : vector<1x16x24xf32> to vector<16x24xf32>
    %110 = vector.extract_strided_slice %3 {offsets = [7, 0], sizes = [1, 24], strides = [1, 1]} : vector<9x24xf32> to vector<1x24xf32>
    %111 = vector.broadcast %110 : vector<1x24xf32> to vector<16x24xf32>
    %112 = arith.mulf %109, %111 : vector<16x24xf32>
    %113 = arith.addf %107, %112 : vector<16x24xf32>
    %c2_68 = arith.constant 2 : index
    %c2_69 = arith.constant 2 : index
    %c0_70 = arith.constant 0 : index
    %114 = vector.load %arg13[%c2_68, %c2_69, %c0_70] : memref<10x18x24xf32, #tpu.memory_space<vmem>>, vector<1x16x24xf32>
    %115 = vector.shape_cast %114 : vector<1x16x24xf32> to vector<16x24xf32>
    %116 = vector.extract_strided_slice %3 {offsets = [8, 0], sizes = [1, 24], strides = [1, 1]} : vector<9x24xf32> to vector<1x24xf32>
    %117 = vector.broadcast %116 : vector<1x24xf32> to vector<16x24xf32>
    %118 = arith.mulf %115, %117 : vector<16x24xf32>
    %119 = arith.addf %113, %118 : vector<16x24xf32>
    %120 = vector.broadcast %4 : vector<1x24xf32> to vector<16x24xf32>
    %121 = arith.mulf %119, %120 : vector<16x24xf32>
    %122 = vector.broadcast %5 : vector<1x24xf32> to vector<16x24xf32>
    %123 = arith.addf %121, %122 : vector<16x24xf32>
    %cst_71 = arith.constant 0.000000e+00 : f32
    %cst_72 = arith.constant 6.000000e+00 : f32
    %124 = vector.broadcast %cst_71 : f32 to vector<16x24xf32>
    %125 = arith.maximumf %124, %123 : vector<16x24xf32>
    %126 = vector.broadcast %cst_72 : f32 to vector<16x24xf32>
    %127 = arith.minimumf %126, %125 : vector<16x24xf32>
    %c0_73 = arith.constant 0 : index
    %c0_74 = arith.constant 0 : index
    %128 = vector.load %arg14[%c0_73, %c0_74] : memref<128x24xf32, #tpu.memory_space<vmem>>, vector<16x24xf32>
    tpu.vector_store %arg14[%c0_73, %c0_74], %127 {strides = array<i32>} : memref<128x24xf32, #tpu.memory_space<vmem>>, vector<16x24xf32>,
    %cst_75 = arith.constant 0.000000e+00 : f32
    %129 = vector.broadcast %cst_75 : f32 to vector<16x24xf32>
    %c1_76 = arith.constant 1 : index
    %c0_77 = arith.constant 0 : index
    %c0_78 = arith.constant 0 : index
    %130 = vector.load %arg13[%c1_76, %c0_77, %c0_78] : memref<10x18x24xf32, #tpu.memory_space<vmem>>, vector<1x16x24xf32>
    %131 = vector.shape_cast %130 : vector<1x16x24xf32> to vector<16x24xf32>
    %132 = vector.extract_strided_slice %3 {offsets = [0, 0], sizes = [1, 24], strides = [1, 1]} : vector<9x24xf32> to vector<1x24xf32>
    %133 = vector.broadcast %132 : vector<1x24xf32> to vector<16x24xf32>
    %134 = arith.mulf %131, %133 : vector<16x24xf32>
    %135 = arith.addf %129, %134 : vector<16x24xf32>
    %c1_79 = arith.constant 1 : index
    %c1_80 = arith.constant 1 : index
    %c0_81 = arith.constant 0 : index
    %136 = vector.load %arg13[%c1_79, %c1_80, %c0_81] : memref<10x18x24xf32, #tpu.memory_space<vmem>>, vector<1x16x24xf32>
    %137 = vector.shape_cast %136 : vector<1x16x24xf32> to vector<16x24xf32>
    %138 = vector.extract_strided_slice %3 {offsets = [1, 0], sizes = [1, 24], strides = [1, 1]} : vector<9x24xf32> to vector<1x24xf32>
    %139 = vector.broadcast %138 : vector<1x24xf32> to vector<16x24xf32>
    %140 = arith.mulf %137, %139 : vector<16x24xf32>
    %141 = arith.addf %135, %140 : vector<16x24xf32>
    %c1_82 = arith.constant 1 : index
    %c2_83 = arith.constant 2 : index
    %c0_84 = arith.constant 0 : index
    %142 = vector.load %arg13[%c1_82, %c2_83, %c0_84] : memref<10x18x24xf32, #tpu.memory_space<vmem>>, vector<1x16x24xf32>
    %143 = vector.shape_cast %142 : vector<1x16x24xf32> to vector<16x24xf32>
    %144 = vector.extract_strided_slice %3 {offsets = [2, 0], sizes = [1, 24], strides = [1, 1]} : vector<9x24xf32> to vector<1x24xf32>
    %145 = vector.broadcast %144 : vector<1x24xf32> to vector<16x24xf32>
    %146 = arith.mulf %143, %145 : vector<16x24xf32>
    %147 = arith.addf %141, %146 : vector<16x24xf32>
    %c2_85 = arith.constant 2 : index
    %c0_86 = arith.constant 0 : index
    %c0_87 = arith.constant 0 : index
    %148 = vector.load %arg13[%c2_85, %c0_86, %c0_87] : memref<10x18x24xf32, #tpu.memory_space<vmem>>, vector<1x16x24xf32>
    %149 = vector.shape_cast %148 : vector<1x16x24xf32> to vector<16x24xf32>
    %150 = vector.extract_strided_slice %3 {offsets = [3, 0], sizes = [1, 24], strides = [1, 1]} : vector<9x24xf32> to vector<1x24xf32>
    %151 = vector.broadcast %150 : vector<1x24xf32> to vector<16x24xf32>
    %152 = arith.mulf %149, %151 : vector<16x24xf32>
    %153 = arith.addf %147, %152 : vector<16x24xf32>
    %c2_88 = arith.constant 2 : index
    %c1_89 = arith.constant 1 : index
    %c0_90 = arith.constant 0 : index
    %154 = vector.load %arg13[%c2_88, %c1_89, %c0_90] : memref<10x18x24xf32, #tpu.memory_space<vmem>>, vector<1x16x24xf32>
    %155 = vector.shape_cast %154 : vector<1x16x24xf32> to vector<16x24xf32>
    %156 = vector.extract_strided_slice %3 {offsets = [4, 0], sizes = [1, 24], strides = [1, 1]} : vector<9x24xf32> to vector<1x24xf32>
    %157 = vector.broadcast %156 : vector<1x24xf32> to vector<16x24xf32>
    %158 = arith.mulf %155, %157 : vector<16x24xf32>
    %159 = arith.addf %153, %158 : vector<16x24xf32>
    %c2_91 = arith.constant 2 : index
    %c2_92 = arith.constant 2 : index
    %c0_93 = arith.constant 0 : index
    %160 = vector.load %arg13[%c2_91, %c2_92, %c0_93] : memref<10x18x24xf32, #tpu.memory_space<vmem>>, vector<1x16x24xf32>
    %161 = vector.shape_cast %160 : vector<1x16x24xf32> to vector<16x24xf32>
    %162 = vector.extract_strided_slice %3 {offsets = [5, 0], sizes = [1, 24], strides = [1, 1]} : vector<9x24xf32> to vector<1x24xf32>
    %163 = vector.broadcast %162 : vector<1x24xf32> to vector<16x24xf32>
    %164 = arith.mulf %161, %163 : vector<16x24xf32>
    %165 = arith.addf %159, %164 : vector<16x24xf32>
    %c3_94 = arith.constant 3 : index
    %c0_95 = arith.constant 0 : index
    %c0_96 = arith.constant 0 : index
    %166 = vector.load %arg13[%c3_94, %c0_95, %c0_96] : memref<10x18x24xf32, #tpu.memory_space<vmem>>, vector<1x16x24xf32>
    %167 = vector.shape_cast %166 : vector<1x16x24xf32> to vector<16x24xf32>
    %168 = vector.extract_strided_slice %3 {offsets = [6, 0], sizes = [1, 24], strides = [1, 1]} : vector<9x24xf32> to vector<1x24xf32>
    %169 = vector.broadcast %168 : vector<1x24xf32> to vector<16x24xf32>
    %170 = arith.mulf %167, %169 : vector<16x24xf32>
    %171 = arith.addf %165, %170 : vector<16x24xf32>
    %c3_97 = arith.constant 3 : index
    %c1_98 = arith.constant 1 : index
    %c0_99 = arith.constant 0 : index
    %172 = vector.load %arg13[%c3_97, %c1_98, %c0_99] : memref<10x18x24xf32, #tpu.memory_space<vmem>>, vector<1x16x24xf32>
    %173 = vector.shape_cast %172 : vector<1x16x24xf32> to vector<16x24xf32>
    %174 = vector.extract_strided_slice %3 {offsets = [7, 0], sizes = [1, 24], strides = [1, 1]} : vector<9x24xf32> to vector<1x24xf32>
    %175 = vector.broadcast %174 : vector<1x24xf32> to vector<16x24xf32>
    %176 = arith.mulf %173, %175 : vector<16x24xf32>
    %177 = arith.addf %171, %176 : vector<16x24xf32>
    %c3_100 = arith.constant 3 : index
    %c2_101 = arith.constant 2 : index
    %c0_102 = arith.constant 0 : index
    %178 = vector.load %arg13[%c3_100, %c2_101, %c0_102] : memref<10x18x24xf32, #tpu.memory_space<vmem>>, vector<1x16x24xf32>
    %179 = vector.shape_cast %178 : vector<1x16x24xf32> to vector<16x24xf32>
    %180 = vector.extract_strided_slice %3 {offsets = [8, 0], sizes = [1, 24], strides = [1, 1]} : vector<9x24xf32> to vector<1x24xf32>
    %181 = vector.broadcast %180 : vector<1x24xf32> to vector<16x24xf32>
    %182 = arith.mulf %179, %181 : vector<16x24xf32>
    %183 = arith.addf %177, %182 : vector<16x24xf32>
    %184 = vector.broadcast %4 : vector<1x24xf32> to vector<16x24xf32>
    %185 = arith.mulf %183, %184 : vector<16x24xf32>
    %186 = vector.broadcast %5 : vector<1x24xf32> to vector<16x24xf32>
    %187 = arith.addf %185, %186 : vector<16x24xf32>
    %cst_103 = arith.constant 0.000000e+00 : f32
    %cst_104 = arith.constant 6.000000e+00 : f32
    %188 = vector.broadcast %cst_103 : f32 to vector<16x24xf32>
    %189 = arith.maximumf %188, %187 : vector<16x24xf32>
    %190 = vector.broadcast %cst_104 : f32 to vector<16x24xf32>
    %191 = arith.minimumf %190, %189 : vector<16x24xf32>
    %c16 = arith.constant 16 : index
    %c0_105 = arith.constant 0 : index
    %192 = vector.load %arg14[%c16, %c0_105] : memref<128x24xf32, #tpu.memory_space<vmem>>, vector<16x24xf32>
    tpu.vector_store %arg14[%c16, %c0_105], %191 {strides = array<i32>} : memref<128x24xf32, #tpu.memory_space<vmem>>, vector<16x24xf32>,
    %cst_106 = arith.constant 0.000000e+00 : f32
    %193 = vector.broadcast %cst_106 : f32 to vector<16x24xf32>
    %c2_107 = arith.constant 2 : index
    %c0_108 = arith.constant 0 : index
    %c0_109 = arith.constant 0 : index
    %194 = vector.load %arg13[%c2_107, %c0_108, %c0_109] : memref<10x18x24xf32, #tpu.memory_space<vmem>>, vector<1x16x24xf32>
    %195 = vector.shape_cast %194 : vector<1x16x24xf32> to vector<16x24xf32>
    %196 = vector.extract_strided_slice %3 {offsets = [0, 0], sizes = [1, 24], strides = [1, 1]} : vector<9x24xf32> to vector<1x24xf32>
    %197 = vector.broadcast %196 : vector<1x24xf32> to vector<16x24xf32>
    %198 = arith.mulf %195, %197 : vector<16x24xf32>
    %199 = arith.addf %193, %198 : vector<16x24xf32>
    %c2_110 = arith.constant 2 : index
    %c1_111 = arith.constant 1 : index
    %c0_112 = arith.constant 0 : index
    %200 = vector.load %arg13[%c2_110, %c1_111, %c0_112] : memref<10x18x24xf32, #tpu.memory_space<vmem>>, vector<1x16x24xf32>
    %201 = vector.shape_cast %200 : vector<1x16x24xf32> to vector<16x24xf32>
    %202 = vector.extract_strided_slice %3 {offsets = [1, 0], sizes = [1, 24], strides = [1, 1]} : vector<9x24xf32> to vector<1x24xf32>
    %203 = vector.broadcast %202 : vector<1x24xf32> to vector<16x24xf32>
    %204 = arith.mulf %201, %203 : vector<16x24xf32>
    %205 = arith.addf %199, %204 : vector<16x24xf32>
    %c2_113 = arith.constant 2 : index
    %c2_114 = arith.constant 2 : index
    %c0_115 = arith.constant 0 : index
    %206 = vector.load %arg13[%c2_113, %c2_114, %c0_115] : memref<10x18x24xf32, #tpu.memory_space<vmem>>, vector<1x16x24xf32>
    %207 = vector.shape_cast %206 : vector<1x16x24xf32> to vector<16x24xf32>
    %208 = vector.extract_strided_slice %3 {offsets = [2, 0], sizes = [1, 24], strides = [1, 1]} : vector<9x24xf32> to vector<1x24xf32>
    %209 = vector.broadcast %208 : vector<1x24xf32> to vector<16x24xf32>
    %210 = arith.mulf %207, %209 : vector<16x24xf32>
    %211 = arith.addf %205, %210 : vector<16x24xf32>
    %c3_116 = arith.constant 3 : index
    %c0_117 = arith.constant 0 : index
    %c0_118 = arith.constant 0 : index
    %212 = vector.load %arg13[%c3_116, %c0_117, %c0_118] : memref<10x18x24xf32, #tpu.memory_space<vmem>>, vector<1x16x24xf32>
    %213 = vector.shape_cast %212 : vector<1x16x24xf32> to vector<16x24xf32>
    %214 = vector.extract_strided_slice %3 {offsets = [3, 0], sizes = [1, 24], strides = [1, 1]} : vector<9x24xf32> to vector<1x24xf32>
    %215 = vector.broadcast %214 : vector<1x24xf32> to vector<16x24xf32>
    %216 = arith.mulf %213, %215 : vector<16x24xf32>
    %217 = arith.addf %211, %216 : vector<16x24xf32>
    %c3_119 = arith.constant 3 : index
    %c1_120 = arith.constant 1 : index
    %c0_121 = arith.constant 0 : index
    %218 = vector.load %arg13[%c3_119, %c1_120, %c0_121] : memref<10x18x24xf32, #tpu.memory_space<vmem>>, vector<1x16x24xf32>
    %219 = vector.shape_cast %218 : vector<1x16x24xf32> to vector<16x24xf32>
    %220 = vector.extract_strided_slice %3 {offsets = [4, 0], sizes = [1, 24], strides = [1, 1]} : vector<9x24xf32> to vector<1x24xf32>
    %221 = vector.broadcast %220 : vector<1x24xf32> to vector<16x24xf32>
    %222 = arith.mulf %219, %221 : vector<16x24xf32>
    %223 = arith.addf %217, %222 : vector<16x24xf32>
    %c3_122 = arith.constant 3 : index
    %c2_123 = arith.constant 2 : index
    %c0_124 = arith.constant 0 : index
    %224 = vector.load %arg13[%c3_122, %c2_123, %c0_124] : memref<10x18x24xf32, #tpu.memory_space<vmem>>, vector<1x16x24xf32>
    %225 = vector.shape_cast %224 : vector<1x16x24xf32> to vector<16x24xf32>
    %226 = vector.extract_strided_slice %3 {offsets = [5, 0], sizes = [1, 24], strides = [1, 1]} : vector<9x24xf32> to vector<1x24xf32>
    %227 = vector.broadcast %226 : vector<1x24xf32> to vector<16x24xf32>
    %228 = arith.mulf %225, %227 : vector<16x24xf32>
    %229 = arith.addf %223, %228 : vector<16x24xf32>
    %c4_125 = arith.constant 4 : index
    %c0_126 = arith.constant 0 : index
    %c0_127 = arith.constant 0 : index
    %230 = vector.load %arg13[%c4_125, %c0_126, %c0_127] : memref<10x18x24xf32, #tpu.memory_space<vmem>>, vector<1x16x24xf32>
    %231 = vector.shape_cast %230 : vector<1x16x24xf32> to vector<16x24xf32>
    %232 = vector.extract_strided_slice %3 {offsets = [6, 0], sizes = [1, 24], strides = [1, 1]} : vector<9x24xf32> to vector<1x24xf32>
    %233 = vector.broadcast %232 : vector<1x24xf32> to vector<16x24xf32>
    %234 = arith.mulf %231, %233 : vector<16x24xf32>
    %235 = arith.addf %229, %234 : vector<16x24xf32>
    %c4_128 = arith.constant 4 : index
    %c1_129 = arith.constant 1 : index
    %c0_130 = arith.constant 0 : index
    %236 = vector.load %arg13[%c4_128, %c1_129, %c0_130] : memref<10x18x24xf32, #tpu.memory_space<vmem>>, vector<1x16x24xf32>
    %237 = vector.shape_cast %236 : vector<1x16x24xf32> to vector<16x24xf32>
    %238 = vector.extract_strided_slice %3 {offsets = [7, 0], sizes = [1, 24], strides = [1, 1]} : vector<9x24xf32> to vector<1x24xf32>
    %239 = vector.broadcast %238 : vector<1x24xf32> to vector<16x24xf32>
    %240 = arith.mulf %237, %239 : vector<16x24xf32>
    %241 = arith.addf %235, %240 : vector<16x24xf32>
    %c4_131 = arith.constant 4 : index
    %c2_132 = arith.constant 2 : index
    %c0_133 = arith.constant 0 : index
    %242 = vector.load %arg13[%c4_131, %c2_132, %c0_133] : memref<10x18x24xf32, #tpu.memory_space<vmem>>, vector<1x16x24xf32>
    %243 = vector.shape_cast %242 : vector<1x16x24xf32> to vector<16x24xf32>
    %244 = vector.extract_strided_slice %3 {offsets = [8, 0], sizes = [1, 24], strides = [1, 1]} : vector<9x24xf32> to vector<1x24xf32>
    %245 = vector.broadcast %244 : vector<1x24xf32> to vector<16x24xf32>
    %246 = arith.mulf %243, %245 : vector<16x24xf32>
    %247 = arith.addf %241, %246 : vector<16x24xf32>
    %248 = vector.broadcast %4 : vector<1x24xf32> to vector<16x24xf32>
    %249 = arith.mulf %247, %248 : vector<16x24xf32>
    %250 = vector.broadcast %5 : vector<1x24xf32> to vector<16x24xf32>
    %251 = arith.addf %249, %250 : vector<16x24xf32>
    %cst_134 = arith.constant 0.000000e+00 : f32
    %cst_135 = arith.constant 6.000000e+00 : f32
    %252 = vector.broadcast %cst_134 : f32 to vector<16x24xf32>
    %253 = arith.maximumf %252, %251 : vector<16x24xf32>
    %254 = vector.broadcast %cst_135 : f32 to vector<16x24xf32>
    %255 = arith.minimumf %254, %253 : vector<16x24xf32>
    %c32 = arith.constant 32 : index
    %c0_136 = arith.constant 0 : index
    %256 = vector.load %arg14[%c32, %c0_136] : memref<128x24xf32, #tpu.memory_space<vmem>>, vector<16x24xf32>
    tpu.vector_store %arg14[%c32, %c0_136], %255 {strides = array<i32>} : memref<128x24xf32, #tpu.memory_space<vmem>>, vector<16x24xf32>,
    %cst_137 = arith.constant 0.000000e+00 : f32
    %257 = vector.broadcast %cst_137 : f32 to vector<16x24xf32>
    %c3_138 = arith.constant 3 : index
    %c0_139 = arith.constant 0 : index
    %c0_140 = arith.constant 0 : index
    %258 = vector.load %arg13[%c3_138, %c0_139, %c0_140] : memref<10x18x24xf32, #tpu.memory_space<vmem>>, vector<1x16x24xf32>
    %259 = vector.shape_cast %258 : vector<1x16x24xf32> to vector<16x24xf32>
    %260 = vector.extract_strided_slice %3 {offsets = [0, 0], sizes = [1, 24], strides = [1, 1]} : vector<9x24xf32> to vector<1x24xf32>
    %261 = vector.broadcast %260 : vector<1x24xf32> to vector<16x24xf32>
    %262 = arith.mulf %259, %261 : vector<16x24xf32>
    %263 = arith.addf %257, %262 : vector<16x24xf32>
    %c3_141 = arith.constant 3 : index
    %c1_142 = arith.constant 1 : index
    %c0_143 = arith.constant 0 : index
    %264 = vector.load %arg13[%c3_141, %c1_142, %c0_143] : memref<10x18x24xf32, #tpu.memory_space<vmem>>, vector<1x16x24xf32>
    %265 = vector.shape_cast %264 : vector<1x16x24xf32> to vector<16x24xf32>
    %266 = vector.extract_strided_slice %3 {offsets = [1, 0], sizes = [1, 24], strides = [1, 1]} : vector<9x24xf32> to vector<1x24xf32>
    %267 = vector.broadcast %266 : vector<1x24xf32> to vector<16x24xf32>
    %268 = arith.mulf %265, %267 : vector<16x24xf32>
    %269 = arith.addf %263, %268 : vector<16x24xf32>
    %c3_144 = arith.constant 3 : index
    %c2_145 = arith.constant 2 : index
    %c0_146 = arith.constant 0 : index
    %270 = vector.load %arg13[%c3_144, %c2_145, %c0_146] : memref<10x18x24xf32, #tpu.memory_space<vmem>>, vector<1x16x24xf32>
    %271 = vector.shape_cast %270 : vector<1x16x24xf32> to vector<16x24xf32>
    %272 = vector.extract_strided_slice %3 {offsets = [2, 0], sizes = [1, 24], strides = [1, 1]} : vector<9x24xf32> to vector<1x24xf32>
    %273 = vector.broadcast %272 : vector<1x24xf32> to vector<16x24xf32>
    %274 = arith.mulf %271, %273 : vector<16x24xf32>
    %275 = arith.addf %269, %274 : vector<16x24xf32>
    %c4_147 = arith.constant 4 : index
    %c0_148 = arith.constant 0 : index
    %c0_149 = arith.constant 0 : index
    %276 = vector.load %arg13[%c4_147, %c0_148, %c0_149] : memref<10x18x24xf32, #tpu.memory_space<vmem>>, vector<1x16x24xf32>
    %277 = vector.shape_cast %276 : vector<1x16x24xf32> to vector<16x24xf32>
    %278 = vector.extract_strided_slice %3 {offsets = [3, 0], sizes = [1, 24], strides = [1, 1]} : vector<9x24xf32> to vector<1x24xf32>
    %279 = vector.broadcast %278 : vector<1x24xf32> to vector<16x24xf32>
    %280 = arith.mulf %277, %279 : vector<16x24xf32>
    %281 = arith.addf %275, %280 : vector<16x24xf32>
    %c4_150 = arith.constant 4 : index
    %c1_151 = arith.constant 1 : index
    %c0_152 = arith.constant 0 : index
    %282 = vector.load %arg13[%c4_150, %c1_151, %c0_152] : memref<10x18x24xf32, #tpu.memory_space<vmem>>, vector<1x16x24xf32>
    %283 = vector.shape_cast %282 : vector<1x16x24xf32> to vector<16x24xf32>
    %284 = vector.extract_strided_slice %3 {offsets = [4, 0], sizes = [1, 24], strides = [1, 1]} : vector<9x24xf32> to vector<1x24xf32>
    %285 = vector.broadcast %284 : vector<1x24xf32> to vector<16x24xf32>
    %286 = arith.mulf %283, %285 : vector<16x24xf32>
    %287 = arith.addf %281, %286 : vector<16x24xf32>
    %c4_153 = arith.constant 4 : index
    %c2_154 = arith.constant 2 : index
    %c0_155 = arith.constant 0 : index
    %288 = vector.load %arg13[%c4_153, %c2_154, %c0_155] : memref<10x18x24xf32, #tpu.memory_space<vmem>>, vector<1x16x24xf32>
    %289 = vector.shape_cast %288 : vector<1x16x24xf32> to vector<16x24xf32>
    %290 = vector.extract_strided_slice %3 {offsets = [5, 0], sizes = [1, 24], strides = [1, 1]} : vector<9x24xf32> to vector<1x24xf32>
    %291 = vector.broadcast %290 : vector<1x24xf32> to vector<16x24xf32>
    %292 = arith.mulf %289, %291 : vector<16x24xf32>
    %293 = arith.addf %287, %292 : vector<16x24xf32>
    %c5_156 = arith.constant 5 : index
    %c0_157 = arith.constant 0 : index
    %c0_158 = arith.constant 0 : index
    %294 = vector.load %arg13[%c5_156, %c0_157, %c0_158] : memref<10x18x24xf32, #tpu.memory_space<vmem>>, vector<1x16x24xf32>
    %295 = vector.shape_cast %294 : vector<1x16x24xf32> to vector<16x24xf32>
    %296 = vector.extract_strided_slice %3 {offsets = [6, 0], sizes = [1, 24], strides = [1, 1]} : vector<9x24xf32> to vector<1x24xf32>
    %297 = vector.broadcast %296 : vector<1x24xf32> to vector<16x24xf32>
    %298 = arith.mulf %295, %297 : vector<16x24xf32>
    %299 = arith.addf %293, %298 : vector<16x24xf32>
    %c5_159 = arith.constant 5 : index
    %c1_160 = arith.constant 1 : index
    %c0_161 = arith.constant 0 : index
    %300 = vector.load %arg13[%c5_159, %c1_160, %c0_161] : memref<10x18x24xf32, #tpu.memory_space<vmem>>, vector<1x16x24xf32>
    %301 = vector.shape_cast %300 : vector<1x16x24xf32> to vector<16x24xf32>
    %302 = vector.extract_strided_slice %3 {offsets = [7, 0], sizes = [1, 24], strides = [1, 1]} : vector<9x24xf32> to vector<1x24xf32>
    %303 = vector.broadcast %302 : vector<1x24xf32> to vector<16x24xf32>
    %304 = arith.mulf %301, %303 : vector<16x24xf32>
    %305 = arith.addf %299, %304 : vector<16x24xf32>
    %c5_162 = arith.constant 5 : index
    %c2_163 = arith.constant 2 : index
    %c0_164 = arith.constant 0 : index
    %306 = vector.load %arg13[%c5_162, %c2_163, %c0_164] : memref<10x18x24xf32, #tpu.memory_space<vmem>>, vector<1x16x24xf32>
    %307 = vector.shape_cast %306 : vector<1x16x24xf32> to vector<16x24xf32>
    %308 = vector.extract_strided_slice %3 {offsets = [8, 0], sizes = [1, 24], strides = [1, 1]} : vector<9x24xf32> to vector<1x24xf32>
    %309 = vector.broadcast %308 : vector<1x24xf32> to vector<16x24xf32>
    %310 = arith.mulf %307, %309 : vector<16x24xf32>
    %311 = arith.addf %305, %310 : vector<16x24xf32>
    %312 = vector.broadcast %4 : vector<1x24xf32> to vector<16x24xf32>
    %313 = arith.mulf %311, %312 : vector<16x24xf32>
    %314 = vector.broadcast %5 : vector<1x24xf32> to vector<16x24xf32>
    %315 = arith.addf %313, %314 : vector<16x24xf32>
    %cst_165 = arith.constant 0.000000e+00 : f32
    %cst_166 = arith.constant 6.000000e+00 : f32
    %316 = vector.broadcast %cst_165 : f32 to vector<16x24xf32>
    %317 = arith.maximumf %316, %315 : vector<16x24xf32>
    %318 = vector.broadcast %cst_166 : f32 to vector<16x24xf32>
    %319 = arith.minimumf %318, %317 : vector<16x24xf32>
    %c48 = arith.constant 48 : index
    %c0_167 = arith.constant 0 : index
    %320 = vector.load %arg14[%c48, %c0_167] : memref<128x24xf32, #tpu.memory_space<vmem>>, vector<16x24xf32>
    tpu.vector_store %arg14[%c48, %c0_167], %319 {strides = array<i32>} : memref<128x24xf32, #tpu.memory_space<vmem>>, vector<16x24xf32>,
    %cst_168 = arith.constant 0.000000e+00 : f32
    %321 = vector.broadcast %cst_168 : f32 to vector<16x24xf32>
    %c4_169 = arith.constant 4 : index
    %c0_170 = arith.constant 0 : index
    %c0_171 = arith.constant 0 : index
    %322 = vector.load %arg13[%c4_169, %c0_170, %c0_171] : memref<10x18x24xf32, #tpu.memory_space<vmem>>, vector<1x16x24xf32>
    %323 = vector.shape_cast %322 : vector<1x16x24xf32> to vector<16x24xf32>
    %324 = vector.extract_strided_slice %3 {offsets = [0, 0], sizes = [1, 24], strides = [1, 1]} : vector<9x24xf32> to vector<1x24xf32>
    %325 = vector.broadcast %324 : vector<1x24xf32> to vector<16x24xf32>
    %326 = arith.mulf %323, %325 : vector<16x24xf32>
    %327 = arith.addf %321, %326 : vector<16x24xf32>
    %c4_172 = arith.constant 4 : index
    %c1_173 = arith.constant 1 : index
    %c0_174 = arith.constant 0 : index
    %328 = vector.load %arg13[%c4_172, %c1_173, %c0_174] : memref<10x18x24xf32, #tpu.memory_space<vmem>>, vector<1x16x24xf32>
    %329 = vector.shape_cast %328 : vector<1x16x24xf32> to vector<16x24xf32>
    %330 = vector.extract_strided_slice %3 {offsets = [1, 0], sizes = [1, 24], strides = [1, 1]} : vector<9x24xf32> to vector<1x24xf32>
    %331 = vector.broadcast %330 : vector<1x24xf32> to vector<16x24xf32>
    %332 = arith.mulf %329, %331 : vector<16x24xf32>
    %333 = arith.addf %327, %332 : vector<16x24xf32>
    %c4_175 = arith.constant 4 : index
    %c2_176 = arith.constant 2 : index
    %c0_177 = arith.constant 0 : index
    %334 = vector.load %arg13[%c4_175, %c2_176, %c0_177] : memref<10x18x24xf32, #tpu.memory_space<vmem>>, vector<1x16x24xf32>
    %335 = vector.shape_cast %334 : vector<1x16x24xf32> to vector<16x24xf32>
    %336 = vector.extract_strided_slice %3 {offsets = [2, 0], sizes = [1, 24], strides = [1, 1]} : vector<9x24xf32> to vector<1x24xf32>
    %337 = vector.broadcast %336 : vector<1x24xf32> to vector<16x24xf32>
    %338 = arith.mulf %335, %337 : vector<16x24xf32>
    %339 = arith.addf %333, %338 : vector<16x24xf32>
    %c5_178 = arith.constant 5 : index
    %c0_179 = arith.constant 0 : index
    %c0_180 = arith.constant 0 : index
    %340 = vector.load %arg13[%c5_178, %c0_179, %c0_180] : memref<10x18x24xf32, #tpu.memory_space<vmem>>, vector<1x16x24xf32>
    %341 = vector.shape_cast %340 : vector<1x16x24xf32> to vector<16x24xf32>
    %342 = vector.extract_strided_slice %3 {offsets = [3, 0], sizes = [1, 24], strides = [1, 1]} : vector<9x24xf32> to vector<1x24xf32>
    %343 = vector.broadcast %342 : vector<1x24xf32> to vector<16x24xf32>
    %344 = arith.mulf %341, %343 : vector<16x24xf32>
    %345 = arith.addf %339, %344 : vector<16x24xf32>
    %c5_181 = arith.constant 5 : index
    %c1_182 = arith.constant 1 : index
    %c0_183 = arith.constant 0 : index
    %346 = vector.load %arg13[%c5_181, %c1_182, %c0_183] : memref<10x18x24xf32, #tpu.memory_space<vmem>>, vector<1x16x24xf32>
    %347 = vector.shape_cast %346 : vector<1x16x24xf32> to vector<16x24xf32>
    %348 = vector.extract_strided_slice %3 {offsets = [4, 0], sizes = [1, 24], strides = [1, 1]} : vector<9x24xf32> to vector<1x24xf32>
    %349 = vector.broadcast %348 : vector<1x24xf32> to vector<16x24xf32>
    %350 = arith.mulf %347, %349 : vector<16x24xf32>
    %351 = arith.addf %345, %350 : vector<16x24xf32>
    %c5_184 = arith.constant 5 : index
    %c2_185 = arith.constant 2 : index
    %c0_186 = arith.constant 0 : index
    %352 = vector.load %arg13[%c5_184, %c2_185, %c0_186] : memref<10x18x24xf32, #tpu.memory_space<vmem>>, vector<1x16x24xf32>
    %353 = vector.shape_cast %352 : vector<1x16x24xf32> to vector<16x24xf32>
    %354 = vector.extract_strided_slice %3 {offsets = [5, 0], sizes = [1, 24], strides = [1, 1]} : vector<9x24xf32> to vector<1x24xf32>
    %355 = vector.broadcast %354 : vector<1x24xf32> to vector<16x24xf32>
    %356 = arith.mulf %353, %355 : vector<16x24xf32>
    %357 = arith.addf %351, %356 : vector<16x24xf32>
    %c6_187 = arith.constant 6 : index
    %c0_188 = arith.constant 0 : index
    %c0_189 = arith.constant 0 : index
    %358 = vector.load %arg13[%c6_187, %c0_188, %c0_189] : memref<10x18x24xf32, #tpu.memory_space<vmem>>, vector<1x16x24xf32>
    %359 = vector.shape_cast %358 : vector<1x16x24xf32> to vector<16x24xf32>
    %360 = vector.extract_strided_slice %3 {offsets = [6, 0], sizes = [1, 24], strides = [1, 1]} : vector<9x24xf32> to vector<1x24xf32>
    %361 = vector.broadcast %360 : vector<1x24xf32> to vector<16x24xf32>
    %362 = arith.mulf %359, %361 : vector<16x24xf32>
    %363 = arith.addf %357, %362 : vector<16x24xf32>
    %c6_190 = arith.constant 6 : index
    %c1_191 = arith.constant 1 : index
    %c0_192 = arith.constant 0 : index
    %364 = vector.load %arg13[%c6_190, %c1_191, %c0_192] : memref<10x18x24xf32, #tpu.memory_space<vmem>>, vector<1x16x24xf32>
    %365 = vector.shape_cast %364 : vector<1x16x24xf32> to vector<16x24xf32>
    %366 = vector.extract_strided_slice %3 {offsets = [7, 0], sizes = [1, 24], strides = [1, 1]} : vector<9x24xf32> to vector<1x24xf32>
    %367 = vector.broadcast %366 : vector<1x24xf32> to vector<16x24xf32>
    %368 = arith.mulf %365, %367 : vector<16x24xf32>
    %369 = arith.addf %363, %368 : vector<16x24xf32>
    %c6_193 = arith.constant 6 : index
    %c2_194 = arith.constant 2 : index
    %c0_195 = arith.constant 0 : index
    %370 = vector.load %arg13[%c6_193, %c2_194, %c0_195] : memref<10x18x24xf32, #tpu.memory_space<vmem>>, vector<1x16x24xf32>
    %371 = vector.shape_cast %370 : vector<1x16x24xf32> to vector<16x24xf32>
    %372 = vector.extract_strided_slice %3 {offsets = [8, 0], sizes = [1, 24], strides = [1, 1]} : vector<9x24xf32> to vector<1x24xf32>
    %373 = vector.broadcast %372 : vector<1x24xf32> to vector<16x24xf32>
    %374 = arith.mulf %371, %373 : vector<16x24xf32>
    %375 = arith.addf %369, %374 : vector<16x24xf32>
    %376 = vector.broadcast %4 : vector<1x24xf32> to vector<16x24xf32>
    %377 = arith.mulf %375, %376 : vector<16x24xf32>
    %378 = vector.broadcast %5 : vector<1x24xf32> to vector<16x24xf32>
    %379 = arith.addf %377, %378 : vector<16x24xf32>
    %cst_196 = arith.constant 0.000000e+00 : f32
    %cst_197 = arith.constant 6.000000e+00 : f32
    %380 = vector.broadcast %cst_196 : f32 to vector<16x24xf32>
    %381 = arith.maximumf %380, %379 : vector<16x24xf32>
    %382 = vector.broadcast %cst_197 : f32 to vector<16x24xf32>
    %383 = arith.minimumf %382, %381 : vector<16x24xf32>
    %c64 = arith.constant 64 : index
    %c0_198 = arith.constant 0 : index
    %384 = vector.load %arg14[%c64, %c0_198] : memref<128x24xf32, #tpu.memory_space<vmem>>, vector<16x24xf32>
    tpu.vector_store %arg14[%c64, %c0_198], %383 {strides = array<i32>} : memref<128x24xf32, #tpu.memory_space<vmem>>, vector<16x24xf32>,
    %cst_199 = arith.constant 0.000000e+00 : f32
    %385 = vector.broadcast %cst_199 : f32 to vector<16x24xf32>
    %c5_200 = arith.constant 5 : index
    %c0_201 = arith.constant 0 : index
    %c0_202 = arith.constant 0 : index
    %386 = vector.load %arg13[%c5_200, %c0_201, %c0_202] : memref<10x18x24xf32, #tpu.memory_space<vmem>>, vector<1x16x24xf32>
    %387 = vector.shape_cast %386 : vector<1x16x24xf32> to vector<16x24xf32>
    %388 = vector.extract_strided_slice %3 {offsets = [0, 0], sizes = [1, 24], strides = [1, 1]} : vector<9x24xf32> to vector<1x24xf32>
    %389 = vector.broadcast %388 : vector<1x24xf32> to vector<16x24xf32>
    %390 = arith.mulf %387, %389 : vector<16x24xf32>
    %391 = arith.addf %385, %390 : vector<16x24xf32>
    %c5_203 = arith.constant 5 : index
    %c1_204 = arith.constant 1 : index
    %c0_205 = arith.constant 0 : index
    %392 = vector.load %arg13[%c5_203, %c1_204, %c0_205] : memref<10x18x24xf32, #tpu.memory_space<vmem>>, vector<1x16x24xf32>
    %393 = vector.shape_cast %392 : vector<1x16x24xf32> to vector<16x24xf32>
    %394 = vector.extract_strided_slice %3 {offsets = [1, 0], sizes = [1, 24], strides = [1, 1]} : vector<9x24xf32> to vector<1x24xf32>
    %395 = vector.broadcast %394 : vector<1x24xf32> to vector<16x24xf32>
    %396 = arith.mulf %393, %395 : vector<16x24xf32>
    %397 = arith.addf %391, %396 : vector<16x24xf32>
    %c5_206 = arith.constant 5 : index
    %c2_207 = arith.constant 2 : index
    %c0_208 = arith.constant 0 : index
    %398 = vector.load %arg13[%c5_206, %c2_207, %c0_208] : memref<10x18x24xf32, #tpu.memory_space<vmem>>, vector<1x16x24xf32>
    %399 = vector.shape_cast %398 : vector<1x16x24xf32> to vector<16x24xf32>
    %400 = vector.extract_strided_slice %3 {offsets = [2, 0], sizes = [1, 24], strides = [1, 1]} : vector<9x24xf32> to vector<1x24xf32>
    %401 = vector.broadcast %400 : vector<1x24xf32> to vector<16x24xf32>
    %402 = arith.mulf %399, %401 : vector<16x24xf32>
    %403 = arith.addf %397, %402 : vector<16x24xf32>
    %c6_209 = arith.constant 6 : index
    %c0_210 = arith.constant 0 : index
    %c0_211 = arith.constant 0 : index
    %404 = vector.load %arg13[%c6_209, %c0_210, %c0_211] : memref<10x18x24xf32, #tpu.memory_space<vmem>>, vector<1x16x24xf32>
    %405 = vector.shape_cast %404 : vector<1x16x24xf32> to vector<16x24xf32>
    %406 = vector.extract_strided_slice %3 {offsets = [3, 0], sizes = [1, 24], strides = [1, 1]} : vector<9x24xf32> to vector<1x24xf32>
    %407 = vector.broadcast %406 : vector<1x24xf32> to vector<16x24xf32>
    %408 = arith.mulf %405, %407 : vector<16x24xf32>
    %409 = arith.addf %403, %408 : vector<16x24xf32>
    %c6_212 = arith.constant 6 : index
    %c1_213 = arith.constant 1 : index
    %c0_214 = arith.constant 0 : index
    %410 = vector.load %arg13[%c6_212, %c1_213, %c0_214] : memref<10x18x24xf32, #tpu.memory_space<vmem>>, vector<1x16x24xf32>
    %411 = vector.shape_cast %410 : vector<1x16x24xf32> to vector<16x24xf32>
    %412 = vector.extract_strided_slice %3 {offsets = [4, 0], sizes = [1, 24], strides = [1, 1]} : vector<9x24xf32> to vector<1x24xf32>
    %413 = vector.broadcast %412 : vector<1x24xf32> to vector<16x24xf32>
    %414 = arith.mulf %411, %413 : vector<16x24xf32>
    %415 = arith.addf %409, %414 : vector<16x24xf32>
    %c6_215 = arith.constant 6 : index
    %c2_216 = arith.constant 2 : index
    %c0_217 = arith.constant 0 : index
    %416 = vector.load %arg13[%c6_215, %c2_216, %c0_217] : memref<10x18x24xf32, #tpu.memory_space<vmem>>, vector<1x16x24xf32>
    %417 = vector.shape_cast %416 : vector<1x16x24xf32> to vector<16x24xf32>
    %418 = vector.extract_strided_slice %3 {offsets = [5, 0], sizes = [1, 24], strides = [1, 1]} : vector<9x24xf32> to vector<1x24xf32>
    %419 = vector.broadcast %418 : vector<1x24xf32> to vector<16x24xf32>
    %420 = arith.mulf %417, %419 : vector<16x24xf32>
    %421 = arith.addf %415, %420 : vector<16x24xf32>
    %c7_218 = arith.constant 7 : index
    %c0_219 = arith.constant 0 : index
    %c0_220 = arith.constant 0 : index
    %422 = vector.load %arg13[%c7_218, %c0_219, %c0_220] : memref<10x18x24xf32, #tpu.memory_space<vmem>>, vector<1x16x24xf32>
    %423 = vector.shape_cast %422 : vector<1x16x24xf32> to vector<16x24xf32>
    %424 = vector.extract_strided_slice %3 {offsets = [6, 0], sizes = [1, 24], strides = [1, 1]} : vector<9x24xf32> to vector<1x24xf32>
    %425 = vector.broadcast %424 : vector<1x24xf32> to vector<16x24xf32>
    %426 = arith.mulf %423, %425 : vector<16x24xf32>
    %427 = arith.addf %421, %426 : vector<16x24xf32>
    %c7_221 = arith.constant 7 : index
    %c1_222 = arith.constant 1 : index
    %c0_223 = arith.constant 0 : index
    %428 = vector.load %arg13[%c7_221, %c1_222, %c0_223] : memref<10x18x24xf32, #tpu.memory_space<vmem>>, vector<1x16x24xf32>
    %429 = vector.shape_cast %428 : vector<1x16x24xf32> to vector<16x24xf32>
    %430 = vector.extract_strided_slice %3 {offsets = [7, 0], sizes = [1, 24], strides = [1, 1]} : vector<9x24xf32> to vector<1x24xf32>
    %431 = vector.broadcast %430 : vector<1x24xf32> to vector<16x24xf32>
    %432 = arith.mulf %429, %431 : vector<16x24xf32>
    %433 = arith.addf %427, %432 : vector<16x24xf32>
    %c7_224 = arith.constant 7 : index
    %c2_225 = arith.constant 2 : index
    %c0_226 = arith.constant 0 : index
    %434 = vector.load %arg13[%c7_224, %c2_225, %c0_226] : memref<10x18x24xf32, #tpu.memory_space<vmem>>, vector<1x16x24xf32>
    %435 = vector.shape_cast %434 : vector<1x16x24xf32> to vector<16x24xf32>
    %436 = vector.extract_strided_slice %3 {offsets = [8, 0], sizes = [1, 24], strides = [1, 1]} : vector<9x24xf32> to vector<1x24xf32>
    %437 = vector.broadcast %436 : vector<1x24xf32> to vector<16x24xf32>
    %438 = arith.mulf %435, %437 : vector<16x24xf32>
    %439 = arith.addf %433, %438 : vector<16x24xf32>
    %440 = vector.broadcast %4 : vector<1x24xf32> to vector<16x24xf32>
    %441 = arith.mulf %439, %440 : vector<16x24xf32>
    %442 = vector.broadcast %5 : vector<1x24xf32> to vector<16x24xf32>
    %443 = arith.addf %441, %442 : vector<16x24xf32>
    %cst_227 = arith.constant 0.000000e+00 : f32
    %cst_228 = arith.constant 6.000000e+00 : f32
    %444 = vector.broadcast %cst_227 : f32 to vector<16x24xf32>
    %445 = arith.maximumf %444, %443 : vector<16x24xf32>
    %446 = vector.broadcast %cst_228 : f32 to vector<16x24xf32>
    %447 = arith.minimumf %446, %445 : vector<16x24xf32>
    %c80 = arith.constant 80 : index
    %c0_229 = arith.constant 0 : index
    %448 = vector.load %arg14[%c80, %c0_229] : memref<128x24xf32, #tpu.memory_space<vmem>>, vector<16x24xf32>
    tpu.vector_store %arg14[%c80, %c0_229], %447 {strides = array<i32>} : memref<128x24xf32, #tpu.memory_space<vmem>>, vector<16x24xf32>,
    %cst_230 = arith.constant 0.000000e+00 : f32
    %449 = vector.broadcast %cst_230 : f32 to vector<16x24xf32>
    %c6_231 = arith.constant 6 : index
    %c0_232 = arith.constant 0 : index
    %c0_233 = arith.constant 0 : index
    %450 = vector.load %arg13[%c6_231, %c0_232, %c0_233] : memref<10x18x24xf32, #tpu.memory_space<vmem>>, vector<1x16x24xf32>
    %451 = vector.shape_cast %450 : vector<1x16x24xf32> to vector<16x24xf32>
    %452 = vector.extract_strided_slice %3 {offsets = [0, 0], sizes = [1, 24], strides = [1, 1]} : vector<9x24xf32> to vector<1x24xf32>
    %453 = vector.broadcast %452 : vector<1x24xf32> to vector<16x24xf32>
    %454 = arith.mulf %451, %453 : vector<16x24xf32>
    %455 = arith.addf %449, %454 : vector<16x24xf32>
    %c6_234 = arith.constant 6 : index
    %c1_235 = arith.constant 1 : index
    %c0_236 = arith.constant 0 : index
    %456 = vector.load %arg13[%c6_234, %c1_235, %c0_236] : memref<10x18x24xf32, #tpu.memory_space<vmem>>, vector<1x16x24xf32>
    %457 = vector.shape_cast %456 : vector<1x16x24xf32> to vector<16x24xf32>
    %458 = vector.extract_strided_slice %3 {offsets = [1, 0], sizes = [1, 24], strides = [1, 1]} : vector<9x24xf32> to vector<1x24xf32>
    %459 = vector.broadcast %458 : vector<1x24xf32> to vector<16x24xf32>
    %460 = arith.mulf %457, %459 : vector<16x24xf32>
    %461 = arith.addf %455, %460 : vector<16x24xf32>
    %c6_237 = arith.constant 6 : index
    %c2_238 = arith.constant 2 : index
    %c0_239 = arith.constant 0 : index
    %462 = vector.load %arg13[%c6_237, %c2_238, %c0_239] : memref<10x18x24xf32, #tpu.memory_space<vmem>>, vector<1x16x24xf32>
    %463 = vector.shape_cast %462 : vector<1x16x24xf32> to vector<16x24xf32>
    %464 = vector.extract_strided_slice %3 {offsets = [2, 0], sizes = [1, 24], strides = [1, 1]} : vector<9x24xf32> to vector<1x24xf32>
    %465 = vector.broadcast %464 : vector<1x24xf32> to vector<16x24xf32>
    %466 = arith.mulf %463, %465 : vector<16x24xf32>
    %467 = arith.addf %461, %466 : vector<16x24xf32>
    %c7_240 = arith.constant 7 : index
    %c0_241 = arith.constant 0 : index
    %c0_242 = arith.constant 0 : index
    %468 = vector.load %arg13[%c7_240, %c0_241, %c0_242] : memref<10x18x24xf32, #tpu.memory_space<vmem>>, vector<1x16x24xf32>
    %469 = vector.shape_cast %468 : vector<1x16x24xf32> to vector<16x24xf32>
    %470 = vector.extract_strided_slice %3 {offsets = [3, 0], sizes = [1, 24], strides = [1, 1]} : vector<9x24xf32> to vector<1x24xf32>
    %471 = vector.broadcast %470 : vector<1x24xf32> to vector<16x24xf32>
    %472 = arith.mulf %469, %471 : vector<16x24xf32>
    %473 = arith.addf %467, %472 : vector<16x24xf32>
    %c7_243 = arith.constant 7 : index
    %c1_244 = arith.constant 1 : index
    %c0_245 = arith.constant 0 : index
    %474 = vector.load %arg13[%c7_243, %c1_244, %c0_245] : memref<10x18x24xf32, #tpu.memory_space<vmem>>, vector<1x16x24xf32>
    %475 = vector.shape_cast %474 : vector<1x16x24xf32> to vector<16x24xf32>
    %476 = vector.extract_strided_slice %3 {offsets = [4, 0], sizes = [1, 24], strides = [1, 1]} : vector<9x24xf32> to vector<1x24xf32>
    %477 = vector.broadcast %476 : vector<1x24xf32> to vector<16x24xf32>
    %478 = arith.mulf %475, %477 : vector<16x24xf32>
    %479 = arith.addf %473, %478 : vector<16x24xf32>
    %c7_246 = arith.constant 7 : index
    %c2_247 = arith.constant 2 : index
    %c0_248 = arith.constant 0 : index
    %480 = vector.load %arg13[%c7_246, %c2_247, %c0_248] : memref<10x18x24xf32, #tpu.memory_space<vmem>>, vector<1x16x24xf32>
    %481 = vector.shape_cast %480 : vector<1x16x24xf32> to vector<16x24xf32>
    %482 = vector.extract_strided_slice %3 {offsets = [5, 0], sizes = [1, 24], strides = [1, 1]} : vector<9x24xf32> to vector<1x24xf32>
    %483 = vector.broadcast %482 : vector<1x24xf32> to vector<16x24xf32>
    %484 = arith.mulf %481, %483 : vector<16x24xf32>
    %485 = arith.addf %479, %484 : vector<16x24xf32>
    %c8_249 = arith.constant 8 : index
    %c0_250 = arith.constant 0 : index
    %c0_251 = arith.constant 0 : index
    %486 = vector.load %arg13[%c8_249, %c0_250, %c0_251] : memref<10x18x24xf32, #tpu.memory_space<vmem>>, vector<1x16x24xf32>
    %487 = vector.shape_cast %486 : vector<1x16x24xf32> to vector<16x24xf32>
    %488 = vector.extract_strided_slice %3 {offsets = [6, 0], sizes = [1, 24], strides = [1, 1]} : vector<9x24xf32> to vector<1x24xf32>
    %489 = vector.broadcast %488 : vector<1x24xf32> to vector<16x24xf32>
    %490 = arith.mulf %487, %489 : vector<16x24xf32>
    %491 = arith.addf %485, %490 : vector<16x24xf32>
    %c8_252 = arith.constant 8 : index
    %c1_253 = arith.constant 1 : index
    %c0_254 = arith.constant 0 : index
    %492 = vector.load %arg13[%c8_252, %c1_253, %c0_254] : memref<10x18x24xf32, #tpu.memory_space<vmem>>, vector<1x16x24xf32>
    %493 = vector.shape_cast %492 : vector<1x16x24xf32> to vector<16x24xf32>
    %494 = vector.extract_strided_slice %3 {offsets = [7, 0], sizes = [1, 24], strides = [1, 1]} : vector<9x24xf32> to vector<1x24xf32>
    %495 = vector.broadcast %494 : vector<1x24xf32> to vector<16x24xf32>
    %496 = arith.mulf %493, %495 : vector<16x24xf32>
    %497 = arith.addf %491, %496 : vector<16x24xf32>
    %c8_255 = arith.constant 8 : index
    %c2_256 = arith.constant 2 : index
    %c0_257 = arith.constant 0 : index
    %498 = vector.load %arg13[%c8_255, %c2_256, %c0_257] : memref<10x18x24xf32, #tpu.memory_space<vmem>>, vector<1x16x24xf32>
    %499 = vector.shape_cast %498 : vector<1x16x24xf32> to vector<16x24xf32>
    %500 = vector.extract_strided_slice %3 {offsets = [8, 0], sizes = [1, 24], strides = [1, 1]} : vector<9x24xf32> to vector<1x24xf32>
    %501 = vector.broadcast %500 : vector<1x24xf32> to vector<16x24xf32>
    %502 = arith.mulf %499, %501 : vector<16x24xf32>
    %503 = arith.addf %497, %502 : vector<16x24xf32>
    %504 = vector.broadcast %4 : vector<1x24xf32> to vector<16x24xf32>
    %505 = arith.mulf %503, %504 : vector<16x24xf32>
    %506 = vector.broadcast %5 : vector<1x24xf32> to vector<16x24xf32>
    %507 = arith.addf %505, %506 : vector<16x24xf32>
    %cst_258 = arith.constant 0.000000e+00 : f32
    %cst_259 = arith.constant 6.000000e+00 : f32
    %508 = vector.broadcast %cst_258 : f32 to vector<16x24xf32>
    %509 = arith.maximumf %508, %507 : vector<16x24xf32>
    %510 = vector.broadcast %cst_259 : f32 to vector<16x24xf32>
    %511 = arith.minimumf %510, %509 : vector<16x24xf32>
    %c96 = arith.constant 96 : index
    %c0_260 = arith.constant 0 : index
    %512 = vector.load %arg14[%c96, %c0_260] : memref<128x24xf32, #tpu.memory_space<vmem>>, vector<16x24xf32>
    tpu.vector_store %arg14[%c96, %c0_260], %511 {strides = array<i32>} : memref<128x24xf32, #tpu.memory_space<vmem>>, vector<16x24xf32>,
    %cst_261 = arith.constant 0.000000e+00 : f32
    %513 = vector.broadcast %cst_261 : f32 to vector<16x24xf32>
    %c7_262 = arith.constant 7 : index
    %c0_263 = arith.constant 0 : index
    %c0_264 = arith.constant 0 : index
    %514 = vector.load %arg13[%c7_262, %c0_263, %c0_264] : memref<10x18x24xf32, #tpu.memory_space<vmem>>, vector<1x16x24xf32>
    %515 = vector.shape_cast %514 : vector<1x16x24xf32> to vector<16x24xf32>
    %516 = vector.extract_strided_slice %3 {offsets = [0, 0], sizes = [1, 24], strides = [1, 1]} : vector<9x24xf32> to vector<1x24xf32>
    %517 = vector.broadcast %516 : vector<1x24xf32> to vector<16x24xf32>
    %518 = arith.mulf %515, %517 : vector<16x24xf32>
    %519 = arith.addf %513, %518 : vector<16x24xf32>
    %c7_265 = arith.constant 7 : index
    %c1_266 = arith.constant 1 : index
    %c0_267 = arith.constant 0 : index
    %520 = vector.load %arg13[%c7_265, %c1_266, %c0_267] : memref<10x18x24xf32, #tpu.memory_space<vmem>>, vector<1x16x24xf32>
    %521 = vector.shape_cast %520 : vector<1x16x24xf32> to vector<16x24xf32>
    %522 = vector.extract_strided_slice %3 {offsets = [1, 0], sizes = [1, 24], strides = [1, 1]} : vector<9x24xf32> to vector<1x24xf32>
    %523 = vector.broadcast %522 : vector<1x24xf32> to vector<16x24xf32>
    %524 = arith.mulf %521, %523 : vector<16x24xf32>
    %525 = arith.addf %519, %524 : vector<16x24xf32>
    %c7_268 = arith.constant 7 : index
    %c2_269 = arith.constant 2 : index
    %c0_270 = arith.constant 0 : index
    %526 = vector.load %arg13[%c7_268, %c2_269, %c0_270] : memref<10x18x24xf32, #tpu.memory_space<vmem>>, vector<1x16x24xf32>
    %527 = vector.shape_cast %526 : vector<1x16x24xf32> to vector<16x24xf32>
    %528 = vector.extract_strided_slice %3 {offsets = [2, 0], sizes = [1, 24], strides = [1, 1]} : vector<9x24xf32> to vector<1x24xf32>
    %529 = vector.broadcast %528 : vector<1x24xf32> to vector<16x24xf32>
    %530 = arith.mulf %527, %529 : vector<16x24xf32>
    %531 = arith.addf %525, %530 : vector<16x24xf32>
    %c8_271 = arith.constant 8 : index
    %c0_272 = arith.constant 0 : index
    %c0_273 = arith.constant 0 : index
    %532 = vector.load %arg13[%c8_271, %c0_272, %c0_273] : memref<10x18x24xf32, #tpu.memory_space<vmem>>, vector<1x16x24xf32>
    %533 = vector.shape_cast %532 : vector<1x16x24xf32> to vector<16x24xf32>
    %534 = vector.extract_strided_slice %3 {offsets = [3, 0], sizes = [1, 24], strides = [1, 1]} : vector<9x24xf32> to vector<1x24xf32>
    %535 = vector.broadcast %534 : vector<1x24xf32> to vector<16x24xf32>
    %536 = arith.mulf %533, %535 : vector<16x24xf32>
    %537 = arith.addf %531, %536 : vector<16x24xf32>
    %c8_274 = arith.constant 8 : index
    %c1_275 = arith.constant 1 : index
    %c0_276 = arith.constant 0 : index
    %538 = vector.load %arg13[%c8_274, %c1_275, %c0_276] : memref<10x18x24xf32, #tpu.memory_space<vmem>>, vector<1x16x24xf32>
    %539 = vector.shape_cast %538 : vector<1x16x24xf32> to vector<16x24xf32>
    %540 = vector.extract_strided_slice %3 {offsets = [4, 0], sizes = [1, 24], strides = [1, 1]} : vector<9x24xf32> to vector<1x24xf32>
    %541 = vector.broadcast %540 : vector<1x24xf32> to vector<16x24xf32>
    %542 = arith.mulf %539, %541 : vector<16x24xf32>
    %543 = arith.addf %537, %542 : vector<16x24xf32>
    %c8_277 = arith.constant 8 : index
    %c2_278 = arith.constant 2 : index
    %c0_279 = arith.constant 0 : index
    %544 = vector.load %arg13[%c8_277, %c2_278, %c0_279] : memref<10x18x24xf32, #tpu.memory_space<vmem>>, vector<1x16x24xf32>
    %545 = vector.shape_cast %544 : vector<1x16x24xf32> to vector<16x24xf32>
    %546 = vector.extract_strided_slice %3 {offsets = [5, 0], sizes = [1, 24], strides = [1, 1]} : vector<9x24xf32> to vector<1x24xf32>
    %547 = vector.broadcast %546 : vector<1x24xf32> to vector<16x24xf32>
    %548 = arith.mulf %545, %547 : vector<16x24xf32>
    %549 = arith.addf %543, %548 : vector<16x24xf32>
    %c9 = arith.constant 9 : index
    %c0_280 = arith.constant 0 : index
    %c0_281 = arith.constant 0 : index
    %550 = vector.load %arg13[%c9, %c0_280, %c0_281] : memref<10x18x24xf32, #tpu.memory_space<vmem>>, vector<1x16x24xf32>
    %551 = vector.shape_cast %550 : vector<1x16x24xf32> to vector<16x24xf32>
    %552 = vector.extract_strided_slice %3 {offsets = [6, 0], sizes = [1, 24], strides = [1, 1]} : vector<9x24xf32> to vector<1x24xf32>
    %553 = vector.broadcast %552 : vector<1x24xf32> to vector<16x24xf32>
    %554 = arith.mulf %551, %553 : vector<16x24xf32>
    %555 = arith.addf %549, %554 : vector<16x24xf32>
    %c9_282 = arith.constant 9 : index
    %c1_283 = arith.constant 1 : index
    %c0_284 = arith.constant 0 : index
    %556 = vector.load %arg13[%c9_282, %c1_283, %c0_284] : memref<10x18x24xf32, #tpu.memory_space<vmem>>, vector<1x16x24xf32>
    %557 = vector.shape_cast %556 : vector<1x16x24xf32> to vector<16x24xf32>
    %558 = vector.extract_strided_slice %3 {offsets = [7, 0], sizes = [1, 24], strides = [1, 1]} : vector<9x24xf32> to vector<1x24xf32>
    %559 = vector.broadcast %558 : vector<1x24xf32> to vector<16x24xf32>
    %560 = arith.mulf %557, %559 : vector<16x24xf32>
    %561 = arith.addf %555, %560 : vector<16x24xf32>
    %c9_285 = arith.constant 9 : index
    %c2_286 = arith.constant 2 : index
    %c0_287 = arith.constant 0 : index
    %562 = vector.load %arg13[%c9_285, %c2_286, %c0_287] : memref<10x18x24xf32, #tpu.memory_space<vmem>>, vector<1x16x24xf32>
    %563 = vector.shape_cast %562 : vector<1x16x24xf32> to vector<16x24xf32>
    %564 = vector.extract_strided_slice %3 {offsets = [8, 0], sizes = [1, 24], strides = [1, 1]} : vector<9x24xf32> to vector<1x24xf32>
    %565 = vector.broadcast %564 : vector<1x24xf32> to vector<16x24xf32>
    %566 = arith.mulf %563, %565 : vector<16x24xf32>
    %567 = arith.addf %561, %566 : vector<16x24xf32>
    %568 = vector.broadcast %4 : vector<1x24xf32> to vector<16x24xf32>
    %569 = arith.mulf %567, %568 : vector<16x24xf32>
    %570 = vector.broadcast %5 : vector<1x24xf32> to vector<16x24xf32>
    %571 = arith.addf %569, %570 : vector<16x24xf32>
    %cst_288 = arith.constant 0.000000e+00 : f32
    %cst_289 = arith.constant 6.000000e+00 : f32
    %572 = vector.broadcast %cst_288 : f32 to vector<16x24xf32>
    %573 = arith.maximumf %572, %571 : vector<16x24xf32>
    %574 = vector.broadcast %cst_289 : f32 to vector<16x24xf32>
    %575 = arith.minimumf %574, %573 : vector<16x24xf32>
    %c112 = arith.constant 112 : index
    %c0_290 = arith.constant 0 : index
    %576 = vector.load %arg14[%c112, %c0_290] : memref<128x24xf32, #tpu.memory_space<vmem>>, vector<16x24xf32>
    tpu.vector_store %arg14[%c112, %c0_290], %575 {strides = array<i32>} : memref<128x24xf32, #tpu.memory_space<vmem>>, vector<16x24xf32>,
    %c0_291 = arith.constant 0 : index
    %c0_292 = arith.constant 0 : index
    %577 = vector.load %arg14[%c0_291, %c0_292] : memref<128x24xf32, #tpu.memory_space<vmem>>, vector<128x24xf32>
    %cst_293 = arith.constant dense<0.000000e+00> : vector<128x4xf32>
    %578 = tpu.matmul %577, %6, %cst_293 {dimension_numbers = #tpu.dot_dimension_numbers<[1], [0], [0], [1], [0, 0, 1, 1], [], []>} : vector<128x24xf32>, vector<24x4xf32>, vector<128x4xf32> -> vector<128x4xf32>
    %579 = vector.broadcast %7 : vector<1x4xf32> to vector<128x4xf32>
    %580 = arith.mulf %578, %579 : vector<128x4xf32>
    %581 = vector.broadcast %8 : vector<1x4xf32> to vector<128x4xf32>
    %582 = arith.addf %580, %581 : vector<128x4xf32>
    %c128_i32 = arith.constant 128 : i32
    %583 = arith.muli %arg1, %c128_i32 : i32
    %584 = tpu.assume_multiple %583, 8 : i32
    %585 = arith.index_cast %584 : i32 to index
    %c0_294 = arith.constant 0 : index
    %586 = vector.load %arg2[%585, %c0_294] : memref<256x4xf32, #tpu.memory_space<vmem>>, vector<128x4xf32>
    %587 = arith.addf %582, %586 : vector<128x4xf32>
    %c0_295 = arith.constant 0 : index
    %c0_296 = arith.constant 0 : index
    %588 = vector.load %arg12[%c0_295, %c0_296] : memref<128x4xf32, #tpu.memory_space<vmem>>, vector<128x4xf32>
    tpu.vector_store %arg12[%c0_295, %c0_296], %587 {strides = array<i32>} : memref<128x4xf32, #tpu.memory_space<vmem>>, vector<128x4xf32>,
    return
  }
  func.func @transform_0(%arg0: i32, %arg1: i32) -> (i32, i32) {
    %c0_i32 = arith.constant 0 : i32
    %c0_i32_0 = arith.constant 0 : i32
    return %arg0, %c0_i32 : i32, i32
  }
  func.func @transform_1(%arg0: i32, %arg1: i32) -> (i32, i32) {
    %c0_i32 = arith.constant 0 : i32
    %c0_i32_0 = arith.constant 0 : i32
    %c0_i32_1 = arith.constant 0 : i32
    return %c0_i32, %c0_i32_0 : i32, i32
  }
  func.func @transform_2(%arg0: i32, %arg1: i32) -> (i32, i32) {
    %c0_i32 = arith.constant 0 : i32
    %c0_i32_0 = arith.constant 0 : i32
    %c0_i32_1 = arith.constant 0 : i32
    return %c0_i32, %c0_i32_0 : i32, i32
  }
  func.func @transform_3(%arg0: i32, %arg1: i32) -> (i32, i32) {
    %c0_i32 = arith.constant 0 : i32
    %c0_i32_0 = arith.constant 0 : i32
    %c0_i32_1 = arith.constant 0 : i32
    return %c0_i32, %c0_i32_0 : i32, i32
  }
  func.func @transform_4(%arg0: i32, %arg1: i32) -> (i32, i32) {
    %c0_i32 = arith.constant 0 : i32
    %c0_i32_0 = arith.constant 0 : i32
    %c0_i32_1 = arith.constant 0 : i32
    return %c0_i32, %c0_i32_0 : i32, i32
  }
  func.func @transform_5(%arg0: i32, %arg1: i32) -> (i32, i32) {
    %c0_i32 = arith.constant 0 : i32
    %c0_i32_0 = arith.constant 0 : i32
    %c0_i32_1 = arith.constant 0 : i32
    return %c0_i32, %c0_i32_0 : i32, i32
  }
  func.func @transform_6(%arg0: i32, %arg1: i32) -> (i32, i32) {
    %c0_i32 = arith.constant 0 : i32
    %c0_i32_0 = arith.constant 0 : i32
    %c0_i32_1 = arith.constant 0 : i32
    return %c0_i32, %c0_i32_0 : i32, i32
  }
  func.func @transform_7(%arg0: i32, %arg1: i32) -> (i32, i32) {
    %c0_i32 = arith.constant 0 : i32
    %c0_i32_0 = arith.constant 0 : i32
    %c0_i32_1 = arith.constant 0 : i32
    return %c0_i32, %c0_i32_0 : i32, i32
  }
  func.func @transform_8(%arg0: i32, %arg1: i32) -> (i32, i32) {
    %c0_i32 = arith.constant 0 : i32
    %c0_i32_0 = arith.constant 0 : i32
    %c0_i32_1 = arith.constant 0 : i32
    return %c0_i32, %c0_i32_0 : i32, i32
  }
  func.func @transform_9(%arg0: i32, %arg1: i32) -> (i32, i32) {
    %c0_i32 = arith.constant 0 : i32
    %c0_i32_0 = arith.constant 0 : i32
    %c0_i32_1 = arith.constant 0 : i32
    return %c0_i32, %c0_i32_0 : i32, i32
  }
  func.func @transform_10(%arg0: i32, %arg1: i32) -> (i32, i32) {
    %c2_i32 = arith.constant 2 : i32
    %0 = arith.muli %arg0, %c2_i32 : i32
    %1 = arith.addi %0, %arg1 : i32
    %c0_i32 = arith.constant 0 : i32
    %c0_i32_0 = arith.constant 0 : i32
    return %1, %c0_i32 : i32, i32
  }
}

</mosaic_0001>

<llo_original>
// kernel: tpu_custom_call.1
$region0: #{tpu_custom_call.1}
  #allocation0 [shape = 'u32[]', space=smem, size = 0x4, offset = 0x4, fixed_abs, tag = 'smem constant byte address 0x4 - core index']
  #allocation1 [shape = 'u32[144,128]{1,0:T(1,128)}', space=vmem, size = 0x12000, scoped, tag = 'internal scratch']
  #allocation2 [shape = 'f32[10,18,24]{2,1,0:T(8,128)}', space=vmem, size = 0x1e000, scoped, tag = 'scratch operand']
  #allocation3 [shape = 'f32[128,24]{1,0:T(8,128)}', space=vmem, size = 0x10000, scoped, tag = 'scratch operand']
  %s0 = inlined_call_operand.vmem [shape: f32[512,4], index: 0, kind: input, shape index: {}]
  %s1 = inlined_call_operand.vmem [shape: f32[4,24], index: 1, kind: input, shape index: {}]
  %s2 = inlined_call_operand.vmem [shape: f32[1,24], index: 2, kind: input, shape index: {}]
  %s3 = inlined_call_operand.vmem [shape: f32[1,24], index: 3, kind: input, shape index: {}]
  %s4 = inlined_call_operand.vmem [shape: f32[9,24], index: 4, kind: input, shape index: {}]
  %s5 = inlined_call_operand.vmem [shape: f32[1,24], index: 5, kind: input, shape index: {}]
  %s6 = inlined_call_operand.vmem [shape: f32[1,24], index: 6, kind: input, shape index: {}]
  %s7 = inlined_call_operand.vmem [shape: f32[24,4], index: 7, kind: input, shape index: {}]
  %s8 = inlined_call_operand.vmem [shape: f32[1,4], index: 8, kind: input, shape index: {}]
  %s9 = inlined_call_operand.vmem [shape: f32[1,4], index: 9, kind: input, shape index: {}]
  %s10 = inlined_call_operand.vmem [shape: f32[512,4], index: 10, kind: output, shape index: {}]
  %s11 = sld [smem:[#allocation0]]
  $region81: #{tpu_custom_call.1} parent=0
    _
  %s13 = ssub.s32 1, %s11
  %s14 = scalar_select 0, %s13, %s11
  loop: start=0, step=1, limit=6
  $region2: #{tpu_custom_call.1} parent=0 // loop_pre_header
    _
  $region3: #{tpu_custom_call.1} parent=0 // loop_header
    %s16 = sphi 0, %s20
    %p17 = scmp.ge.s32.totalorder %s16, 6
    %s23 = sphi 0, %s35
    %s24 = sphi 0, %s31
    %s25 = sphi 0, %s23
    %s26 = sphi 0, %s24
    %s27 = sphi 0, %s25
    %s28 = sphi 0, %s26
    %s38 = sphi 0, %s40
    %s41 = sphi 0, %s38
    %s42 = sphi 0, %s41
    %s58 = sphi 0, %s42
    %s62 = sphi 0, %s62
    %s64 = sphi 0, %s62
    %s65 = sphi 0, %s64
    %s79 = sphi 0, %s65
    %s83 = sphi 0, %s83
    %s85 = sphi 0, %s83
    %s86 = sphi 0, %s85
    %s100 = sphi 0, %s86
    %s104 = sphi 0, %s104
    %s106 = sphi 0, %s104
    %s107 = sphi 0, %s106
    %s121 = sphi 0, %s107
    %s125 = sphi 0, %s125
    %s127 = sphi 0, %s125
    %s128 = sphi 0, %s127
    %s142 = sphi 0, %s128
    %s146 = sphi 0, %s146
    %s148 = sphi 0, %s146
    %s149 = sphi 0, %s148
    %s163 = sphi 0, %s149
    %s167 = sphi 0, %s167
    %s169 = sphi 0, %s167
    %s170 = sphi 0, %s169
    %s184 = sphi 0, %s170
    %s188 = sphi 0, %s188
    %s190 = sphi 0, %s188
    %s191 = sphi 0, %s190
    %s205 = sphi 0, %s191
    %s209 = sphi 0, %s209
    %s211 = sphi 0, %s209
    %s212 = sphi 0, %s211
    %s226 = sphi 0, %s212
    %s230 = sphi 0, %s230
    %s232 = sphi 0, %s230
    %s233 = sphi 0, %s232
    %s247 = sphi 0, %s233
    %s257 = sphi 0, %s259
    %s260 = sphi 0, %s257
    %s261 = sphi 0, %s260
    %s277 = sphi 0, %s261
  $region4: #{tpu_custom_call.1} parent=0 // loop_header_branch
    %19 = sbr.rel (%p17) target = $region8
  $region5: #{tpu_custom_call.1} parent=0 // loop_body
    %s21 = ssub.s32 %s16, 1
    %s22 = ssub.s32 %s16, 2
    %s29 = sadd.s32 1, %s24
    %p30 = scmp.ge.s32.totalorder %s29, 2
    %s31 = scalar_select %p30, 0, %s29
    %s32 = sadd.s32 1, %s23
    %s33 = scalar_select %p30, %s32, %s23
    %p34 = scmp.ge.s32.totalorder %s33, 2
    %s35 = scalar_select %p34, 0, %s33
    %s36 = ssub.s32 %s23, %s35
    %p37 = scmp.eq.s32.totalorder %s36, 0
    %s39 = sadd.s32 %s38, 1
    %s40 = scalar_select %p37, %s38, %s39
    %p43 = pneg %p37
    %p44 = scmp.eq.s32.totalorder %s16, 3
    %p45 = por %p43, %p44
    %p46 = scmp.ne.s32.totalorder %s38, %s41
    %p47 = scmp.eq.s32.totalorder %s16, 0
    %p48 = por %p46, %p47
    %p49 = scmp.ne.s32.totalorder %s38, %s41
    %p50 = scmp.eq.s32.totalorder %s21, 3
    %p51 = por %p49, %p50
    %p52 = scmp.ne.s32.totalorder %s41, %s42
    %p53 = scmp.eq.s32.totalorder %s21, 0
    %p54 = por %p52, %p53
    %p55 = scmp.ne.s32.totalorder %s41, %s42
    %p56 = scmp.eq.s32.totalorder %s22, 3
    %p57 = por %p55, %p56
    %p59 = scmp.ne.s32.totalorder %s42, %s58
    %p60 = scmp.eq.s32.totalorder %s22, 0
    %p61 = por %p59, %p60
    %s63 = sadd.s32 %s62, 1
    %p66 = scmp.eq.s32.totalorder %s16, 3
    %p67 = scmp.ne.s32.totalorder %s62, %s64
    %p68 = scmp.eq.s32.totalorder %s16, 0
    %p69 = por %p67, %p68
    %p70 = scmp.ne.s32.totalorder %s62, %s64
    %p71 = scmp.eq.s32.totalorder %s21, 3
    %p72 = por %p70, %p71
    %p73 = scmp.ne.s32.totalorder %s64, %s65
    %p74 = scmp.eq.s32.totalorder %s21, 0
    %p75 = por %p73, %p74
    %p76 = scmp.ne.s32.totalorder %s64, %s65
    %p77 = scmp.eq.s32.totalorder %s22, 3
    %p78 = por %p76, %p77
    %p80 = scmp.ne.s32.totalorder %s65, %s79
    %p81 = scmp.eq.s32.totalorder %s22, 0
    %p82 = por %p80, %p81
    %s84 = sadd.s32 %s83, 1
    %p87 = scmp.eq.s32.totalorder %s16, 3
    %p88 = scmp.ne.s32.totalorder %s83, %s85
    %p89 = scmp.eq.s32.totalorder %s16, 0
    %p90 = por %p88, %p89
    %p91 = scmp.ne.s32.totalorder %s83, %s85
    %p92 = scmp.eq.s32.totalorder %s21, 3
    %p93 = por %p91, %p92
    %p94 = scmp.ne.s32.totalorder %s85, %s86
    %p95 = scmp.eq.s32.totalorder %s21, 0
    %p96 = por %p94, %p95
    %p97 = scmp.ne.s32.totalorder %s85, %s86
    %p98 = scmp.eq.s32.totalorder %s22, 3
    %p99 = por %p97, %p98
    %p101 = scmp.ne.s32.totalorder %s86, %s100
    %p102 = scmp.eq.s32.totalorder %s22, 0
    %p103 = por %p101, %p102
    %s105 = sadd.s32 %s104, 1
    %p108 = scmp.eq.s32.totalorder %s16, 3
    %p109 = scmp.ne.s32.totalorder %s104, %s106
    %p110 = scmp.eq.s32.totalorder %s16, 0
    %p111 = por %p109, %p110
    %p112 = scmp.ne.s32.totalorder %s104, %s106
    %p113 = scmp.eq.s32.totalorder %s21, 3
    %p114 = por %p112, %p113
    %p115 = scmp.ne.s32.totalorder %s106, %s107
    %p116 = scmp.eq.s32.totalorder %s21, 0
    %p117 = por %p115, %p116
    %p118 = scmp.ne.s32.totalorder %s106, %s107
    %p119 = scmp.eq.s32.totalorder %s22, 3
    %p120 = por %p118, %p119
    %p122 = scmp.ne.s32.totalorder %s107, %s121
    %p123 = scmp.eq.s32.totalorder %s22, 0
    %p124 = por %p122, %p123
    %s126 = sadd.s32 %s125, 1
    %p129 = scmp.eq.s32.totalorder %s16, 3
    %p130 = scmp.ne.s32.totalorder %s125, %s127
    %p131 = scmp.eq.s32.totalorder %s16, 0
    %p132 = por %p130, %p131
    %p133 = scmp.ne.s32.totalorder %s125, %s127
    %p134 = scmp.eq.s32.totalorder %s21, 3
    %p135 = por %p133, %p134
    %p136 = scmp.ne.s32.totalorder %s127, %s128
    %p137 = scmp.eq.s32.totalorder %s21, 0
    %p138 = por %p136, %p137
    %p139 = scmp.ne.s32.totalorder %s127, %s128
    %p140 = scmp.eq.s32.totalorder %s22, 3
    %p141 = por %p139, %p140
    %p143 = scmp.ne.s32.totalorder %s128, %s142
    %p144 = scmp.eq.s32.totalorder %s22, 0
    %p145 = por %p143, %p144
    %s147 = sadd.s32 %s146, 1
    %p150 = scmp.eq.s32.totalorder %s16, 3
    %p151 = scmp.ne.s32.totalorder %s146, %s148
    %p152 = scmp.eq.s32.totalorder %s16, 0
    %p153 = por %p151, %p152
    %p154 = scmp.ne.s32.totalorder %s146, %s148
    %p155 = scmp.eq.s32.totalorder %s21, 3
    %p156 = por %p154, %p155
    %p157 = scmp.ne.s32.totalorder %s148, %s149
    %p158 = scmp.eq.s32.totalorder %s21, 0
    %p159 = por %p157, %p158
    %p160 = scmp.ne.s32.totalorder %s148, %s149
    %p161 = scmp.eq.s32.totalorder %s22, 3
    %p162 = por %p160, %p161
    %p164 = scmp.ne.s32.totalorder %s149, %s163
    %p165 = scmp.eq.s32.totalorder %s22, 0
    %p166 = por %p164, %p165
    %s168 = sadd.s32 %s167, 1
    %p171 = scmp.eq.s32.totalorder %s16, 3
    %p172 = scmp.ne.s32.totalorder %s167, %s169
    %p173 = scmp.eq.s32.totalorder %s16, 0
    %p174 = por %p172, %p173
    %p175 = scmp.ne.s32.totalorder %s167, %s169
    %p176 = scmp.eq.s32.totalorder %s21, 3
    %p177 = por %p175, %p176
    %p178 = scmp.ne.s32.totalorder %s169, %s170
    %p179 = scmp.eq.s32.totalorder %s21, 0
    %p180 = por %p178, %p179
    %p181 = scmp.ne.s32.totalorder %s169, %s170
    %p182 = scmp.eq.s32.totalorder %s22, 3
    %p183 = por %p181, %p182
    %p185 = scmp.ne.s32.totalorder %s170, %s184
    %p186 = scmp.eq.s32.totalorder %s22, 0
    %p187 = por %p185, %p186
    %s189 = sadd.s32 %s188, 1
    %p192 = scmp.eq.s32.totalorder %s16, 3
    %p193 = scmp.ne.s32.totalorder %s188, %s190
    %p194 = scmp.eq.s32.totalorder %s16, 0
    %p195 = por %p193, %p194
    %p196 = scmp.ne.s32.totalorder %s188, %s190
    %p197 = scmp.eq.s32.totalorder %s21, 3
    %p198 = por %p196, %p197
    %p199 = scmp.ne.s32.totalorder %s190, %s191
    %p200 = scmp.eq.s32.totalorder %s21, 0
    %p201 = por %p199, %p200
    %p202 = scmp.ne.s32.totalorder %s190, %s191
    %p203 = scmp.eq.s32.totalorder %s22, 3
    %p204 = por %p202, %p203
    %p206 = scmp.ne.s32.totalorder %s191, %s205
    %p207 = scmp.eq.s32.totalorder %s22, 0
    %p208 = por %p206, %p207
    %s210 = sadd.s32 %s209, 1
    %p213 = scmp.eq.s32.totalorder %s16, 3
    %p214 = scmp.ne.s32.totalorder %s209, %s211
    %p215 = scmp.eq.s32.totalorder %s16, 0
    %p216 = por %p214, %p215
    %p217 = scmp.ne.s32.totalorder %s209, %s211
    %p218 = scmp.eq.s32.totalorder %s21, 3
    %p219 = por %p217, %p218
    %p220 = scmp.ne.s32.totalorder %s211, %s212
    %p221 = scmp.eq.s32.totalorder %s21, 0
    %p222 = por %p220, %p221
    %p223 = scmp.ne.s32.totalorder %s211, %s212
    %p224 = scmp.eq.s32.totalorder %s22, 3
    %p225 = por %p223, %p224
    %p227 = scmp.ne.s32.totalorder %s212, %s226
    %p228 = scmp.eq.s32.totalorder %s22, 0
    %p229 = por %p227, %p228
    %s231 = sadd.s32 %s230, 1
    %p234 = scmp.eq.s32.totalorder %s16, 3
    %p235 = scmp.ne.s32.totalorder %s230, %s232
    %p236 = scmp.eq.s32.totalorder %s16, 0
    %p237 = por %p235, %p236
    %p238 = scmp.ne.s32.totalorder %s230, %s232
    %p239 = scmp.eq.s32.totalorder %s21, 3
    %p240 = por %p238, %p239
    %p241 = scmp.ne.s32.totalorder %s232, %s233
    %p242 = scmp.eq.s32.totalorder %s21, 0
    %p243 = por %p241, %p242
    %p244 = scmp.ne.s32.totalorder %s232, %s233
    %p245 = scmp.eq.s32.totalorder %s22, 3
    %p246 = por %p244, %p245
    %p248 = scmp.ne.s32.totalorder %s233, %s247
    %p249 = scmp.eq.s32.totalorder %s22, 0
    %p250 = por %p248, %p249
    %s251 = smul.u32 %s23, 2
    %s252 = sadd.s32 %s251, %s24
    %s253 = smul.u32 %s35, 2
    %s254 = sadd.s32 %s253, %s31
    %s255 = ssub.s32 %s252, %s254
    %p256 = scmp.eq.s32.totalorder %s255, 0
    %s258 = sadd.s32 %s257, 1
    %s259 = scalar_select %p256, %s257, %s258
    %p262 = pneg %p256
    %p263 = scmp.eq.s32.totalorder %s16, 3
    %p264 = por %p262, %p263
    %p265 = scmp.ne.s32.totalorder %s257, %s260
    %p266 = scmp.eq.s32.totalorder %s16, 0
    %p267 = por %p265, %p266
    %p268 = scmp.ne.s32.totalorder %s257, %s260
    %p269 = scmp.eq.s32.totalorder %s21, 3
    %p270 = por %p268, %p269
    %p271 = scmp.ne.s32.totalorder %s260, %s261
    %p272 = scmp.eq.s32.totalorder %s21, 0
    %p273 = por %p271, %p272
    %p274 = scmp.ne.s32.totalorder %s260, %s261
    %p275 = scmp.eq.s32.totalorder %s22, 3
    %p276 = por %p274, %p275
    %p278 = scmp.ne.s32.totalorder %s261, %s277
    %p279 = scmp.eq.s32.totalorder %s22, 0
    %p280 = por %p278, %p279
    %p281 = scmp.le.s32.totalorder 1, %s16
    %p282 = scmp.lt.s32.totalorder %s16, 5
    %p283 = pnand %p281, %p282
    %p284 = pneg %p283
    // Predicated region
    $region9: #{tpu_custom_call.1} parent=5 // pred_check
      _
    $region10: #{tpu_custom_call.1} parent=5 // pred_check_branch
      %286 = sbr.rel (%p283) target = $region12
    $region11: #{tpu_custom_call.1} parent=5 // pred_region
      %s287 = ssub.s32 %s16, 1
      // Predicated region
      $region13: #{tpu_custom_call.1} parent=11 // pred_check
        %p288 = pneg %p75
      $region14: #{tpu_custom_call.1} parent=11 // pred_check_branch
        %290 = sbr.rel (%p288) target = $region16
      $region15: #{tpu_custom_call.1} parent=11 // pred_region
        _
      $region16: #{tpu_custom_call.1} parent=11 // pred_fallthru
        _
      // Predicated region
      $region17: #{tpu_custom_call.1} parent=11 // pred_check
        %p291 = pneg %p96
      $region18: #{tpu_custom_call.1} parent=11 // pred_check_branch
        %293 = sbr.rel (%p291) target = $region20
      $region19: #{tpu_custom_call.1} parent=11 // pred_region
        _
      $region20: #{tpu_custom_call.1} parent=11 // pred_fallthru
        _
      // Predicated region
      $region21: #{tpu_custom_call.1} parent=11 // pred_check
        %p294 = pneg %p117
      $region22: #{tpu_custom_call.1} parent=11 // pred_check_branch
        %296 = sbr.rel (%p294) target = $region24
      $region23: #{tpu_custom_call.1} parent=11 // pred_region
        _
      $region24: #{tpu_custom_call.1} parent=11 // pred_fallthru
        _
      // Predicated region
      $region25: #{tpu_custom_call.1} parent=11 // pred_check
        %p297 = pneg %p138
      $region26: #{tpu_custom_call.1} parent=11 // pred_check_branch
        %299 = sbr.rel (%p297) target = $region28
      $region27: #{tpu_custom_call.1} parent=11 // pred_region
        _
      $region28: #{tpu_custom_call.1} parent=11 // pred_fallthru
        _
      // Predicated region
      $region29: #{tpu_custom_call.1} parent=11 // pred_check
        %p300 = pneg %p159
      $region30: #{tpu_custom_call.1} parent=11 // pred_check_branch
        %302 = sbr.rel (%p300) target = $region32
      $region31: #{tpu_custom_call.1} parent=11 // pred_region
        _
      $region32: #{tpu_custom_call.1} parent=11 // pred_fallthru
        _
      // Predicated region
      $region33: #{tpu_custom_call.1} parent=11 // pred_check
        %p303 = pneg %p180
      $region34: #{tpu_custom_call.1} parent=11 // pred_check_branch
        %305 = sbr.rel (%p303) target = $region36
      $region35: #{tpu_custom_call.1} parent=11 // pred_region
        _
      $region36: #{tpu_custom_call.1} parent=11 // pred_fallthru
        _
      // Predicated region
      $region37: #{tpu_custom_call.1} parent=11 // pred_check
        %p306 = pneg %p201
      $region38: #{tpu_custom_call.1} parent=11 // pred_check_branch
        %308 = sbr.rel (%p306) target = $region40
      $region39: #{tpu_custom_call.1} parent=11 // pred_region
        _
      $region40: #{tpu_custom_call.1} parent=11 // pred_fallthru
        _
      // Predicated region
      $region41: #{tpu_custom_call.1} parent=11 // pred_check
        %p309 = pneg %p222
      $region42: #{tpu_custom_call.1} parent=11 // pred_check_branch
        %311 = sbr.rel (%p309) target = $region44
      $region43: #{tpu_custom_call.1} parent=11 // pred_region
        _
      $region44: #{tpu_custom_call.1} parent=11 // pred_fallthru
        _
      // Predicated region
      $region45: #{tpu_custom_call.1} parent=11 // pred_check
        %p312 = pneg %p243
      $region46: #{tpu_custom_call.1} parent=11 // pred_check_branch
        %314 = sbr.rel (%p312) target = $region48
      $region47: #{tpu_custom_call.1} parent=11 // pred_region
        _
      $region48: #{tpu_custom_call.1} parent=11 // pred_fallthru
        _
    $region12: #{tpu_custom_call.1} parent=5 // pred_fallthru
      _
    %p315 = scmp.lt.s32.totalorder %s16, 4
    // Predicated region
    $region49: #{tpu_custom_call.1} parent=5 // pred_check
      %p316 = pneg %p315
    $region50: #{tpu_custom_call.1} parent=5 // pred_check_branch
      %318 = sbr.rel (%p316) target = $region52
    $region51: #{tpu_custom_call.1} parent=5 // pred_region
      // Predicated region
      $region53: #{tpu_custom_call.1} parent=51 // pred_check
        %p319 = pneg %p48
      $region54: #{tpu_custom_call.1} parent=51 // pred_check_branch
        %321 = sbr.rel (%p319) target = $region56
      $region55: #{tpu_custom_call.1} parent=51 // pred_region
        %s322 = smul.u32 32, %s23
        %p323 = scmp.lt.s32.totalorder %s322, 63
        %s324 = scalar_select %p323, %s322, 63
        %s325 = smul.addr %s324, 8
        %s326 = scalar_lea.vmem %s0, %s325
        %s327 = smul.u32 32, %s23
      $region56: #{tpu_custom_call.1} parent=51 // pred_fallthru
        _
    $region52: #{tpu_custom_call.1} parent=5 // pred_fallthru
      _
    %p328 = scmp.le.s32.totalorder 1, %s16
    %p329 = scmp.lt.s32.totalorder %s16, 5
    %p330 = pnand %p328, %p329
    %p331 = pneg %p330
    // Predicated region
    $region57: #{tpu_custom_call.1} parent=5 // pred_check
      _
    $region58: #{tpu_custom_call.1} parent=5 // pred_check_branch
      %333 = sbr.rel (%p330) target = $region60
    $region59: #{tpu_custom_call.1} parent=5 // pred_region
      %s334 = ssub.s32 %s16, 1
      %s335 = smul.u32 32, %s25
      %p336 = scmp.lt.s32.totalorder %s335, 63
      %s337 = scalar_select %p336, %s335, 63
      %s338 = smul.addr %s337, 8
      %s339 = scalar_lea.vmem %s0, %s338
      %p340 = pneg %p54
      %p341 = pneg %p51
      %p342 = pneg %p75
      %p343 = pneg %p72
      %p344 = pneg %p96
      %p345 = pneg %p93
      %p346 = pneg %p117
      %p347 = pneg %p114
      %p348 = pneg %p138
      %p349 = pneg %p135
      %p350 = pneg %p159
      %p351 = pneg %p156
      %p352 = pneg %p180
      %p353 = pneg %p177
      %p354 = pneg %p201
      %p355 = pneg %p198
      %p356 = pneg %p222
      %p357 = pneg %p219
      %p358 = pneg %p243
      %p359 = pneg %p240
      %p360 = pneg %p273
      %p361 = pneg %p270
      %s362 = smul.u32 %s25, 2
      %s363 = sadd.s32 %s362, %s26
      %s364 = smul.u32 16, %s363
      %p365 = scmp.lt.s32.totalorder %s364, 63
      %s366 = scalar_select %p365, %s364, 63
      %s367 = smul.addr %s366, 8
      %s368 = scalar_lea.vmem %s10, %s367
      %s369 = smul.u32 32, %s25
      %p370 = scmp.lt.s32.totalorder %s369, 63
      %s371 = scalar_select %p370, %s369, 63
      %s372 = smul.addr %s371, 8
      %s373 = scalar_lea.vmem %s0, %s372
      %s374 = smul.u32 32, %s25
      %s375 = smul.u32 %s25, 2
      %s376 = sadd.s32 %s375, %s26
      %s377 = smul.u32 16, %s376
      %p378 = scmp.lt.s32.totalorder %s377, 63
      %s379 = scalar_select %p378, %s377, 63
      %s380 = smul.addr %s379, 8
      %s381 = scalar_lea.vmem %s10, %s380
      %s382 = smul.u32 %s25, 2
      %s383 = sadd.s32 %s382, %s26
      %s384 = smul.u32 16, %s383
      %v385 = vld [vmem:[%s1] sm:$0xf]
      %v386 = vld [vmem:[%s2] sm:$0x1]
      %v387 = vld [vmem:[%s3] sm:$0x1]
      %v388 = vld [vmem:[%s4] sm:$0xff]
      %v389 = vld [vmem:[%s4 + $0x8] sm:$0x1]
      %v390 = vld [vmem:[%s5] sm:$0x1]
      %v391 = vld [vmem:[%s6] sm:$0x1]
      %v392 = vld [vmem:[%s7] sm:$0xff]
      %v393 = vld [vmem:[%s7 + $0x8] sm:$0xff]
      %v394 = vld [vmem:[%s7 + $0x10] sm:$0xff]
      %v395 = vld [vmem:[%s8] sm:$0x1]
      %v396 = vld [vmem:[%s9] sm:$0x1]
      %vm397 = vcmask 195584
      %398 = vst.msk [vmem:[#allocation2] sm:$0xff] %vm397, 0.0
      %399 = vst.msk [vmem:[#allocation2 + $0x8] sm:$0xff] %vm397, 0.0
      %vm400 = vcmask 189440
      %401 = vst.msk [vmem:[#allocation2 + $0x10] sm:$0x3] %vm400, 0.0
      %402 = vst.msk [vmem:[#allocation2 + $0x18] sm:$0xff] %vm397, 0.0
      %403 = vst.msk [vmem:[#allocation2 + $0x20] sm:$0xff] %vm397, 0.0
      %404 = vst.msk [vmem:[#allocation2 + $0x28] sm:$0x3] %vm400, 0.0
      %405 = vst.msk [vmem:[#allocation2 + $0x30] sm:$0xff] %vm397, 0.0
      %406 = vst.msk [vmem:[#allocation2 + $0x38] sm:$0xff] %vm397, 0.0
      %407 = vst.msk [vmem:[#allocation2 + $0x40] sm:$0x3] %vm400, 0.0
      %408 = vst.msk [vmem:[#allocation2 + $0x48] sm:$0xff] %vm397, 0.0
      %409 = vst.msk [vmem:[#allocation2 + $0x50] sm:$0xff] %vm397, 0.0
      %410 = vst.msk [vmem:[#allocation2 + $0x58] sm:$0x3] %vm400, 0.0
      %411 = vst.msk [vmem:[#allocation2 + $0x60] sm:$0xff] %vm397, 0.0
      %412 = vst.msk [vmem:[#allocation2 + $0x68] sm:$0xff] %vm397, 0.0
      %413 = vst.msk [vmem:[#allocation2 + $0x70] sm:$0x3] %vm400, 0.0
      %414 = vst.msk [vmem:[#allocation2 + $0x78] sm:$0xff] %vm397, 0.0
      %415 = vst.msk [vmem:[#allocation2 + $0x80] sm:$0xff] %vm397, 0.0
      %416 = vst.msk [vmem:[#allocation2 + $0x88] sm:$0x3] %vm400, 0.0
      %417 = vst.msk [vmem:[#allocation2 + $0x90] sm:$0xff] %vm397, 0.0
      %418 = vst.msk [vmem:[#allocation2 + $0x98] sm:$0xff] %vm397, 0.0
      %419 = vst.msk [vmem:[#allocation2 + $0xa0] sm:$0x3] %vm400, 0.0
      %420 = vst.msk [vmem:[#allocation2 + $0xa8] sm:$0xff] %vm397, 0.0
      %421 = vst.msk [vmem:[#allocation2 + $0xb0] sm:$0xff] %vm397, 0.0
      %422 = vst.msk [vmem:[#allocation2 + $0xb8] sm:$0x3] %vm400, 0.0
      %423 = vst.msk [vmem:[#allocation2 + $0xc0] sm:$0xff] %vm397, 0.0
      %424 = vst.msk [vmem:[#allocation2 + $0xc8] sm:$0xff] %vm397, 0.0
      %425 = vst.msk [vmem:[#allocation2 + $0xd0] sm:$0x3] %vm400, 0.0
      %426 = vst.msk [vmem:[#allocation2 + $0xd8] sm:$0xff] %vm397, 0.0
      %427 = vst.msk [vmem:[#allocation2 + $0xe0] sm:$0xff] %vm397, 0.0
      %428 = vst.msk [vmem:[#allocation2 + $0xe8] sm:$0x3] %vm400, 0.0
      %s429 = smul.u32 %s26, 8
      %s430 = smul.u32 %s26, 128
      %s431 = scalar_lea.vmem %s373, %s430
      %v432 = vld [vmem:[%s431] sm:$0xff]
      %v433 = vld [vmem:[%s431 + $0x8] sm:$0xff]
      %v434 = vld [vmem:[%s431 + $0x10] sm:$0xff]
      %v435 = vld [vmem:[%s431 + $0x18] sm:$0xff]
      %v436 = vld [vmem:[%s431 + $0x20] sm:$0xff]
      %v437 = vld [vmem:[%s431 + $0x28] sm:$0xff]
      %v438 = vld [vmem:[%s431 + $0x30] sm:$0xff]
      %v439 = vld [vmem:[%s431 + $0x38] sm:$0xff]
      %v440 = vld [vmem:[%s431 + $0x40] sm:$0xff]
      %v441 = vld [vmem:[%s431 + $0x48] sm:$0xff]
      %v442 = vld [vmem:[%s431 + $0x50] sm:$0xff]
      %v443 = vld [vmem:[%s431 + $0x58] sm:$0xff]
      %v444 = vld [vmem:[%s431 + $0x60] sm:$0xff]
      %v445 = vld [vmem:[%s431 + $0x68] sm:$0xff]
      %v446 = vld [vmem:[%s431 + $0x70] sm:$0xff]
      %v447 = vld [vmem:[%s431 + $0x78] sm:$0xff]
      %vm448 = vcmask 31744
      %v450 = vsel %vm448, %v432, 0
      %v453 = vsel %vm448, %v433, 0
      %v456 = vsel %vm448, %v434, 0
      %v459 = vsel %vm448, %v435, 0
      %v462 = vsel %vm448, %v436, 0
      %v465 = vsel %vm448, %v437, 0
      %v468 = vsel %vm448, %v438, 0
      %v471 = vsel %vm448, %v439, 0
      %v474 = vsel %vm448, %v440, 0
      %v477 = vsel %vm448, %v441, 0
      %v480 = vsel %vm448, %v442, 0
      %v483 = vsel %vm448, %v443, 0
      %v486 = vsel %vm448, %v444, 0
      %v489 = vsel %vm448, %v445, 0
      %v492 = vsel %vm448, %v446, 0
      %v495 = vsel %vm448, %v447, 0
      %vm497 = vcmask 1043456
      %v499 = vsel %vm497, %v385, 0
      %501 = vmatprep.subr.mxu0 0.0
      %502 = vmatpush1.msra.mxu0 %v499
      %503 = vmatprep.subr.mxu0 0.0
      %504 = vmatpush1.msra.mxu0 0.0
      %505 = vmatprep.subr.mxu0 0.0
      %506 = vmatpush1.msra.mxu0 0.0
      %507 = vmatprep.subr.mxu0 0.0
      %508 = vmatpush1.msra.mxu0 0.0
      %509 = vmatprep.subr.mxu0 0.0
      %510 = vmatpush1.msra.mxu0 0.0
      %511 = vmatprep.subr.mxu0 0.0
      %512 = vmatpush1.msra.mxu0 0.0
      %513 = vmatprep.subr.mxu0 0.0
      %514 = vmatpush1.msra.mxu0 0.0
      %515 = vmatprep.subr.mxu0 0.0
      %516 = vmatpush1.msra.mxu0 0.0
      %517 = vmatprep.subr.mxu0 0.0
      %518 = vmatpush1.msra.mxu0 0.0
      %519 = vmatprep.subr.mxu0 0.0
      %520 = vmatpush1.msra.mxu0 0.0
      %521 = vmatprep.subr.mxu0 0.0
      %522 = vmatpush1.msra.mxu0 0.0
      %523 = vmatprep.subr.mxu0 0.0
      %524 = vmatpush1.msra.mxu0 0.0
      %525 = vmatprep.subr.mxu0 0.0
      %526 = vmatpush1.msra.mxu0 0.0
      %527 = vmatprep.subr.mxu0 0.0
      %528 = vmatpush1.msra.mxu0 0.0
      %529 = vmatprep.subr.mxu0 0.0
      %530 = vmatpush1.msra.mxu0 0.0
      %531 = vmatprep.subr.mxu0 0.0
      %532 = vmatpush1.msra.mxu0 0.0
      %533 = vmatprep.subr.mxu0 0.0
      %534 = vmatpush1.msra.mxu0 0.0
      %535 = vmatprep.subr.mxu0 0.0
      %536 = vmatpush1.msra.mxu0 0.0
      %537 = vmatprep.subr.mxu0 0.0
      %538 = vmatpush1.msra.mxu0 0.0
      %539 = vmatprep.subr.mxu0 0.0
      %540 = vmatpush1.msra.mxu0 0.0
      %541 = vmatprep.subr.mxu0 0.0
      %542 = vmatpush1.msra.mxu0 0.0
      %543 = vmatprep.subr.mxu0 0.0
      %544 = vmatpush1.msra.mxu0 0.0
      %545 = vmatprep.subr.mxu0 0.0
      %546 = vmatpush1.msra.mxu0 0.0
      %547 = vmatprep.subr.mxu0 0.0
      %548 = vmatpush1.msra.mxu0 0.0
      %549 = vmatprep.subr.mxu0 0.0
      %550 = vmatpush1.msra.mxu0 0.0
      %551 = vmatprep.subr.mxu0 0.0
      %552 = vmatpush1.msra.mxu0 0.0
      %553 = vmatprep.subr.mxu0 0.0
      %554 = vmatpush1.msra.mxu0 0.0
      %555 = vmatprep.subr.mxu0 0.0
      %556 = vmatpush1.msra.mxu0 0.0
      %557 = vmatprep.subr.mxu0 0.0
      %558 = vmatpush1.msra.mxu0 0.0
      %559 = vmatprep.subr.mxu0 0.0
      %560 = vmatpush1.msra.mxu0 0.0
      %561 = vmatprep.subr.mxu0 0.0
      %562 = vmatpush1.msra.mxu0 0.0
      %563 = vmatprep.subr.mxu0 0.0
      %564 = vmatpush1.msra.mxu0 0.0
      %565 = vmatprep.mubr.f32.mxu0 0.0
      %566 = vmatmul.mubr.f32.gmra.mrb[0].mxu0 %v450
      %v567 = vpop.f32.mrb[0].mxu0
      %v568 = vadd.f32 0.0, %v567
      %v569 = vpop.f32.mrb[0].mxu0
      %570 = vmatprep.mubr.f32.mxu0 0.0
      %571 = vmatmul.mubr.f32.gmra.mrb[0].mxu0 %v453
      %v572 = vpop.f32.mrb[0].mxu0
      %v573 = vadd.f32 0.0, %v572
      %v574 = vpop.f32.mrb[0].mxu0
      %575 = vmatprep.mubr.f32.mxu0 0.0
      %576 = vmatmul.mubr.f32.gmra.mrb[0].mxu0 %v456
      %v577 = vpop.f32.mrb[0].mxu0
      %v578 = vadd.f32 0.0, %v577
      %v579 = vpop.f32.mrb[0].mxu0
      %580 = vmatprep.mubr.f32.mxu0 0.0
      %581 = vmatmul.mubr.f32.gmra.mrb[0].mxu0 %v459
      %v582 = vpop.f32.mrb[0].mxu0
      %v583 = vadd.f32 0.0, %v582
      %v584 = vpop.f32.mrb[0].mxu0
      %585 = vmatprep.mubr.f32.mxu0 0.0
      %586 = vmatmul.mubr.f32.gmra.mrb[0].mxu0 %v462
      %v587 = vpop.f32.mrb[0].mxu0
      %v588 = vadd.f32 0.0, %v587
      %v589 = vpop.f32.mrb[0].mxu0
      %590 = vmatprep.mubr.f32.mxu0 0.0
      %591 = vmatmul.mubr.f32.gmra.mrb[0].mxu0 %v465
      %v592 = vpop.f32.mrb[0].mxu0
      %v593 = vadd.f32 0.0, %v592
      %v594 = vpop.f32.mrb[0].mxu0
      %595 = vmatprep.mubr.f32.mxu0 0.0
      %596 = vmatmul.mubr.f32.gmra.mrb[0].mxu0 %v468
      %v597 = vpop.f32.mrb[0].mxu0
      %v598 = vadd.f32 0.0, %v597
      %v599 = vpop.f32.mrb[0].mxu0
      %600 = vmatprep.mubr.f32.mxu0 0.0
      %601 = vmatmul.mubr.f32.gmra.mrb[0].mxu0 %v471
      %v602 = vpop.f32.mrb[0].mxu0
      %v603 = vadd.f32 0.0, %v602
      %v604 = vpop.f32.mrb[0].mxu0
      %605 = vmatprep.mubr.f32.mxu0 0.0
      %606 = vmatmul.mubr.f32.gmra.mrb[0].mxu0 %v474
      %v607 = vpop.f32.mrb[0].mxu0
      %v608 = vadd.f32 0.0, %v607
      %v609 = vpop.f32.mrb[0].mxu0
      %610 = vmatprep.mubr.f32.mxu0 0.0
      %611 = vmatmul.mubr.f32.gmra.mrb[0].mxu0 %v477
      %v612 = vpop.f32.mrb[0].mxu0
      %v613 = vadd.f32 0.0, %v612
      %v614 = vpop.f32.mrb[0].mxu0
      %615 = vmatprep.mubr.f32.mxu0 0.0
      %616 = vmatmul.mubr.f32.gmra.mrb[0].mxu0 %v480
      %v617 = vpop.f32.mrb[0].mxu0
      %v618 = vadd.f32 0.0, %v617
      %v619 = vpop.f32.mrb[0].mxu0
      %620 = vmatprep.mubr.f32.mxu0 0.0
      %621 = vmatmul.mubr.f32.gmra.mrb[0].mxu0 %v483
      %v622 = vpop.f32.mrb[0].mxu0
      %v623 = vadd.f32 0.0, %v622
      %v624 = vpop.f32.mrb[0].mxu0
      %625 = vmatprep.mubr.f32.mxu0 0.0
      %626 = vmatmul.mubr.f32.gmra.mrb[0].mxu0 %v486
      %v627 = vpop.f32.mrb[0].mxu0
      %v628 = vadd.f32 0.0, %v627
      %v629 = vpop.f32.mrb[0].mxu0
      %630 = vmatprep.mubr.f32.mxu0 0.0
      %631 = vmatmul.mubr.f32.gmra.mrb[0].mxu0 %v489
      %v632 = vpop.f32.mrb[0].mxu0
      %v633 = vadd.f32 0.0, %v632
      %v634 = vpop.f32.mrb[0].mxu0
      %635 = vmatprep.mubr.f32.mxu0 0.0
      %636 = vmatmul.mubr.f32.gmra.mrb[0].mxu0 %v492
      %v637 = vpop.f32.mrb[0].mxu0
      %v638 = vadd.f32 0.0, %v637
      %v639 = vpop.f32.mrb[0].mxu0
      %640 = vmatprep.mubr.f32.mxu0 0.0
      %641 = vmatmul.mubr.f32.gmra.mrb[0].mxu0 %v495
      %v642 = vpop.f32.mrb[0].mxu0
      %v643 = vadd.f32 0.0, %v642
      %v644 = vpop.f32.mrb[0].mxu0
      %645 = vdwg.mxu0
      %v647 = vlaneseq
      %v648 = vshrl.u32 %v647, 7
      %v649 = vsub.s32 0, %v648
      %v650 = vrot.slane %v386, %v649
      %v652 = vmul.f32 %v568, %v650
      %v653 = vmul.f32 %v573, %v650
      %v654 = vmul.f32 %v578, %v650
      %v655 = vmul.f32 %v583, %v650
      %v656 = vmul.f32 %v588, %v650
      %v657 = vmul.f32 %v593, %v650
      %v658 = vmul.f32 %v598, %v650
      %v659 = vmul.f32 %v603, %v650
      %v660 = vmul.f32 %v608, %v650
      %v661 = vmul.f32 %v613, %v650
      %v662 = vmul.f32 %v618, %v650
      %v663 = vmul.f32 %v623, %v650
      %v664 = vmul.f32 %v628, %v650
      %v665 = vmul.f32 %v633, %v650
      %v666 = vmul.f32 %v638, %v650
      %v667 = vmul.f32 %v643, %v650
      %v669 = vlaneseq
      %v670 = vshrl.u32 %v669, 7
      %v671 = vsub.s32 0, %v670
      %v672 = vrot.slane %v387, %v671
      %v674 = vadd.f32 %v652, %v672
      %v675 = vadd.f32 %v653, %v672
      %v676 = vadd.f32 %v654, %v672
      %v677 = vadd.f32 %v655, %v672
      %v678 = vadd.f32 %v656, %v672
      %v679 = vadd.f32 %v657, %v672
      %v680 = vadd.f32 %v658, %v672
      %v681 = vadd.f32 %v659, %v672
      %v682 = vadd.f32 %v660, %v672
      %v683 = vadd.f32 %v661, %v672
      %v684 = vadd.f32 %v662, %v672
      %v685 = vadd.f32 %v663, %v672
      %v686 = vadd.f32 %v664, %v672
      %v687 = vadd.f32 %v665, %v672
      %v688 = vadd.f32 %v666, %v672
      %v689 = vadd.f32 %v667, %v672
      %v690 = vmax.f32 %v674, 0.0
      %v691 = vmax.f32 %v675, 0.0
      %v692 = vmax.f32 %v676, 0.0
      %v693 = vmax.f32 %v677, 0.0
      %v694 = vmax.f32 %v678, 0.0
      %v695 = vmax.f32 %v679, 0.0
      %v696 = vmax.f32 %v680, 0.0
      %v697 = vmax.f32 %v681, 0.0
      %v698 = vmax.f32 %v682, 0.0
      %v699 = vmax.f32 %v683, 0.0
      %v700 = vmax.f32 %v684, 0.0
      %v701 = vmax.f32 %v685, 0.0
      %v702 = vmax.f32 %v686, 0.0
      %v703 = vmax.f32 %v687, 0.0
      %v704 = vmax.f32 %v688, 0.0
      %v705 = vmax.f32 %v689, 0.0
      %v706 = vmin.f32 %v690, 6.0
      %v707 = vmin.f32 %v691, 6.0
      %v708 = vmin.f32 %v692, 6.0
      %v709 = vmin.f32 %v693, 6.0
      %v710 = vmin.f32 %v694, 6.0
      %v711 = vmin.f32 %v695, 6.0
      %v712 = vmin.f32 %v696, 6.0
      %v713 = vmin.f32 %v697, 6.0
      %v714 = vmin.f32 %v698, 6.0
      %v715 = vmin.f32 %v699, 6.0
      %v716 = vmin.f32 %v700, 6.0
      %v717 = vmin.f32 %v701, 6.0
      %v718 = vmin.f32 %v702, 6.0
      %v719 = vmin.f32 %v703, 6.0
      %v720 = vmin.f32 %v704, 6.0
      %v721 = vmin.f32 %v705, 6.0
      %s722 = scalar_lea.vmem [#allocation2], 24
      %723 = vst.msk [vmem:[%s722 + $0x1] sm:$0xff] %vm397, %v706
      %724 = vst.msk [vmem:[%s722 + $0x9] sm:$0xff] %vm397, %v707
      %s725 = scalar_lea.vmem [#allocation2], 48
      %726 = vst.msk [vmem:[%s725 + $0x1] sm:$0xff] %vm397, %v708
      %727 = vst.msk [vmem:[%s725 + $0x9] sm:$0xff] %vm397, %v709
      %s728 = scalar_lea.vmem [#allocation2], 72
      %729 = vst.msk [vmem:[%s728 + $0x1] sm:$0xff] %vm397, %v710
      %730 = vst.msk [vmem:[%s728 + $0x9] sm:$0xff] %vm397, %v711
      %s731 = scalar_lea.vmem [#allocation2], 96
      %732 = vst.msk [vmem:[%s731 + $0x1] sm:$0xff] %vm397, %v712
      %733 = vst.msk [vmem:[%s731 + $0x9] sm:$0xff] %vm397, %v713
      %s734 = scalar_lea.vmem [#allocation2], 120
      %735 = vst.msk [vmem:[%s734 + $0x1] sm:$0xff] %vm397, %v714
      %736 = vst.msk [vmem:[%s734 + $0x9] sm:$0xff] %vm397, %v715
      %s737 = scalar_lea.vmem [#allocation2], 144
      %738 = vst.msk [vmem:[%s737 + $0x1] sm:$0xff] %vm397, %v716
      %739 = vst.msk [vmem:[%s737 + $0x9] sm:$0xff] %vm397, %v717
      %s740 = scalar_lea.vmem [#allocation2], 168
      %741 = vst.msk [vmem:[%s740 + $0x1] sm:$0xff] %vm397, %v718
      %742 = vst.msk [vmem:[%s740 + $0x9] sm:$0xff] %vm397, %v719
      %s743 = scalar_lea.vmem [#allocation2], 192
      %744 = vst.msk [vmem:[%s743 + $0x1] sm:$0xff] %vm397, %v720
      %745 = vst.msk [vmem:[%s743 + $0x9] sm:$0xff] %vm397, %v721
      %p746 = scmp.gt.s32.totalorder %s26, 0
      // Predicated region
      $region61: #{tpu_custom_call.1} parent=59 // pred_check
        %p747 = pneg %p746
      $region62: #{tpu_custom_call.1} parent=59 // pred_check_branch
        %749 = sbr.rel (%p747) target = $region64
      $region63: #{tpu_custom_call.1} parent=59 // pred_region
        %s750 = ssub.s32 %s429, 1
        %s751 = smul.u32 %s750, 16
        %s752 = scalar_lea.vmem %s373, %s751
        %v753 = vld [vmem:[%s752] sm:$0xff]
        %v754 = vld [vmem:[%s752 + $0x8] sm:$0xff]
        %v756 = vsel %vm448, %v753, 0
        %v759 = vsel %vm448, %v754, 0
        %761 = vmatprep.subr.mxu0 0.0
        %762 = vmatpush1.msra.mxu0 %v499
        %763 = vmatprep.subr.mxu0 0.0
        %764 = vmatpush1.msra.mxu0 0.0
        %765 = vmatprep.subr.mxu0 0.0
        %766 = vmatpush1.msra.mxu0 0.0
        %767 = vmatprep.subr.mxu0 0.0
        %768 = vmatpush1.msra.mxu0 0.0
        %769 = vmatprep.subr.mxu0 0.0
        %770 = vmatpush1.msra.mxu0 0.0
        %771 = vmatprep.subr.mxu0 0.0
        %772 = vmatpush1.msra.mxu0 0.0
        %773 = vmatprep.subr.mxu0 0.0
        %774 = vmatpush1.msra.mxu0 0.0
        %775 = vmatprep.subr.mxu0 0.0
        %776 = vmatpush1.msra.mxu0 0.0
        %777 = vmatprep.subr.mxu0 0.0
        %778 = vmatpush1.msra.mxu0 0.0
        %779 = vmatprep.subr.mxu0 0.0
        %780 = vmatpush1.msra.mxu0 0.0
        %781 = vmatprep.subr.mxu0 0.0
        %782 = vmatpush1.msra.mxu0 0.0
        %783 = vmatprep.subr.mxu0 0.0
        %784 = vmatpush1.msra.mxu0 0.0
        %785 = vmatprep.subr.mxu0 0.0
        %786 = vmatpush1.msra.mxu0 0.0
        %787 = vmatprep.subr.mxu0 0.0
        %788 = vmatpush1.msra.mxu0 0.0
        %789 = vmatprep.subr.mxu0 0.0
        %790 = vmatpush1.msra.mxu0 0.0
        %791 = vmatprep.subr.mxu0 0.0
        %792 = vmatpush1.msra.mxu0 0.0
        %793 = vmatprep.subr.mxu0 0.0
        %794 = vmatpush1.msra.mxu0 0.0
        %795 = vmatprep.subr.mxu0 0.0
        %796 = vmatpush1.msra.mxu0 0.0
        %797 = vmatprep.subr.mxu0 0.0
        %798 = vmatpush1.msra.mxu0 0.0
        %799 = vmatprep.subr.mxu0 0.0
        %800 = vmatpush1.msra.mxu0 0.0
        %801 = vmatprep.subr.mxu0 0.0
        %802 = vmatpush1.msra.mxu0 0.0
        %803 = vmatprep.subr.mxu0 0.0
        %804 = vmatpush1.msra.mxu0 0.0
        %805 = vmatprep.subr.mxu0 0.0
        %806 = vmatpush1.msra.mxu0 0.0
        %807 = vmatprep.subr.mxu0 0.0
        %808 = vmatpush1.msra.mxu0 0.0
        %809 = vmatprep.subr.mxu0 0.0
        %810 = vmatpush1.msra.mxu0 0.0
        %811 = vmatprep.subr.mxu0 0.0
        %812 = vmatpush1.msra.mxu0 0.0
        %813 = vmatprep.subr.mxu0 0.0
        %814 = vmatpush1.msra.mxu0 0.0
        %815 = vmatprep.subr.mxu0 0.0
        %816 = vmatpush1.msra.mxu0 0.0
        %817 = vmatprep.subr.mxu0 0.0
        %818 = vmatpush1.msra.mxu0 0.0
        %819 = vmatprep.subr.mxu0 0.0
        %820 = vmatpush1.msra.mxu0 0.0
        %821 = vmatprep.subr.mxu0 0.0
        %822 = vmatpush1.msra.mxu0 0.0
        %823 = vmatprep.subr.mxu0 0.0
        %824 = vmatpush1.msra.mxu0 0.0
        %825 = vmatprep.mubr.f32.mxu0 0.0
        %826 = vmatmul.mubr.f32.gmra.mrb[0].mxu0 %v756
        %v827 = vpop.f32.mrb[0].mxu0
        %v828 = vadd.f32 0.0, %v827
        %v829 = vpop.f32.mrb[0].mxu0
        %830 = vmatprep.mubr.f32.mxu0 0.0
        %831 = vmatmul.mubr.f32.gmra.mrb[0].mxu0 %v759
        %v832 = vpop.f32.mrb[0].mxu0
        %v833 = vadd.f32 0.0, %v832
        %v834 = vpop.f32.mrb[0].mxu0
        %835 = vdwg.mxu0
        %v836 = vmul.f32 %v828, %v650
        %v837 = vmul.f32 %v833, %v650
        %v838 = vadd.f32 %v836, %v672
        %v839 = vadd.f32 %v837, %v672
        %v840 = vmax.f32 %v838, 0.0
        %v841 = vmax.f32 %v839, 0.0
        %v842 = vmin.f32 %v840, 6.0
        %v843 = vmin.f32 %v841, 6.0
        %844 = vst.msk [vmem:[#allocation2 + $0x1] sm:$0xff] %vm397, %v842
        %845 = vst.msk [vmem:[#allocation2 + $0x9] sm:$0xff] %vm397, %v843
      $region64: #{tpu_custom_call.1} parent=59 // pred_fallthru
        _
      %s846 = sadd.s32 %s429, 8
      %p847 = scmp.lt.s32.totalorder %s846, 16
      // Predicated region
      $region65: #{tpu_custom_call.1} parent=59 // pred_check
        %p848 = pneg %p847
      $region66: #{tpu_custom_call.1} parent=59 // pred_check_branch
        %850 = sbr.rel (%p848) target = $region68
      $region67: #{tpu_custom_call.1} parent=59 // pred_region
        %s851 = smul.u32 %s846, 16
        %s852 = scalar_lea.vmem %s373, %s851
        %v853 = vld [vmem:[%s852] sm:$0xff]
        %v854 = vld [vmem:[%s852 + $0x8] sm:$0xff]
        %v856 = vsel %vm448, %v853, 0
        %v859 = vsel %vm448, %v854, 0
        %861 = vmatprep.subr.mxu0 0.0
        %862 = vmatpush1.msra.mxu0 %v499
        %863 = vmatprep.subr.mxu0 0.0
        %864 = vmatpush1.msra.mxu0 0.0
        %865 = vmatprep.subr.mxu0 0.0
        %866 = vmatpush1.msra.mxu0 0.0
        %867 = vmatprep.subr.mxu0 0.0
        %868 = vmatpush1.msra.mxu0 0.0
        %869 = vmatprep.subr.mxu0 0.0
        %870 = vmatpush1.msra.mxu0 0.0
        %871 = vmatprep.subr.mxu0 0.0
        %872 = vmatpush1.msra.mxu0 0.0
        %873 = vmatprep.subr.mxu0 0.0
        %874 = vmatpush1.msra.mxu0 0.0
        %875 = vmatprep.subr.mxu0 0.0
        %876 = vmatpush1.msra.mxu0 0.0
        %877 = vmatprep.subr.mxu0 0.0
        %878 = vmatpush1.msra.mxu0 0.0
        %879 = vmatprep.subr.mxu0 0.0
        %880 = vmatpush1.msra.mxu0 0.0
        %881 = vmatprep.subr.mxu0 0.0
        %882 = vmatpush1.msra.mxu0 0.0
        %883 = vmatprep.subr.mxu0 0.0
        %884 = vmatpush1.msra.mxu0 0.0
        %885 = vmatprep.subr.mxu0 0.0
        %886 = vmatpush1.msra.mxu0 0.0
        %887 = vmatprep.subr.mxu0 0.0
        %888 = vmatpush1.msra.mxu0 0.0
        %889 = vmatprep.subr.mxu0 0.0
        %890 = vmatpush1.msra.mxu0 0.0
        %891 = vmatprep.subr.mxu0 0.0
        %892 = vmatpush1.msra.mxu0 0.0
        %893 = vmatprep.subr.mxu0 0.0
        %894 = vmatpush1.msra.mxu0 0.0
        %895 = vmatprep.subr.mxu0 0.0
        %896 = vmatpush1.msra.mxu0 0.0
        %897 = vmatprep.subr.mxu0 0.0
        %898 = vmatpush1.msra.mxu0 0.0
        %899 = vmatprep.subr.mxu0 0.0
        %900 = vmatpush1.msra.mxu0 0.0
        %901 = vmatprep.subr.mxu0 0.0
        %902 = vmatpush1.msra.mxu0 0.0
        %903 = vmatprep.subr.mxu0 0.0
        %904 = vmatpush1.msra.mxu0 0.0
        %905 = vmatprep.subr.mxu0 0.0
        %906 = vmatpush1.msra.mxu0 0.0
        %907 = vmatprep.subr.mxu0 0.0
        %908 = vmatpush1.msra.mxu0 0.0
        %909 = vmatprep.subr.mxu0 0.0
        %910 = vmatpush1.msra.mxu0 0.0
        %911 = vmatprep.subr.mxu0 0.0
        %912 = vmatpush1.msra.mxu0 0.0
        %913 = vmatprep.subr.mxu0 0.0
        %914 = vmatpush1.msra.mxu0 0.0
        %915 = vmatprep.subr.mxu0 0.0
        %916 = vmatpush1.msra.mxu0 0.0
        %917 = vmatprep.subr.mxu0 0.0
        %918 = vmatpush1.msra.mxu0 0.0
        %919 = vmatprep.subr.mxu0 0.0
        %920 = vmatpush1.msra.mxu0 0.0
        %921 = vmatprep.subr.mxu0 0.0
        %922 = vmatpush1.msra.mxu0 0.0
        %923 = vmatprep.subr.mxu0 0.0
        %924 = vmatpush1.msra.mxu0 0.0
        %925 = vmatprep.mubr.f32.mxu0 0.0
        %926 = vmatmul.mubr.f32.gmra.mrb[0].mxu0 %v856
        %v927 = vpop.f32.mrb[0].mxu0
        %v928 = vadd.f32 0.0, %v927
        %v929 = vpop.f32.mrb[0].mxu0
        %930 = vmatprep.mubr.f32.mxu0 0.0
        %931 = vmatmul.mubr.f32.gmra.mrb[0].mxu0 %v859
        %v932 = vpop.f32.mrb[0].mxu0
        %v933 = vadd.f32 0.0, %v932
        %v934 = vpop.f32.mrb[0].mxu0
        %935 = vdwg.mxu0
        %v936 = vmul.f32 %v928, %v650
        %v937 = vmul.f32 %v933, %v650
        %v938 = vadd.f32 %v936, %v672
        %v939 = vadd.f32 %v937, %v672
        %v940 = vmax.f32 %v938, 0.0
        %v941 = vmax.f32 %v939, 0.0
        %v942 = vmin.f32 %v940, 6.0
        %v943 = vmin.f32 %v941, 6.0
        %s944 = scalar_lea.vmem [#allocation2], 216
        %945 = vst.msk [vmem:[%s944 + $0x1] sm:$0xff] %vm397, %v942
        %946 = vst.msk [vmem:[%s944 + $0x9] sm:$0xff] %vm397, %v943
      $region68: #{tpu_custom_call.1} parent=59 // pred_fallthru
        _
      %v947 = vld [vmem:[#allocation2] sm:$0xff]
      %v948 = vld [vmem:[#allocation2 + $0x8] sm:$0xff]
      %v949 = vlaneseq
      %v950 = vshrl.u32 %v949, 7
      %v951 = vsub.s32 0, %v950
      %v952 = vrot.slane %v388, %v951
      %v953 = vmul.f32 %v947, %v952
      %v954 = vmul.f32 %v948, %v952
      %v955 = vadd.f32 %v953, 0.0
      %v956 = vadd.f32 %v954, 0.0
      %v957 = vld [vmem:[#allocation2 + $0x1] sm:$0xff]
      %v958 = vld [vmem:[#allocation2 + $0x9] sm:$0xff]
      %v959 = vlaneseq
      %v960 = vshrl.u32 %v959, 7
      %v961 = vsub.s32 1, %v960
      %v962 = vrot.slane %v388, %v961
      %v963 = vmul.f32 %v957, %v962
      %v964 = vmul.f32 %v958, %v962
      %v965 = vadd.f32 %v955, %v963
      %v966 = vadd.f32 %v956, %v964
      %v967 = vld [vmem:[#allocation2 + $0x2] sm:$0xff]
      %v968 = vld [vmem:[#allocation2 + $0xa] sm:$0xff]
      %v969 = vlaneseq
      %v970 = vshrl.u32 %v969, 7
      %v971 = vsub.s32 2, %v970
      %v972 = vrot.slane %v388, %v971
      %v973 = vmul.f32 %v967, %v972
      %v974 = vmul.f32 %v968, %v972
      %v975 = vadd.f32 %v965, %v973
      %v976 = vadd.f32 %v966, %v974
      %v977 = vld [vmem:[%s722] sm:$0xff]
      %v978 = vld [vmem:[%s722 + $0x8] sm:$0xff]
      %v979 = vlaneseq
      %v980 = vshrl.u32 %v979, 7
      %v981 = vsub.s32 3, %v980
      %v982 = vrot.slane %v388, %v981
      %v983 = vmul.f32 %v977, %v982
      %v984 = vmul.f32 %v978, %v982
      %v985 = vadd.f32 %v975, %v983
      %v986 = vadd.f32 %v976, %v984
      %v987 = vld [vmem:[%s722 + $0x1] sm:$0xff]
      %v988 = vld [vmem:[%s722 + $0x9] sm:$0xff]
      %v989 = vlaneseq
      %v990 = vshrl.u32 %v989, 7
      %v991 = vsub.s32 4, %v990
      %v992 = vrot.slane %v388, %v991
      %v993 = vmul.f32 %v987, %v992
      %v994 = vmul.f32 %v988, %v992
      %v995 = vadd.f32 %v985, %v993
      %v996 = vadd.f32 %v986, %v994
      %v997 = vld [vmem:[%s722 + $0x2] sm:$0xff]
      %v998 = vld [vmem:[%s722 + $0xa] sm:$0xff]
      %v999 = vlaneseq
      %v1000 = vshrl.u32 %v999, 7
      %v1001 = vsub.s32 5, %v1000
      %v1002 = vrot.slane %v388, %v1001
      %v1003 = vmul.f32 %v997, %v1002
      %v1004 = vmul.f32 %v998, %v1002
      %v1005 = vadd.f32 %v995, %v1003
      %v1006 = vadd.f32 %v996, %v1004
      %v1007 = vld [vmem:[%s725] sm:$0xff]
      %v1008 = vld [vmem:[%s725 + $0x8] sm:$0xff]
      %v1009 = vlaneseq
      %v1010 = vshrl.u32 %v1009, 7
      %v1011 = vsub.s32 6, %v1010
      %v1012 = vrot.slane %v388, %v1011
      %v1013 = vmul.f32 %v1007, %v1012
      %v1014 = vmul.f32 %v1008, %v1012
      %v1015 = vadd.f32 %v1005, %v1013
      %v1016 = vadd.f32 %v1006, %v1014
      %v1017 = vld [vmem:[%s725 + $0x1] sm:$0xff]
      %v1018 = vld [vmem:[%s725 + $0x9] sm:$0xff]
      %v1019 = vlaneseq
      %v1020 = vshrl.u32 %v1019, 7
      %v1021 = vsub.s32 7, %v1020
      %v1022 = vrot.slane %v388, %v1021
      %v1023 = vmul.f32 %v1017, %v1022
      %v1024 = vmul.f32 %v1018, %v1022
      %v1025 = vadd.f32 %v1015, %v1023
      %v1026 = vadd.f32 %v1016, %v1024
      %v1027 = vld [vmem:[%s725 + $0x2] sm:$0xff]
      %v1028 = vld [vmem:[%s725 + $0xa] sm:$0xff]
      %v1029 = vlaneseq
      %v1030 = vshrl.u32 %v1029, 7
      %v1031 = vsub.s32 0, %v1030
      %v1032 = vrot.slane %v389, %v1031
      %v1033 = vmul.f32 %v1027, %v1032
      %v1034 = vmul.f32 %v1028, %v1032
      %v1035 = vadd.f32 %v1025, %v1033
      %v1036 = vadd.f32 %v1026, %v1034
      %v1038 = vlaneseq
      %v1039 = vshrl.u32 %v1038, 7
      %v1040 = vsub.s32 0, %v1039
      %v1041 = vrot.slane %v390, %v1040
      %v1043 = vmul.f32 %v1035, %v1041
      %v1044 = vmul.f32 %v1036, %v1041
      %v1046 = vlaneseq
      %v1047 = vshrl.u32 %v1046, 7
      %v1048 = vsub.s32 0, %v1047
      %v1049 = vrot.slane %v391, %v1048
      %v1051 = vadd.f32 %v1043, %v1049
      %v1052 = vadd.f32 %v1044, %v1049
      %v1053 = vmax.f32 %v1051, 0.0
      %v1054 = vmax.f32 %v1052, 0.0
      %v1055 = vmin.f32 %v1053, 6.0
      %v1056 = vmin.f32 %v1054, 6.0
      %1057 = vst.msk [vmem:[#allocation3] sm:$0xff] %vm397, %v1055
      %1058 = vst.msk [vmem:[#allocation3 + $0x8] sm:$0xff] %vm397, %v1056
      %v1059 = vld [vmem:[%s722] sm:$0xff]
      %v1060 = vld [vmem:[%s722 + $0x8] sm:$0xff]
      %v1061 = vmul.f32 %v1059, %v952
      %v1062 = vmul.f32 %v1060, %v952
      %v1063 = vadd.f32 %v1061, 0.0
      %v1064 = vadd.f32 %v1062, 0.0
      %v1065 = vld [vmem:[%s722 + $0x1] sm:$0xff]
      %v1066 = vld [vmem:[%s722 + $0x9] sm:$0xff]
      %v1067 = vmul.f32 %v1065, %v962
      %v1068 = vmul.f32 %v1066, %v962
      %v1069 = vadd.f32 %v1063, %v1067
      %v1070 = vadd.f32 %v1064, %v1068
      %v1071 = vld [vmem:[%s722 + $0x2] sm:$0xff]
      %v1072 = vld [vmem:[%s722 + $0xa] sm:$0xff]
      %v1073 = vmul.f32 %v1071, %v972
      %v1074 = vmul.f32 %v1072, %v972
      %v1075 = vadd.f32 %v1069, %v1073
      %v1076 = vadd.f32 %v1070, %v1074
      %v1077 = vld [vmem:[%s725] sm:$0xff]
      %v1078 = vld [vmem:[%s725 + $0x8] sm:$0xff]
      %v1079 = vmul.f32 %v1077, %v982
      %v1080 = vmul.f32 %v1078, %v982
      %v1081 = vadd.f32 %v1075, %v1079
      %v1082 = vadd.f32 %v1076, %v1080
      %v1083 = vld [vmem:[%s725 + $0x1] sm:$0xff]
      %v1084 = vld [vmem:[%s725 + $0x9] sm:$0xff]
      %v1085 = vmul.f32 %v1083, %v992
      %v1086 = vmul.f32 %v1084, %v992
      %v1087 = vadd.f32 %v1081, %v1085
      %v1088 = vadd.f32 %v1082, %v1086
      %v1089 = vld [vmem:[%s725 + $0x2] sm:$0xff]
      %v1090 = vld [vmem:[%s725 + $0xa] sm:$0xff]
      %v1091 = vmul.f32 %v1089, %v1002
      %v1092 = vmul.f32 %v1090, %v1002
      %v1093 = vadd.f32 %v1087, %v1091
      %v1094 = vadd.f32 %v1088, %v1092
      %v1095 = vld [vmem:[%s728] sm:$0xff]
      %v1096 = vld [vmem:[%s728 + $0x8] sm:$0xff]
      %v1097 = vmul.f32 %v1095, %v1012
      %v1098 = vmul.f32 %v1096, %v1012
      %v1099 = vadd.f32 %v1093, %v1097
      %v1100 = vadd.f32 %v1094, %v1098
      %v1101 = vld [vmem:[%s728 + $0x1] sm:$0xff]
      %v1102 = vld [vmem:[%s728 + $0x9] sm:$0xff]
      %v1103 = vmul.f32 %v1101, %v1022
      %v1104 = vmul.f32 %v1102, %v1022
      %v1105 = vadd.f32 %v1099, %v1103
      %v1106 = vadd.f32 %v1100, %v1104
      %v1107 = vld [vmem:[%s728 + $0x2] sm:$0xff]
      %v1108 = vld [vmem:[%s728 + $0xa] sm:$0xff]
      %v1109 = vmul.f32 %v1107, %v1032
      %v1110 = vmul.f32 %v1108, %v1032
      %v1111 = vadd.f32 %v1105, %v1109
      %v1112 = vadd.f32 %v1106, %v1110
      %v1113 = vmul.f32 %v1111, %v1041
      %v1114 = vmul.f32 %v1112, %v1041
      %v1115 = vadd.f32 %v1113, %v1049
      %v1116 = vadd.f32 %v1114, %v1049
      %v1117 = vmax.f32 %v1115, 0.0
      %v1118 = vmax.f32 %v1116, 0.0
      %v1119 = vmin.f32 %v1117, 6.0
      %v1120 = vmin.f32 %v1118, 6.0
      %1121 = vst.msk [vmem:[#allocation3 + $0x10] sm:$0xff] %vm397, %v1119
      %1122 = vst.msk [vmem:[#allocation3 + $0x18] sm:$0xff] %vm397, %v1120
      %v1123 = vld [vmem:[%s725] sm:$0xff]
      %v1124 = vld [vmem:[%s725 + $0x8] sm:$0xff]
      %v1125 = vmul.f32 %v1123, %v952
      %v1126 = vmul.f32 %v1124, %v952
      %v1127 = vadd.f32 %v1125, 0.0
      %v1128 = vadd.f32 %v1126, 0.0
      %v1129 = vld [vmem:[%s725 + $0x1] sm:$0xff]
      %v1130 = vld [vmem:[%s725 + $0x9] sm:$0xff]
      %v1131 = vmul.f32 %v1129, %v962
      %v1132 = vmul.f32 %v1130, %v962
      %v1133 = vadd.f32 %v1127, %v1131
      %v1134 = vadd.f32 %v1128, %v1132
      %v1135 = vld [vmem:[%s725 + $0x2] sm:$0xff]
      %v1136 = vld [vmem:[%s725 + $0xa] sm:$0xff]
      %v1137 = vmul.f32 %v1135, %v972
      %v1138 = vmul.f32 %v1136, %v972
      %v1139 = vadd.f32 %v1133, %v1137
      %v1140 = vadd.f32 %v1134, %v1138
      %v1141 = vld [vmem:[%s728] sm:$0xff]
      %v1142 = vld [vmem:[%s728 + $0x8] sm:$0xff]
      %v1143 = vmul.f32 %v1141, %v982
      %v1144 = vmul.f32 %v1142, %v982
      %v1145 = vadd.f32 %v1139, %v1143
      %v1146 = vadd.f32 %v1140, %v1144
      %v1147 = vld [vmem:[%s728 + $0x1] sm:$0xff]
      %v1148 = vld [vmem:[%s728 + $0x9] sm:$0xff]
      %v1149 = vmul.f32 %v1147, %v992
      %v1150 = vmul.f32 %v1148, %v992
      %v1151 = vadd.f32 %v1145, %v1149
      %v1152 = vadd.f32 %v1146, %v1150
      %v1153 = vld [vmem:[%s728 + $0x2] sm:$0xff]
      %v1154 = vld [vmem:[%s728 + $0xa] sm:$0xff]
      %v1155 = vmul.f32 %v1153, %v1002
      %v1156 = vmul.f32 %v1154, %v1002
      %v1157 = vadd.f32 %v1151, %v1155
      %v1158 = vadd.f32 %v1152, %v1156
      %v1159 = vld [vmem:[%s731] sm:$0xff]
      %v1160 = vld [vmem:[%s731 + $0x8] sm:$0xff]
      %v1161 = vmul.f32 %v1159, %v1012
      %v1162 = vmul.f32 %v1160, %v1012
      %v1163 = vadd.f32 %v1157, %v1161
      %v1164 = vadd.f32 %v1158, %v1162
      %v1165 = vld [vmem:[%s731 + $0x1] sm:$0xff]
      %v1166 = vld [vmem:[%s731 + $0x9] sm:$0xff]
      %v1167 = vmul.f32 %v1165, %v1022
      %v1168 = vmul.f32 %v1166, %v1022
      %v1169 = vadd.f32 %v1163, %v1167
      %v1170 = vadd.f32 %v1164, %v1168
      %v1171 = vld [vmem:[%s731 + $0x2] sm:$0xff]
      %v1172 = vld [vmem:[%s731 + $0xa] sm:$0xff]
      %v1173 = vmul.f32 %v1171, %v1032
      %v1174 = vmul.f32 %v1172, %v1032
      %v1175 = vadd.f32 %v1169, %v1173
      %v1176 = vadd.f32 %v1170, %v1174
      %v1177 = vmul.f32 %v1175, %v1041
      %v1178 = vmul.f32 %v1176, %v1041
      %v1179 = vadd.f32 %v1177, %v1049
      %v1180 = vadd.f32 %v1178, %v1049
      %v1181 = vmax.f32 %v1179, 0.0
      %v1182 = vmax.f32 %v1180, 0.0
      %v1183 = vmin.f32 %v1181, 6.0
      %v1184 = vmin.f32 %v1182, 6.0
      %1185 = vst.msk [vmem:[#allocation3 + $0x20] sm:$0xff] %vm397, %v1183
      %1186 = vst.msk [vmem:[#allocation3 + $0x28] sm:$0xff] %vm397, %v1184
      %v1187 = vld [vmem:[%s728] sm:$0xff]
      %v1188 = vld [vmem:[%s728 + $0x8] sm:$0xff]
      %v1189 = vmul.f32 %v1187, %v952
      %v1190 = vmul.f32 %v1188, %v952
      %v1191 = vadd.f32 %v1189, 0.0
      %v1192 = vadd.f32 %v1190, 0.0
      %v1193 = vld [vmem:[%s728 + $0x1] sm:$0xff]
      %v1194 = vld [vmem:[%s728 + $0x9] sm:$0xff]
      %v1195 = vmul.f32 %v1193, %v962
      %v1196 = vmul.f32 %v1194, %v962
      %v1197 = vadd.f32 %v1191, %v1195
      %v1198 = vadd.f32 %v1192, %v1196
      %v1199 = vld [vmem:[%s728 + $0x2] sm:$0xff]
      %v1200 = vld [vmem:[%s728 + $0xa] sm:$0xff]
      %v1201 = vmul.f32 %v1199, %v972
      %v1202 = vmul.f32 %v1200, %v972
      %v1203 = vadd.f32 %v1197, %v1201
      %v1204 = vadd.f32 %v1198, %v1202
      %v1205 = vld [vmem:[%s731] sm:$0xff]
      %v1206 = vld [vmem:[%s731 + $0x8] sm:$0xff]
      %v1207 = vmul.f32 %v1205, %v982
      %v1208 = vmul.f32 %v1206, %v982
      %v1209 = vadd.f32 %v1203, %v1207
      %v1210 = vadd.f32 %v1204, %v1208
      %v1211 = vld [vmem:[%s731 + $0x1] sm:$0xff]
      %v1212 = vld [vmem:[%s731 + $0x9] sm:$0xff]
      %v1213 = vmul.f32 %v1211, %v992
      %v1214 = vmul.f32 %v1212, %v992
      %v1215 = vadd.f32 %v1209, %v1213
      %v1216 = vadd.f32 %v1210, %v1214
      %v1217 = vld [vmem:[%s731 + $0x2] sm:$0xff]
      %v1218 = vld [vmem:[%s731 + $0xa] sm:$0xff]
      %v1219 = vmul.f32 %v1217, %v1002
      %v1220 = vmul.f32 %v1218, %v1002
      %v1221 = vadd.f32 %v1215, %v1219
      %v1222 = vadd.f32 %v1216, %v1220
      %v1223 = vld [vmem:[%s734] sm:$0xff]
      %v1224 = vld [vmem:[%s734 + $0x8] sm:$0xff]
      %v1225 = vmul.f32 %v1223, %v1012
      %v1226 = vmul.f32 %v1224, %v1012
      %v1227 = vadd.f32 %v1221, %v1225
      %v1228 = vadd.f32 %v1222, %v1226
      %v1229 = vld [vmem:[%s734 + $0x1] sm:$0xff]
      %v1230 = vld [vmem:[%s734 + $0x9] sm:$0xff]
      %v1231 = vmul.f32 %v1229, %v1022
      %v1232 = vmul.f32 %v1230, %v1022
      %v1233 = vadd.f32 %v1227, %v1231
      %v1234 = vadd.f32 %v1228, %v1232
      %v1235 = vld [vmem:[%s734 + $0x2] sm:$0xff]
      %v1236 = vld [vmem:[%s734 + $0xa] sm:$0xff]
      %v1237 = vmul.f32 %v1235, %v1032
      %v1238 = vmul.f32 %v1236, %v1032
      %v1239 = vadd.f32 %v1233, %v1237
      %v1240 = vadd.f32 %v1234, %v1238
      %v1241 = vmul.f32 %v1239, %v1041
      %v1242 = vmul.f32 %v1240, %v1041
      %v1243 = vadd.f32 %v1241, %v1049
      %v1244 = vadd.f32 %v1242, %v1049
      %v1245 = vmax.f32 %v1243, 0.0
      %v1246 = vmax.f32 %v1244, 0.0
      %v1247 = vmin.f32 %v1245, 6.0
      %v1248 = vmin.f32 %v1246, 6.0
      %1249 = vst.msk [vmem:[#allocation3 + $0x30] sm:$0xff] %vm397, %v1247
      %1250 = vst.msk [vmem:[#allocation3 + $0x38] sm:$0xff] %vm397, %v1248
      %v1251 = vld [vmem:[%s731] sm:$0xff]
      %v1252 = vld [vmem:[%s731 + $0x8] sm:$0xff]
      %v1253 = vmul.f32 %v1251, %v952
      %v1254 = vmul.f32 %v1252, %v952
      %v1255 = vadd.f32 %v1253, 0.0
      %v1256 = vadd.f32 %v1254, 0.0
      %v1257 = vld [vmem:[%s731 + $0x1] sm:$0xff]
      %v1258 = vld [vmem:[%s731 + $0x9] sm:$0xff]
      %v1259 = vmul.f32 %v1257, %v962
      %v1260 = vmul.f32 %v1258, %v962
      %v1261 = vadd.f32 %v1255, %v1259
      %v1262 = vadd.f32 %v1256, %v1260
      %v1263 = vld [vmem:[%s731 + $0x2] sm:$0xff]
      %v1264 = vld [vmem:[%s731 + $0xa] sm:$0xff]
      %v1265 = vmul.f32 %v1263, %v972
      %v1266 = vmul.f32 %v1264, %v972
      %v1267 = vadd.f32 %v1261, %v1265
      %v1268 = vadd.f32 %v1262, %v1266
      %v1269 = vld [vmem:[%s734] sm:$0xff]
      %v1270 = vld [vmem:[%s734 + $0x8] sm:$0xff]
      %v1271 = vmul.f32 %v1269, %v982
      %v1272 = vmul.f32 %v1270, %v982
      %v1273 = vadd.f32 %v1267, %v1271
      %v1274 = vadd.f32 %v1268, %v1272
      %v1275 = vld [vmem:[%s734 + $0x1] sm:$0xff]
      %v1276 = vld [vmem:[%s734 + $0x9] sm:$0xff]
      %v1277 = vmul.f32 %v1275, %v992
      %v1278 = vmul.f32 %v1276, %v992
      %v1279 = vadd.f32 %v1273, %v1277
      %v1280 = vadd.f32 %v1274, %v1278
      %v1281 = vld [vmem:[%s734 + $0x2] sm:$0xff]
      %v1282 = vld [vmem:[%s734 + $0xa] sm:$0xff]
      %v1283 = vmul.f32 %v1281, %v1002
      %v1284 = vmul.f32 %v1282, %v1002
      %v1285 = vadd.f32 %v1279, %v1283
      %v1286 = vadd.f32 %v1280, %v1284
      %v1287 = vld [vmem:[%s737] sm:$0xff]
      %v1288 = vld [vmem:[%s737 + $0x8] sm:$0xff]
      %v1289 = vmul.f32 %v1287, %v1012
      %v1290 = vmul.f32 %v1288, %v1012
      %v1291 = vadd.f32 %v1285, %v1289
      %v1292 = vadd.f32 %v1286, %v1290
      %v1293 = vld [vmem:[%s737 + $0x1] sm:$0xff]
      %v1294 = vld [vmem:[%s737 + $0x9] sm:$0xff]
      %v1295 = vmul.f32 %v1293, %v1022
      %v1296 = vmul.f32 %v1294, %v1022
      %v1297 = vadd.f32 %v1291, %v1295
      %v1298 = vadd.f32 %v1292, %v1296
      %v1299 = vld [vmem:[%s737 + $0x2] sm:$0xff]
      %v1300 = vld [vmem:[%s737 + $0xa] sm:$0xff]
      %v1301 = vmul.f32 %v1299, %v1032
      %v1302 = vmul.f32 %v1300, %v1032
      %v1303 = vadd.f32 %v1297, %v1301
      %v1304 = vadd.f32 %v1298, %v1302
      %v1305 = vmul.f32 %v1303, %v1041
      %v1306 = vmul.f32 %v1304, %v1041
      %v1307 = vadd.f32 %v1305, %v1049
      %v1308 = vadd.f32 %v1306, %v1049
      %v1309 = vmax.f32 %v1307, 0.0
      %v1310 = vmax.f32 %v1308, 0.0
      %v1311 = vmin.f32 %v1309, 6.0
      %v1312 = vmin.f32 %v1310, 6.0
      %1313 = vst.msk [vmem:[#allocation3 + $0x40] sm:$0xff] %vm397, %v1311
      %1314 = vst.msk [vmem:[#allocation3 + $0x48] sm:$0xff] %vm397, %v1312
      %v1315 = vld [vmem:[%s734] sm:$0xff]
      %v1316 = vld [vmem:[%s734 + $0x8] sm:$0xff]
      %v1317 = vmul.f32 %v1315, %v952
      %v1318 = vmul.f32 %v1316, %v952
      %v1319 = vadd.f32 %v1317, 0.0
      %v1320 = vadd.f32 %v1318, 0.0
      %v1321 = vld [vmem:[%s734 + $0x1] sm:$0xff]
      %v1322 = vld [vmem:[%s734 + $0x9] sm:$0xff]
      %v1323 = vmul.f32 %v1321, %v962
      %v1324 = vmul.f32 %v1322, %v962
      %v1325 = vadd.f32 %v1319, %v1323
      %v1326 = vadd.f32 %v1320, %v1324
      %v1327 = vld [vmem:[%s734 + $0x2] sm:$0xff]
      %v1328 = vld [vmem:[%s734 + $0xa] sm:$0xff]
      %v1329 = vmul.f32 %v1327, %v972
      %v1330 = vmul.f32 %v1328, %v972
      %v1331 = vadd.f32 %v1325, %v1329
      %v1332 = vadd.f32 %v1326, %v1330
      %v1333 = vld [vmem:[%s737] sm:$0xff]
      %v1334 = vld [vmem:[%s737 + $0x8] sm:$0xff]
      %v1335 = vmul.f32 %v1333, %v982
      %v1336 = vmul.f32 %v1334, %v982
      %v1337 = vadd.f32 %v1331, %v1335
      %v1338 = vadd.f32 %v1332, %v1336
      %v1339 = vld [vmem:[%s737 + $0x1] sm:$0xff]
      %v1340 = vld [vmem:[%s737 + $0x9] sm:$0xff]
      %v1341 = vmul.f32 %v1339, %v992
      %v1342 = vmul.f32 %v1340, %v992
      %v1343 = vadd.f32 %v1337, %v1341
      %v1344 = vadd.f32 %v1338, %v1342
      %v1345 = vld [vmem:[%s737 + $0x2] sm:$0xff]
      %v1346 = vld [vmem:[%s737 + $0xa] sm:$0xff]
      %v1347 = vmul.f32 %v1345, %v1002
      %v1348 = vmul.f32 %v1346, %v1002
      %v1349 = vadd.f32 %v1343, %v1347
      %v1350 = vadd.f32 %v1344, %v1348
      %v1351 = vld [vmem:[%s740] sm:$0xff]
      %v1352 = vld [vmem:[%s740 + $0x8] sm:$0xff]
      %v1353 = vmul.f32 %v1351, %v1012
      %v1354 = vmul.f32 %v1352, %v1012
      %v1355 = vadd.f32 %v1349, %v1353
      %v1356 = vadd.f32 %v1350, %v1354
      %v1357 = vld [vmem:[%s740 + $0x1] sm:$0xff]
      %v1358 = vld [vmem:[%s740 + $0x9] sm:$0xff]
      %v1359 = vmul.f32 %v1357, %v1022
      %v1360 = vmul.f32 %v1358, %v1022
      %v1361 = vadd.f32 %v1355, %v1359
      %v1362 = vadd.f32 %v1356, %v1360
      %v1363 = vld [vmem:[%s740 + $0x2] sm:$0xff]
      %v1364 = vld [vmem:[%s740 + $0xa] sm:$0xff]
      %v1365 = vmul.f32 %v1363, %v1032
      %v1366 = vmul.f32 %v1364, %v1032
      %v1367 = vadd.f32 %v1361, %v1365
      %v1368 = vadd.f32 %v1362, %v1366
      %v1369 = vmul.f32 %v1367, %v1041
      %v1370 = vmul.f32 %v1368, %v1041
      %v1371 = vadd.f32 %v1369, %v1049
      %v1372 = vadd.f32 %v1370, %v1049
      %v1373 = vmax.f32 %v1371, 0.0
      %v1374 = vmax.f32 %v1372, 0.0
      %v1375 = vmin.f32 %v1373, 6.0
      %v1376 = vmin.f32 %v1374, 6.0
      %1377 = vst.msk [vmem:[#allocation3 + $0x50] sm:$0xff] %vm397, %v1375
      %1378 = vst.msk [vmem:[#allocation3 + $0x58] sm:$0xff] %vm397, %v1376
      %v1379 = vld [vmem:[%s737] sm:$0xff]
      %v1380 = vld [vmem:[%s737 + $0x8] sm:$0xff]
      %v1381 = vmul.f32 %v1379, %v952
      %v1382 = vmul.f32 %v1380, %v952
      %v1383 = vadd.f32 %v1381, 0.0
      %v1384 = vadd.f32 %v1382, 0.0
      %v1385 = vld [vmem:[%s737 + $0x1] sm:$0xff]
      %v1386 = vld [vmem:[%s737 + $0x9] sm:$0xff]
      %v1387 = vmul.f32 %v1385, %v962
      %v1388 = vmul.f32 %v1386, %v962
      %v1389 = vadd.f32 %v1383, %v1387
      %v1390 = vadd.f32 %v1384, %v1388
      %v1391 = vld [vmem:[%s737 + $0x2] sm:$0xff]
      %v1392 = vld [vmem:[%s737 + $0xa] sm:$0xff]
      %v1393 = vmul.f32 %v1391, %v972
      %v1394 = vmul.f32 %v1392, %v972
      %v1395 = vadd.f32 %v1389, %v1393
      %v1396 = vadd.f32 %v1390, %v1394
      %v1397 = vld [vmem:[%s740] sm:$0xff]
      %v1398 = vld [vmem:[%s740 + $0x8] sm:$0xff]
      %v1399 = vmul.f32 %v1397, %v982
      %v1400 = vmul.f32 %v1398, %v982
      %v1401 = vadd.f32 %v1395, %v1399
      %v1402 = vadd.f32 %v1396, %v1400
      %v1403 = vld [vmem:[%s740 + $0x1] sm:$0xff]
      %v1404 = vld [vmem:[%s740 + $0x9] sm:$0xff]
      %v1405 = vmul.f32 %v1403, %v992
      %v1406 = vmul.f32 %v1404, %v992
      %v1407 = vadd.f32 %v1401, %v1405
      %v1408 = vadd.f32 %v1402, %v1406
      %v1409 = vld [vmem:[%s740 + $0x2] sm:$0xff]
      %v1410 = vld [vmem:[%s740 + $0xa] sm:$0xff]
      %v1411 = vmul.f32 %v1409, %v1002
      %v1412 = vmul.f32 %v1410, %v1002
      %v1413 = vadd.f32 %v1407, %v1411
      %v1414 = vadd.f32 %v1408, %v1412
      %v1415 = vld [vmem:[%s743] sm:$0xff]
      %v1416 = vld [vmem:[%s743 + $0x8] sm:$0xff]
      %v1417 = vmul.f32 %v1415, %v1012
      %v1418 = vmul.f32 %v1416, %v1012
      %v1419 = vadd.f32 %v1413, %v1417
      %v1420 = vadd.f32 %v1414, %v1418
      %v1421 = vld [vmem:[%s743 + $0x1] sm:$0xff]
      %v1422 = vld [vmem:[%s743 + $0x9] sm:$0xff]
      %v1423 = vmul.f32 %v1421, %v1022
      %v1424 = vmul.f32 %v1422, %v1022
      %v1425 = vadd.f32 %v1419, %v1423
      %v1426 = vadd.f32 %v1420, %v1424
      %v1427 = vld [vmem:[%s743 + $0x2] sm:$0xff]
      %v1428 = vld [vmem:[%s743 + $0xa] sm:$0xff]
      %v1429 = vmul.f32 %v1427, %v1032
      %v1430 = vmul.f32 %v1428, %v1032
      %v1431 = vadd.f32 %v1425, %v1429
      %v1432 = vadd.f32 %v1426, %v1430
      %v1433 = vmul.f32 %v1431, %v1041
      %v1434 = vmul.f32 %v1432, %v1041
      %v1435 = vadd.f32 %v1433, %v1049
      %v1436 = vadd.f32 %v1434, %v1049
      %v1437 = vmax.f32 %v1435, 0.0
      %v1438 = vmax.f32 %v1436, 0.0
      %v1439 = vmin.f32 %v1437, 6.0
      %v1440 = vmin.f32 %v1438, 6.0
      %1441 = vst.msk [vmem:[#allocation3 + $0x60] sm:$0xff] %vm397, %v1439
      %1442 = vst.msk [vmem:[#allocation3 + $0x68] sm:$0xff] %vm397, %v1440
      %v1443 = vld [vmem:[%s740] sm:$0xff]
      %v1444 = vld [vmem:[%s740 + $0x8] sm:$0xff]
      %v1445 = vmul.f32 %v1443, %v952
      %v1446 = vmul.f32 %v1444, %v952
      %v1447 = vadd.f32 %v1445, 0.0
      %v1448 = vadd.f32 %v1446, 0.0
      %v1449 = vld [vmem:[%s740 + $0x1] sm:$0xff]
      %v1450 = vld [vmem:[%s740 + $0x9] sm:$0xff]
      %v1451 = vmul.f32 %v1449, %v962
      %v1452 = vmul.f32 %v1450, %v962
      %v1453 = vadd.f32 %v1447, %v1451
      %v1454 = vadd.f32 %v1448, %v1452
      %v1455 = vld [vmem:[%s740 + $0x2] sm:$0xff]
      %v1456 = vld [vmem:[%s740 + $0xa] sm:$0xff]
      %v1457 = vmul.f32 %v1455, %v972
      %v1458 = vmul.f32 %v1456, %v972
      %v1459 = vadd.f32 %v1453, %v1457
      %v1460 = vadd.f32 %v1454, %v1458
      %v1461 = vld [vmem:[%s743] sm:$0xff]
      %v1462 = vld [vmem:[%s743 + $0x8] sm:$0xff]
      %v1463 = vmul.f32 %v1461, %v982
      %v1464 = vmul.f32 %v1462, %v982
      %v1465 = vadd.f32 %v1459, %v1463
      %v1466 = vadd.f32 %v1460, %v1464
      %v1467 = vld [vmem:[%s743 + $0x1] sm:$0xff]
      %v1468 = vld [vmem:[%s743 + $0x9] sm:$0xff]
      %v1469 = vmul.f32 %v1467, %v992
      %v1470 = vmul.f32 %v1468, %v992
      %v1471 = vadd.f32 %v1465, %v1469
      %v1472 = vadd.f32 %v1466, %v1470
      %v1473 = vld [vmem:[%s743 + $0x2] sm:$0xff]
      %v1474 = vld [vmem:[%s743 + $0xa] sm:$0xff]
      %v1475 = vmul.f32 %v1473, %v1002
      %v1476 = vmul.f32 %v1474, %v1002
      %v1477 = vadd.f32 %v1471, %v1475
      %v1478 = vadd.f32 %v1472, %v1476
      %s1479 = scalar_lea.vmem [#allocation2], 216
      %v1480 = vld [vmem:[%s1479] sm:$0xff]
      %v1481 = vld [vmem:[%s1479 + $0x8] sm:$0xff]
      %v1482 = vmul.f32 %v1480, %v1012
      %v1483 = vmul.f32 %v1481, %v1012
      %v1484 = vadd.f32 %v1477, %v1482
      %v1485 = vadd.f32 %v1478, %v1483
      %v1486 = vld [vmem:[%s1479 + $0x1] sm:$0xff]
      %v1487 = vld [vmem:[%s1479 + $0x9] sm:$0xff]
      %v1488 = vmul.f32 %v1486, %v1022
      %v1489 = vmul.f32 %v1487, %v1022
      %v1490 = vadd.f32 %v1484, %v1488
      %v1491 = vadd.f32 %v1485, %v1489
      %v1492 = vld [vmem:[%s1479 + $0x2] sm:$0xff]
      %v1493 = vld [vmem:[%s1479 + $0xa] sm:$0xff]
      %v1494 = vmul.f32 %v1492, %v1032
      %v1495 = vmul.f32 %v1493, %v1032
      %v1496 = vadd.f32 %v1490, %v1494
      %v1497 = vadd.f32 %v1491, %v1495
      %v1498 = vmul.f32 %v1496, %v1041
      %v1499 = vmul.f32 %v1497, %v1041
      %v1500 = vadd.f32 %v1498, %v1049
      %v1501 = vadd.f32 %v1499, %v1049
      %v1502 = vmax.f32 %v1500, 0.0
      %v1503 = vmax.f32 %v1501, 0.0
      %v1504 = vmin.f32 %v1502, 6.0
      %v1505 = vmin.f32 %v1503, 6.0
      %1506 = vst.msk [vmem:[#allocation3 + $0x70] sm:$0xff] %vm397, %v1504
      %1507 = vst.msk [vmem:[#allocation3 + $0x78] sm:$0xff] %vm397, %v1505
      %v1508 = vld [vmem:[#allocation3] sm:$0xff]
      %v1509 = vld [vmem:[#allocation3 + $0x8] sm:$0xff]
      %v1510 = vld [vmem:[#allocation3 + $0x10] sm:$0xff]
      %v1511 = vld [vmem:[#allocation3 + $0x18] sm:$0xff]
      %v1512 = vld [vmem:[#allocation3 + $0x20] sm:$0xff]
      %v1513 = vld [vmem:[#allocation3 + $0x28] sm:$0xff]
      %v1514 = vld [vmem:[#allocation3 + $0x30] sm:$0xff]
      %v1515 = vld [vmem:[#allocation3 + $0x38] sm:$0xff]
      %v1516 = vld [vmem:[#allocation3 + $0x40] sm:$0xff]
      %v1517 = vld [vmem:[#allocation3 + $0x48] sm:$0xff]
      %v1518 = vld [vmem:[#allocation3 + $0x50] sm:$0xff]
      %v1519 = vld [vmem:[#allocation3 + $0x58] sm:$0xff]
      %v1520 = vld [vmem:[#allocation3 + $0x60] sm:$0xff]
      %v1521 = vld [vmem:[#allocation3 + $0x68] sm:$0xff]
      %v1522 = vld [vmem:[#allocation3 + $0x70] sm:$0xff]
      %v1523 = vld [vmem:[#allocation3 + $0x78] sm:$0xff]
      %v1525 = vsel %vm397, %v1508, 0
      %v1528 = vsel %vm397, %v1509, 0
      %v1531 = vsel %vm397, %v1510, 0
      %v1534 = vsel %vm397, %v1511, 0
      %v1537 = vsel %vm397, %v1512, 0
      %v1540 = vsel %vm397, %v1513, 0
      %v1543 = vsel %vm397, %v1514, 0
      %v1546 = vsel %vm397, %v1515, 0
      %v1549 = vsel %vm397, %v1516, 0
      %v1552 = vsel %vm397, %v1517, 0
      %v1555 = vsel %vm397, %v1518, 0
      %v1558 = vsel %vm397, %v1519, 0
      %v1561 = vsel %vm397, %v1520, 0
      %v1564 = vsel %vm397, %v1521, 0
      %v1567 = vsel %vm397, %v1522, 0
      %v1570 = vsel %vm397, %v1523, 0
      %1572 = vmatprep.subr.mxu0 0.0
      %1573 = vmatpush1.msra.mxu0 %v392
      %1574 = vmatprep.subr.mxu0 0.0
      %1575 = vmatpush1.msra.mxu0 %v393
      %1576 = vmatprep.subr.mxu0 0.0
      %1577 = vmatpush1.msra.mxu0 %v394
      %1578 = vmatprep.subr.mxu0 0.0
      %1579 = vmatpush1.msra.mxu0 0.0
      %1580 = vmatprep.subr.mxu0 0.0
      %1581 = vmatpush1.msra.mxu0 0.0
      %1582 = vmatprep.subr.mxu0 0.0
      %1583 = vmatpush1.msra.mxu0 0.0
      %1584 = vmatprep.subr.mxu0 0.0
      %1585 = vmatpush1.msra.mxu0 0.0
      %1586 = vmatprep.subr.mxu0 0.0
      %1587 = vmatpush1.msra.mxu0 0.0
      %1588 = vmatprep.subr.mxu0 0.0
      %1589 = vmatpush1.msra.mxu0 0.0
      %1590 = vmatprep.subr.mxu0 0.0
      %1591 = vmatpush1.msra.mxu0 0.0
      %1592 = vmatprep.subr.mxu0 0.0
      %1593 = vmatpush1.msra.mxu0 0.0
      %1594 = vmatprep.subr.mxu0 0.0
      %1595 = vmatpush1.msra.mxu0 0.0
      %1596 = vmatprep.subr.mxu0 0.0
      %1597 = vmatpush1.msra.mxu0 0.0
      %1598 = vmatprep.subr.mxu0 0.0
      %1599 = vmatpush1.msra.mxu0 0.0
      %1600 = vmatprep.subr.mxu0 0.0
      %1601 = vmatpush1.msra.mxu0 0.0
      %1602 = vmatprep.subr.mxu0 0.0
      %1603 = vmatpush1.msra.mxu0 0.0
      %1604 = vmatprep.subr.mxu0 0.0
      %1605 = vmatpush1.msra.mxu0 0.0
      %1606 = vmatprep.subr.mxu0 0.0
      %1607 = vmatpush1.msra.mxu0 0.0
      %1608 = vmatprep.subr.mxu0 0.0
      %1609 = vmatpush1.msra.mxu0 0.0
      %1610 = vmatprep.subr.mxu0 0.0
      %1611 = vmatpush1.msra.mxu0 0.0
      %1612 = vmatprep.subr.mxu0 0.0
      %1613 = vmatpush1.msra.mxu0 0.0
      %1614 = vmatprep.subr.mxu0 0.0
      %1615 = vmatpush1.msra.mxu0 0.0
      %1616 = vmatprep.subr.mxu0 0.0
      %1617 = vmatpush1.msra.mxu0 0.0
      %1618 = vmatprep.subr.mxu0 0.0
      %1619 = vmatpush1.msra.mxu0 0.0
      %1620 = vmatprep.subr.mxu0 0.0
      %1621 = vmatpush1.msra.mxu0 0.0
      %1622 = vmatprep.subr.mxu0 0.0
      %1623 = vmatpush1.msra.mxu0 0.0
      %1624 = vmatprep.subr.mxu0 0.0
      %1625 = vmatpush1.msra.mxu0 0.0
      %1626 = vmatprep.subr.mxu0 0.0
      %1627 = vmatpush1.msra.mxu0 0.0
      %1628 = vmatprep.subr.mxu0 0.0
      %1629 = vmatpush1.msra.mxu0 0.0
      %1630 = vmatprep.subr.mxu0 0.0
      %1631 = vmatpush1.msra.mxu0 0.0
      %1632 = vmatprep.subr.mxu0 0.0
      %1633 = vmatpush1.msra.mxu0 0.0
      %1634 = vmatprep.subr.mxu0 0.0
      %1635 = vmatpush1.msra.mxu0 0.0
      %1636 = vmatprep.mubr.f32.mxu0 0.0
      %1637 = vmatmul.mubr.f32.gmra.mrb[0].mxu0 %v1525
      %v1638 = vpop.f32.mrb[0].mxu0
      %v1639 = vadd.f32 0.0, %v1638
      %v1640 = vpop.f32.mrb[0].mxu0
      %1641 = vmatprep.mubr.f32.mxu0 0.0
      %1642 = vmatmul.mubr.f32.gmra.mrb[0].mxu0 %v1528
      %v1643 = vpop.f32.mrb[0].mxu0
      %v1644 = vadd.f32 0.0, %v1643
      %v1645 = vpop.f32.mrb[0].mxu0
      %1646 = vmatprep.mubr.f32.mxu0 0.0
      %1647 = vmatmul.mubr.f32.gmra.mrb[0].mxu0 %v1531
      %v1648 = vpop.f32.mrb[0].mxu0
      %v1649 = vadd.f32 0.0, %v1648
      %v1650 = vpop.f32.mrb[0].mxu0
      %1651 = vmatprep.mubr.f32.mxu0 0.0
      %1652 = vmatmul.mubr.f32.gmra.mrb[0].mxu0 %v1534
      %v1653 = vpop.f32.mrb[0].mxu0
      %v1654 = vadd.f32 0.0, %v1653
      %v1655 = vpop.f32.mrb[0].mxu0
      %1656 = vmatprep.mubr.f32.mxu0 0.0
      %1657 = vmatmul.mubr.f32.gmra.mrb[0].mxu0 %v1537
      %v1658 = vpop.f32.mrb[0].mxu0
      %v1659 = vadd.f32 0.0, %v1658
      %v1660 = vpop.f32.mrb[0].mxu0
      %1661 = vmatprep.mubr.f32.mxu0 0.0
      %1662 = vmatmul.mubr.f32.gmra.mrb[0].mxu0 %v1540
      %v1663 = vpop.f32.mrb[0].mxu0
      %v1664 = vadd.f32 0.0, %v1663
      %v1665 = vpop.f32.mrb[0].mxu0
      %1666 = vmatprep.mubr.f32.mxu0 0.0
      %1667 = vmatmul.mubr.f32.gmra.mrb[0].mxu0 %v1543
      %v1668 = vpop.f32.mrb[0].mxu0
      %v1669 = vadd.f32 0.0, %v1668
      %v1670 = vpop.f32.mrb[0].mxu0
      %1671 = vmatprep.mubr.f32.mxu0 0.0
      %1672 = vmatmul.mubr.f32.gmra.mrb[0].mxu0 %v1546
      %v1673 = vpop.f32.mrb[0].mxu0
      %v1674 = vadd.f32 0.0, %v1673
      %v1675 = vpop.f32.mrb[0].mxu0
      %1676 = vmatprep.mubr.f32.mxu0 0.0
      %1677 = vmatmul.mubr.f32.gmra.mrb[0].mxu0 %v1549
      %v1678 = vpop.f32.mrb[0].mxu0
      %v1679 = vadd.f32 0.0, %v1678
      %v1680 = vpop.f32.mrb[0].mxu0
      %1681 = vmatprep.mubr.f32.mxu0 0.0
      %1682 = vmatmul.mubr.f32.gmra.mrb[0].mxu0 %v1552
      %v1683 = vpop.f32.mrb[0].mxu0
      %v1684 = vadd.f32 0.0, %v1683
      %v1685 = vpop.f32.mrb[0].mxu0
      %1686 = vmatprep.mubr.f32.mxu0 0.0
      %1687 = vmatmul.mubr.f32.gmra.mrb[0].mxu0 %v1555
      %v1688 = vpop.f32.mrb[0].mxu0
      %v1689 = vadd.f32 0.0, %v1688
      %v1690 = vpop.f32.mrb[0].mxu0
      %1691 = vmatprep.mubr.f32.mxu0 0.0
      %1692 = vmatmul.mubr.f32.gmra.mrb[0].mxu0 %v1558
      %v1693 = vpop.f32.mrb[0].mxu0
      %v1694 = vadd.f32 0.0, %v1693
      %v1695 = vpop.f32.mrb[0].mxu0
      %1696 = vmatprep.mubr.f32.mxu0 0.0
      %1697 = vmatmul.mubr.f32.gmra.mrb[0].mxu0 %v1561
      %v1698 = vpop.f32.mrb[0].mxu0
      %v1699 = vadd.f32 0.0, %v1698
      %v1700 = vpop.f32.mrb[0].mxu0
      %1701 = vmatprep.mubr.f32.mxu0 0.0
      %1702 = vmatmul.mubr.f32.gmra.mrb[0].mxu0 %v1564
      %v1703 = vpop.f32.mrb[0].mxu0
      %v1704 = vadd.f32 0.0, %v1703
      %v1705 = vpop.f32.mrb[0].mxu0
      %1706 = vmatprep.mubr.f32.mxu0 0.0
      %1707 = vmatmul.mubr.f32.gmra.mrb[0].mxu0 %v1567
      %v1708 = vpop.f32.mrb[0].mxu0
      %v1709 = vadd.f32 0.0, %v1708
      %v1710 = vpop.f32.mrb[0].mxu0
      %1711 = vmatprep.mubr.f32.mxu0 0.0
      %1712 = vmatmul.mubr.f32.gmra.mrb[0].mxu0 %v1570
      %v1713 = vpop.f32.mrb[0].mxu0
      %v1714 = vadd.f32 0.0, %v1713
      %v1715 = vpop.f32.mrb[0].mxu0
      %1716 = vdwg.mxu0
      %v1718 = vlaneseq
      %v1719 = vshrl.u32 %v1718, 7
      %v1720 = vsub.s32 0, %v1719
      %v1721 = vrot.slane %v395, %v1720
      %v1723 = vmul.f32 %v1639, %v1721
      %v1724 = vmul.f32 %v1644, %v1721
      %v1725 = vmul.f32 %v1649, %v1721
      %v1726 = vmul.f32 %v1654, %v1721
      %v1727 = vmul.f32 %v1659, %v1721
      %v1728 = vmul.f32 %v1664, %v1721
      %v1729 = vmul.f32 %v1669, %v1721
      %v1730 = vmul.f32 %v1674, %v1721
      %v1731 = vmul.f32 %v1679, %v1721
      %v1732 = vmul.f32 %v1684, %v1721
      %v1733 = vmul.f32 %v1689, %v1721
      %v1734 = vmul.f32 %v1694, %v1721
      %v1735 = vmul.f32 %v1699, %v1721
      %v1736 = vmul.f32 %v1704, %v1721
      %v1737 = vmul.f32 %v1709, %v1721
      %v1738 = vmul.f32 %v1714, %v1721
      %v1740 = vlaneseq
      %v1741 = vshrl.u32 %v1740, 7
      %v1742 = vsub.s32 0, %v1741
      %v1743 = vrot.slane %v396, %v1742
      %v1745 = vadd.f32 %v1723, %v1743
      %v1746 = vadd.f32 %v1724, %v1743
      %v1747 = vadd.f32 %v1725, %v1743
      %v1748 = vadd.f32 %v1726, %v1743
      %v1749 = vadd.f32 %v1727, %v1743
      %v1750 = vadd.f32 %v1728, %v1743
      %v1751 = vadd.f32 %v1729, %v1743
      %v1752 = vadd.f32 %v1730, %v1743
      %v1753 = vadd.f32 %v1731, %v1743
      %v1754 = vadd.f32 %v1732, %v1743
      %v1755 = vadd.f32 %v1733, %v1743
      %v1756 = vadd.f32 %v1734, %v1743
      %v1757 = vadd.f32 %v1735, %v1743
      %v1758 = vadd.f32 %v1736, %v1743
      %v1759 = vadd.f32 %v1737, %v1743
      %v1760 = vadd.f32 %v1738, %v1743
      %v1761 = vld [vmem:[%s431] sm:$0xff]
      %v1762 = vld [vmem:[%s431 + $0x8] sm:$0xff]
      %v1763 = vld [vmem:[%s431 + $0x10] sm:$0xff]
      %v1764 = vld [vmem:[%s431 + $0x18] sm:$0xff]
      %v1765 = vld [vmem:[%s431 + $0x20] sm:$0xff]
      %v1766 = vld [vmem:[%s431 + $0x28] sm:$0xff]
      %v1767 = vld [vmem:[%s431 + $0x30] sm:$0xff]
      %v1768 = vld [vmem:[%s431 + $0x38] sm:$0xff]
      %v1769 = vld [vmem:[%s431 + $0x40] sm:$0xff]
      %v1770 = vld [vmem:[%s431 + $0x48] sm:$0xff]
      %v1771 = vld [vmem:[%s431 + $0x50] sm:$0xff]
      %v1772 = vld [vmem:[%s431 + $0x58] sm:$0xff]
      %v1773 = vld [vmem:[%s431 + $0x60] sm:$0xff]
      %v1774 = vld [vmem:[%s431 + $0x68] sm:$0xff]
      %v1775 = vld [vmem:[%s431 + $0x70] sm:$0xff]
      %v1776 = vld [vmem:[%s431 + $0x78] sm:$0xff]
      %v1777 = vadd.f32 %v1745, %v1761
      %v1778 = vadd.f32 %v1746, %v1762
      %v1779 = vadd.f32 %v1747, %v1763
      %v1780 = vadd.f32 %v1748, %v1764
      %v1781 = vadd.f32 %v1749, %v1765
      %v1782 = vadd.f32 %v1750, %v1766
      %v1783 = vadd.f32 %v1751, %v1767
      %v1784 = vadd.f32 %v1752, %v1768
      %v1785 = vadd.f32 %v1753, %v1769
      %v1786 = vadd.f32 %v1754, %v1770
      %v1787 = vadd.f32 %v1755, %v1771
      %v1788 = vadd.f32 %v1756, %v1772
      %v1789 = vadd.f32 %v1757, %v1773
      %v1790 = vadd.f32 %v1758, %v1774
      %v1791 = vadd.f32 %v1759, %v1775
      %v1792 = vadd.f32 %v1760, %v1776
      %1793 = vst.msk [vmem:[%s381] sm:$0xff] %vm448, %v1777
      %1794 = vst.msk [vmem:[%s381 + $0x8] sm:$0xff] %vm448, %v1778
      %1795 = vst.msk [vmem:[%s381 + $0x10] sm:$0xff] %vm448, %v1779
      %1796 = vst.msk [vmem:[%s381 + $0x18] sm:$0xff] %vm448, %v1780
      %1797 = vst.msk [vmem:[%s381 + $0x20] sm:$0xff] %vm448, %v1781
      %1798 = vst.msk [vmem:[%s381 + $0x28] sm:$0xff] %vm448, %v1782
      %1799 = vst.msk [vmem:[%s381 + $0x30] sm:$0xff] %vm448, %v1783
      %1800 = vst.msk [vmem:[%s381 + $0x38] sm:$0xff] %vm448, %v1784
      %1801 = vst.msk [vmem:[%s381 + $0x40] sm:$0xff] %vm448, %v1785
      %1802 = vst.msk [vmem:[%s381 + $0x48] sm:$0xff] %vm448, %v1786
      %1803 = vst.msk [vmem:[%s381 + $0x50] sm:$0xff] %vm448, %v1787
      %1804 = vst.msk [vmem:[%s381 + $0x58] sm:$0xff] %vm448, %v1788
      %1805 = vst.msk [vmem:[%s381 + $0x60] sm:$0xff] %vm448, %v1789
      %1806 = vst.msk [vmem:[%s381 + $0x68] sm:$0xff] %vm448, %v1790
      %1807 = vst.msk [vmem:[%s381 + $0x70] sm:$0xff] %vm448, %v1791
      %1808 = vst.msk [vmem:[%s381 + $0x78] sm:$0xff] %vm448, %v1792
      %s1809 = smul.u32 %s25, 2
      %s1810 = sadd.s32 %s1809, %s26
      %s1811 = smul.u32 16, %s1810
      %p1812 = scmp.lt.s32.totalorder %s1811, 63
      %s1813 = scalar_select %p1812, %s1811, 63
      %s1814 = smul.addr %s1813, 8
      %s1815 = scalar_lea.vmem %s10, %s1814
      // Predicated region
      $region69: #{tpu_custom_call.1} parent=59 // pred_check
        %p1816 = pneg %p270
      $region70: #{tpu_custom_call.1} parent=59 // pred_check_branch
        %1818 = sbr.rel (%p1816) target = $region72
      $region71: #{tpu_custom_call.1} parent=59 // pred_region
        %s1819 = smul.u32 %s25, 2
        %s1820 = sadd.s32 %s1819, %s26
        %s1821 = smul.u32 16, %s1820
      $region72: #{tpu_custom_call.1} parent=59 // pred_fallthru
        _
    $region60: #{tpu_custom_call.1} parent=5 // pred_fallthru
      _
    %p1822 = scmp.le.s32.totalorder 2, %s16
    // Predicated region
    $region73: #{tpu_custom_call.1} parent=5 // pred_check
      %p1823 = pneg %p1822
    $region74: #{tpu_custom_call.1} parent=5 // pred_check_branch
      %1825 = sbr.rel (%p1823) target = $region76
    $region75: #{tpu_custom_call.1} parent=5 // pred_region
      %s1826 = ssub.s32 %s16, 2
      // Predicated region
      $region77: #{tpu_custom_call.1} parent=75 // pred_check
        %p1827 = pneg %p276
      $region78: #{tpu_custom_call.1} parent=75 // pred_check_branch
        %1829 = sbr.rel (%p1827) target = $region80
      $region79: #{tpu_custom_call.1} parent=75 // pred_region
        %s1830 = smul.u32 %s27, 2
        %s1831 = sadd.s32 %s1830, %s28
        %s1832 = smul.u32 16, %s1831
        %p1833 = scmp.lt.s32.totalorder %s1832, 63
        %s1834 = scalar_select %p1833, %s1832, 63
        %s1835 = smul.addr %s1834, 8
        %s1836 = scalar_lea.vmem %s10, %s1835
      $region80: #{tpu_custom_call.1} parent=75 // pred_fallthru
        _
    $region76: #{tpu_custom_call.1} parent=5 // pred_fallthru
      _
  $region6: #{tpu_custom_call.1} parent=0 // loop_footer
    %s20 = sadd.s32 1, %s16
  $region7: #{tpu_custom_call.1} parent=0 // loop_footer_branch
    %15 = sbr.rel target = $region3
  $region8: #{tpu_custom_call.1} parent=0 // loop_exit
    _

</llo_original>
